<compile_context>
chip_gen: v5e
topology: v5e:2x2
jax: 0.10.0
libtpu: 0.0.40
codegen_flags: <defaults>
</compile_context>

<pallas_src>
import functools

import jax
import jax.numpy as jnp
from jax import lax
from jax.experimental import pallas as pl
from jax.experimental.pallas import tpu as pltpu


_EPS = 1e-5
_LRELU_SLOPE = 0.2
_PER_TAP_MIN_CIN = 128     # switch to per-tap matmuls above this input width


@functools.lru_cache(maxsize=None)
def _vmem_limit_bytes():
    """Generation-aware scoped-VMEM limit (v7x has 64 MiB, v5e/v6e 128 MiB)."""
    try:
        cap = int(pltpu.get_tpu_info().vmem_capacity_bytes)
        return max(32 << 20, min((cap * 3) // 4, 100 << 20))
    except Exception:
        return 48 << 20


# ---------------------------------------------------------------------------
# Wrapper-side layout helper: zero-pad + split into stride phases
# ---------------------------------------------------------------------------
def _pad_and_phase_split(x, pad, stride):
    """(B, H, W, C) -> (B, stride*stride*Hh, Wh, C).

    Zero-pads spatially by `pad`, then regroups rows/cols by residue mod
    `stride` and stacks the stride*stride phases along the row axis.  Padded
    pixel (r, c) lives in phase p = (r % s) * s + (c % s) at row
    (p * Hh + r // s), col (c // s).  A k x k stride-s conv then needs only
    contiguous slices inside the kernel.  stride == 1 degenerates to a pad.
    """
    B, H, W, C = x.shape
    if stride == 1:
        Hp, Wp = H + 2 * pad, W + 2 * pad
        return jnp.pad(x, ((0, 0), (pad, pad), (pad, pad), (0, 0))), Hp, Wp
    Hp, Wp = H + 2 * pad, W + 2 * pad
    Hh = -(-Hp // stride)
    Wh = -(-Wp // stride)
    x = jnp.pad(x, ((0, 0),
                    (pad, Hh * stride - H - pad),
                    (pad, Wh * stride - W - pad),
                    (0, 0)))
    x = x.reshape(B, Hh, stride, Wh, stride, C)
    x = jnp.transpose(x, (0, 2, 4, 1, 3, 5))          # (B, sh, sw, Hh, Wh, C)
    return x.reshape(B, stride * stride * Hh, Wh, C), Hh, Wh


# ---------------------------------------------------------------------------
# Shared tap-accumulation helper (runs inside the kernels)
# ---------------------------------------------------------------------------
def _conv_taps(x, w_ref, *, k, s, hh, h_out, w_out, cin, n_out, per_tap):
    """x: (P*Hh, Wh, Cin) bf16 phase-split (or padded, when s==1) activation."""
    def tap_slice(dh, dw):
        p = (dh % s) * s + (dw % s)
        r0 = p * hh + dh // s
        c0 = dw // s
        return x[r0:r0 + h_out, c0:c0 + w_out, :]

    if per_tap:
        # 16 per-tap (h,w,Cin)x(Cin,n_out) matmuls accumulated in f32: avoids
        # materializing the (h,w,16*Cin) im2col slab for wide layers.
        acc = jnp.zeros((h_out, w_out, n_out), jnp.float32)
        for dh in range(k):
            for dw in range(k):
                t = dh * k + dw
                w_tap = w_ref[t * cin:(t + 1) * cin, :]
                acc = acc + jnp.einsum("hwk,kc->hwc", tap_slice(dh, dw), w_tap,
                                       preferred_element_type=jnp.float32)
        return acc
    # Small Cin: single im2col matmul (K = 16*Cin) fills the MXU better.
    patches = [tap_slice(dh, dw) for dh in range(k) for dw in range(k)]
    pmat = jnp.concatenate(patches, axis=-1)          # (h_out, w_out, 16*Cin)
    return jnp.einsum("hwk,kc->hwc", pmat, w_ref[...],
                      preferred_element_type=jnp.float32)


# ---------------------------------------------------------------------------
# Pallas kernel: Conv4x4 (+folded BN) (+LeakyReLU)
# ---------------------------------------------------------------------------
def _conv_kernel(x_ref, w_ref, b_ref, o_ref, *, k, s, h_out, w_out, hh, cin,
                 n_out, apply_act, per_tap):
    # x_ref: (1, P*Hh, Wh, Cin) bf16   w_ref: (16*Cin, tn) bf16
    # b_ref: (1, tn) f32 (conv bias + BN shift)   o_ref: (1, h_out, w_out, tn)
    acc = _conv_taps(x_ref[0], w_ref, k=k, s=s, hh=hh, h_out=h_out,
                     w_out=w_out, cin=cin, n_out=n_out, per_tap=per_tap)
    acc = acc + jnp.reshape(b_ref[...], (1, 1, n_out))   # explicit broadcast
    if apply_act:
        acc = jnp.where(acc >= 0.0, acc, _LRELU_SLOPE * acc)
    o_ref[0] = acc.astype(o_ref.dtype)


# ---------------------------------------------------------------------------
# Pallas kernel: final Cout=1 score conv, lane-dense (B, h, w) output
# ---------------------------------------------------------------------------
def _score_kernel(x_ref, w_ref, b_ref, o_ref, *, k, h_out, w_out, cin):
    # x_ref: (1, Hp, Wp, Cin) bf16 (stride-1, padded)
    # w_ref: (16, Cin) bf16 (tap-major rows)   b_ref: (1, 1) f32
    # o_ref: (1, h_out, w_out) f32  -- w_out on the lane axis (no 1-wide store)
    x = x_ref[0]
    acc = jnp.zeros((h_out, w_out), jnp.float32)
    for dh in range(k):
        for dw in range(k):
            t = dh * k + dw
            patch = x[dh:dh + h_out, dw:dw + w_out, :].astype(jnp.float32)
            w_row = jnp.reshape(w_ref[t:t + 1, :], (1, 1, cin)).astype(jnp.float32)
            acc = acc + jnp.sum(patch * w_row, axis=-1)
    acc = acc + b_ref[...]                             # (1, 1) broadcast
    o_ref[0] = acc.astype(o_ref.dtype)


def conv4x4_layer(x, layer, *, out_dtype):
    """x: (B, H, W, Cin) bf16 -> conv(k=4, pad=2, stride) [+BN folded] [+LReLU]."""
    B, H, W, c_in = x.shape
    K, PAD = 4, 2
    stride = layer["stride"]
    h_out = (H + 2 * PAD - K) // stride + 1
    w_out = (W + 2 * PAD - K) // stride + 1
    xph, hh, wh = _pad_and_phase_split(x, PAD, stride)
    P = stride * stride
    vmem = _vmem_limit_bytes()

    if layer.get("is_score", False):
        kernel = functools.partial(_score_kernel, k=K, h_out=h_out,
                                   w_out=w_out, cin=c_in)
        return pl.pallas_call(
            kernel,
            out_shape=jax.ShapeDtypeStruct((B, h_out, w_out), jnp.float32),
            grid_spec=pltpu.PrefetchScalarGridSpec(
                num_scalar_prefetch=0,
                grid=(B,),
                in_specs=[
                    pl.BlockSpec((1, P * hh, wh, c_in), lambda b: (b, 0, 0, 0)),
                    pl.BlockSpec((K * K, c_in), lambda b: (0, 0)),
                    pl.BlockSpec((1, 1), lambda b: (0, 0)),
                ],
                out_specs=pl.BlockSpec((1, h_out, w_out), lambda b: (b, 0, 0)),
            ),
            compiler_params=pltpu.CompilerParams(
                dimension_semantics=("parallel",),
                vmem_limit_bytes=vmem),
        )(xph, layer["w_taps"], layer["b"])

    w_slab, b_eff = layer["w_slab"], layer["b"]
    c_out = w_slab.shape[1]
    tn = 256 if (c_out > 256 and c_out % 256 == 0) else c_out
    n_blocks = c_out // tn
    per_tap = c_in >= _PER_TAP_MIN_CIN
    kernel = functools.partial(_conv_kernel, k=K, s=stride, h_out=h_out,
                               w_out=w_out, hh=hh, cin=c_in, n_out=tn,
                               apply_act=layer["has_act"], per_tap=per_tap)
    return pl.pallas_call(
        kernel,
        out_shape=jax.ShapeDtypeStruct((B, h_out, w_out, c_out), out_dtype),
        grid_spec=pltpu.PrefetchScalarGridSpec(
            num_scalar_prefetch=0,
            grid=(B, n_blocks),
            in_specs=[
                pl.BlockSpec((1, P * hh, wh, c_in), lambda b, j: (b, 0, 0, 0)),
                pl.BlockSpec((K * K * c_in, tn), lambda b, j: (0, j)),
                pl.BlockSpec((1, tn), lambda b, j: (0, j)),
            ],
            out_specs=pl.BlockSpec((1, h_out, w_out, tn),
                                   lambda b, j: (b, 0, 0, j)),
        ),
        compiler_params=pltpu.CompilerParams(
            dimension_semantics=("parallel", "parallel"),
            vmem_limit_bytes=vmem),
    )(xph, w_slab, b_eff)


# ---------------------------------------------------------------------------
# Pallas kernel: AvgPool2d(3, stride=2, padding=1, count_include_pad=False)
# ---------------------------------------------------------------------------
def _avgpool_kernel(x_ref, inv_ref, o_ref, *, h_out, w_out, hh):
    # x_ref: (1, 4*Hh, Wh, C) bf16 phase-split input
    # inv_ref: (h_out, w_out, 1) f32 reciprocal valid-element count
    x = x_ref[0]
    acc = jnp.zeros((h_out, w_out, x.shape[-1]), jnp.float32)
    for dh in range(3):
        for dw in range(3):
            p = (dh % 2) * 2 + (dw % 2)
            r0 = p * hh + dh // 2
            c0 = dw // 2
            acc = acc + x[r0:r0 + h_out, c0:c0 + w_out, :].astype(jnp.float32)
    o_ref[0] = (acc * inv_ref[...]).astype(o_ref.dtype)


def avgpool3x3_s2(x):
    """x: (B, H, W, C) bf16 -> (B, h_out, w_out, C) bf16 (f32 accumulate)."""
    B, H, W, C = x.shape
    h_out = (H + 2 - 3) // 2 + 1
    w_out = (W + 2 - 3) // 2 + 1
    xph, hh, wh = _pad_and_phase_split(x, 1, 2)

    def counts(n, n_out):
        i = jnp.arange(n_out)
        lo = jnp.maximum(2 * i - 1, 0)
        hi = jnp.minimum(2 * i + 1, n - 1)
        return (hi - lo + 1).astype(jnp.float32)

    inv = 1.0 / (counts(H, h_out)[:, None] * counts(W, w_out)[None, :])
    inv = inv[:, :, None]                              # (h_out, w_out, 1)

    kernel = functools.partial(_avgpool_kernel, h_out=h_out, w_out=w_out, hh=hh)
    return pl.pallas_call(
        kernel,
        out_shape=jax.ShapeDtypeStruct((B, h_out, w_out, C), jnp.bfloat16),
        grid_spec=pltpu.PrefetchScalarGridSpec(
            num_scalar_prefetch=0,
            grid=(B,),
            in_specs=[
                pl.BlockSpec((1, 4 * hh, wh, C), lambda b: (b, 0, 0, 0)),
                pl.BlockSpec((h_out, w_out, 1), lambda b: (0, 0, 0)),
            ],
            out_specs=pl.BlockSpec((1, h_out, w_out, C),
                                   lambda b: (b, 0, 0, 0)),
        ),
        compiler_params=pltpu.CompilerParams(
            dimension_semantics=("parallel",),
            vmem_limit_bytes=_vmem_limit_bytes()),
    )(xph, inv)


# ---------------------------------------------------------------------------
# Parameters: NLayerDiscriminator architecture, init, BN folding, kernel prep
# ---------------------------------------------------------------------------
def build_arch(input_nc, ndf, n_layers):
    """Mirrors NLayerDiscriminator.__init__: (cin, cout, stride, has_bn, has_act)."""
    layers = [(input_nc, ndf, 2, False, True)]
    nf = ndf
    for _ in range(1, n_layers):
        nf_prev, nf = nf, min(nf * 2, 512)
        layers.append((nf_prev, nf, 2, True, True))
    nf_prev, nf = nf, min(nf * 2, 512)
    layers.append((nf_prev, nf, 1, True, True))
    layers.append((nf, 1, 1, False, False))
    return layers


def init_discriminator_params(key, arch):
    params = []
    for (cin, cout, stride, has_bn, has_act) in arch:
        key, kw, kb, kg, kbe, km, kv = jax.random.split(key, 7)
        fan_in = 4 * 4 * cin
        p = dict(
            w=jax.random.normal(kw, (4, 4, cin, cout), jnp.float32)
              / jnp.sqrt(float(fan_in)),
            b=0.1 * jax.random.normal(kb, (cout,), jnp.float32),
            stride=stride, has_bn=has_bn, has_act=has_act)
        if has_bn:
            p["gamma"] = 1.0 + 0.1 * jax.random.normal(kg, (cout,), jnp.float32)
            p["beta"] = 0.1 * jax.random.normal(kbe, (cout,), jnp.float32)
            p["mean"] = 0.1 * jax.random.normal(km, (cout,), jnp.float32)
            p["var"] = 1.0 + 0.1 * jax.random.uniform(kv, (cout,), jnp.float32)
        params.append(p)
    return params


def fold_params(params):
    """Fold eval-mode BatchNorm into per-output-channel conv scale/shift."""
    folded = []
    for p in params:
        w, b = p["w"], p["b"]
        if p["has_bn"]:
            scale = p["gamma"] / jnp.sqrt(p["var"] + _EPS)
            w = w * scale[None, None, None, :]
            b = (b - p["mean"]) * scale + p["beta"]
        folded.append(dict(w=w, b=b, stride=p["stride"], has_act=p["has_act"]))
    return folded


def prep_for_kernel(folded):
    prepped = []
    for f in folded:
        k, _, cin, cout = f["w"].shape
        if cout == 1 and f["stride"] == 1:          # final score layer
            prepped.append(dict(
                is_score=True,
                w_taps=f["w"].reshape(k * k, cin).astype(jnp.bfloat16),
                b=f["b"].reshape(1, 1).astype(jnp.float32),
                stride=f["stride"], has_act=f["has_act"]))
        else:
            prepped.append(dict(
                is_score=False,
                w_slab=f["w"].reshape(k * k * cin, cout).astype(jnp.bfloat16),
                b=f["b"].reshape(1, cout).astype(jnp.float32),
                stride=f["stride"], has_act=f["has_act"]))
    return prepped


# ---------------------------------------------------------------------------
# Forward passes (Pallas) — NCHW at the boundary, NHWC/bf16 internally
# ---------------------------------------------------------------------------
def nlayer_forward_pallas(x, prepped):
    h = x
    for layer in prepped:
        if layer["is_score"]:
            h = conv4x4_layer(h, layer, out_dtype=jnp.float32)   # (B, h, w)
        else:
            h = conv4x4_layer(h, layer, out_dtype=jnp.bfloat16)
    return h


def multiscale_forward_pallas(x_nchw, all_prepped, num_D):
    x = jnp.transpose(x_nchw, (0, 2, 3, 1)).astype(jnp.bfloat16)   # one cast
    results, cur = [], x
    for i in range(num_D):
        score = nlayer_forward_pallas(cur, all_prepped[num_D - 1 - i])
        results.append(score[:, None, :, :])           # (B, 1, h, w) NCHW
        if i != num_D - 1:
            cur = avgpool3x3_s2(cur)
    return results


# ---------------------------------------------------------------------------
# Pure-JAX reference (same eval-mode BN folding and bf16 precision choices)
# ---------------------------------------------------------------------------
def _ref_conv(x, w, b, stride, apply_act):
    y = lax.conv_general_dilated(
        x.astype(jnp.bfloat16), w.astype(jnp.bfloat16),
        window_strides=(stride, stride), padding=((2, 2), (2, 2)),
        dimension_numbers=("NHWC", "HWIO", "NHWC"),
        preferred_element_type=jnp.float32)
    y = y + b[None, None, None, :]
    if apply_act:
        y = jnp.where(y >= 0.0, y, _LRELU_SLOPE * y)
    return y


def _ref_avgpool(x):
    xf = x.astype(jnp.float32)
    pad = [(0, 0), (1, 1), (1, 1), (0, 0)]
    s = lax.reduce_window(xf, 0.0, lax.add, (1, 3, 3, 1), (1, 2, 2, 1), pad)
    c = lax.reduce_window(jnp.ones_like(xf[..., :1]), 0.0, lax.add,
                          (1, 3, 3, 1), (1, 2, 2, 1), pad)
    return (s / c).astype(jnp.bfloat16)


def multiscale_forward_ref(x_nchw, all_folded, num_D):
    x = jnp.transpose(x_nchw, (0, 2, 3, 1)).astype(jnp.bfloat16)
    results, cur = [], x
    for i in range(num_D):
        h = cur
        layers = all_folded[num_D - 1 - i]
        for li, f in enumerate(layers):
            y = _ref_conv(h, f["w"], f["b"], f["stride"], f["has_act"])
            h = y if li == len(layers) - 1 else y.astype(jnp.bfloat16)
        results.append(jnp.transpose(h, (0, 3, 1, 2)))
        if i != num_D - 1:
            cur = _ref_avgpool(cur)
    return results


# ---------------------------------------------------------------------------
if __name__ == "__main__":
    num_D, n_layers, ndf, input_nc = 3, 3, 16, 3
    B, H, W = 2, 32, 32

    key = jax.random.PRNGKey(0)
    key, kx = jax.random.split(key)
    x = jax.random.normal(kx, (B, input_nc, H, W), jnp.float32)

    arch = build_arch(input_nc, ndf, n_layers)
    all_params = []
    for _ in range(num_D):
        key, kd = jax.random.split(key)
        all_params.append(init_discriminator_params(kd, arch))
    all_folded = [fold_params(p) for p in all_params]
    all_prepped = [prep_for_kernel(f) for f in all_folded]

    outs = multiscale_forward_pallas(x, all_prepped, num_D)
    outs = jax.block_until_ready(outs)
    refs = multiscale_forward_ref(x, all_folded, num_D)
    refs = jax.block_until_ready(refs)

    assert len(outs) == num_D
    for o, r in zip(outs, refs):
        assert o.shape == r.shape, (o.shape, r.shape)
        max_diff = float(jnp.max(jnp.abs(o.astype(jnp.float32) -
                                         r.astype(jnp.float32))))
        assert max_diff < 2e-2, max_diff
    print("KERNEL_OK")
</pallas_src>

<mosaic_0001>
module attributes {stable_mosaic.version = 11 : i64} {
  func.func @_conv_kernel(%arg0: i32, %arg1: i32, %arg2: memref<1x72x18x3xbf16, #tpu.memory_space<vmem>>, %arg3: memref<48x16xbf16, #tpu.memory_space<vmem>>, %arg4: memref<1x16xf32, #tpu.memory_space<vmem>>, %arg5: memref<1x17x17x16xbf16, #tpu.memory_space<vmem>>) attributes {dimension_semantics = [#tpu.dimension_semantics<parallel>, #tpu.dimension_semantics<parallel>], iteration_bounds = array<i64: 2, 1>, scalar_prefetch = 0 : i64, scratch_operands = 0 : i64, tpu.core_type = #tpu.core_type<tc>, window_params = [{transform_indices = @transform_0, window_bounds = array<i64: 1, 72, 18, 3>}, {transform_indices = @transform_1, window_bounds = array<i64: 48, 16>}, {transform_indices = @transform_2, window_bounds = array<i64: 1, 16>}, {transform_indices = @transform_3, window_bounds = array<i64: 1, 17, 17, 16>}]} {
    %c0 = arith.constant 0 : index
    %c0_0 = arith.constant 0 : index
    %c0_1 = arith.constant 0 : index
    %c0_2 = arith.constant 0 : index
    %0 = vector.load %arg2[%c0, %c0_0, %c0_1, %c0_2] : memref<1x72x18x3xbf16, #tpu.memory_space<vmem>>, vector<1x72x18x3xbf16>
    %1 = vector.shape_cast %0 : vector<1x72x18x3xbf16> to vector<72x18x3xbf16>
    %2 = vector.extract_strided_slice %1 {offsets = [0, 0, 0], sizes = [17, 17, 3], strides = [1, 1, 1]} : vector<72x18x3xbf16> to vector<17x17x3xbf16>
    %3 = vector.extract_strided_slice %1 {offsets = [18, 0, 0], sizes = [17, 17, 3], strides = [1, 1, 1]} : vector<72x18x3xbf16> to vector<17x17x3xbf16>
    %4 = vector.extract_strided_slice %1 {offsets = [0, 1, 0], sizes = [17, 17, 3], strides = [1, 1, 1]} : vector<72x18x3xbf16> to vector<17x17x3xbf16>
    %5 = vector.extract_strided_slice %1 {offsets = [18, 1, 0], sizes = [17, 17, 3], strides = [1, 1, 1]} : vector<72x18x3xbf16> to vector<17x17x3xbf16>
    %6 = vector.extract_strided_slice %1 {offsets = [36, 0, 0], sizes = [17, 17, 3], strides = [1, 1, 1]} : vector<72x18x3xbf16> to vector<17x17x3xbf16>
    %7 = vector.extract_strided_slice %1 {offsets = [54, 0, 0], sizes = [17, 17, 3], strides = [1, 1, 1]} : vector<72x18x3xbf16> to vector<17x17x3xbf16>
    %8 = vector.extract_strided_slice %1 {offsets = [36, 1, 0], sizes = [17, 17, 3], strides = [1, 1, 1]} : vector<72x18x3xbf16> to vector<17x17x3xbf16>
    %9 = vector.extract_strided_slice %1 {offsets = [54, 1, 0], sizes = [17, 17, 3], strides = [1, 1, 1]} : vector<72x18x3xbf16> to vector<17x17x3xbf16>
    %10 = vector.extract_strided_slice %1 {offsets = [1, 0, 0], sizes = [17, 17, 3], strides = [1, 1, 1]} : vector<72x18x3xbf16> to vector<17x17x3xbf16>
    %11 = vector.extract_strided_slice %1 {offsets = [19, 0, 0], sizes = [17, 17, 3], strides = [1, 1, 1]} : vector<72x18x3xbf16> to vector<17x17x3xbf16>
    %12 = vector.extract_strided_slice %1 {offsets = [1, 1, 0], sizes = [17, 17, 3], strides = [1, 1, 1]} : vector<72x18x3xbf16> to vector<17x17x3xbf16>
    %13 = vector.extract_strided_slice %1 {offsets = [19, 1, 0], sizes = [17, 17, 3], strides = [1, 1, 1]} : vector<72x18x3xbf16> to vector<17x17x3xbf16>
    %14 = vector.extract_strided_slice %1 {offsets = [37, 0, 0], sizes = [17, 17, 3], strides = [1, 1, 1]} : vector<72x18x3xbf16> to vector<17x17x3xbf16>
    %15 = vector.extract_strided_slice %1 {offsets = [55, 0, 0], sizes = [17, 17, 3], strides = [1, 1, 1]} : vector<72x18x3xbf16> to vector<17x17x3xbf16>
    %16 = vector.extract_strided_slice %1 {offsets = [37, 1, 0], sizes = [17, 17, 3], strides = [1, 1, 1]} : vector<72x18x3xbf16> to vector<17x17x3xbf16>
    %17 = vector.extract_strided_slice %1 {offsets = [55, 1, 0], sizes = [17, 17, 3], strides = [1, 1, 1]} : vector<72x18x3xbf16> to vector<17x17x3xbf16>
    %18 = tpu.concatenate %2, %3, %4, %5, %6, %7, %8, %9, %10, %11, %12, %13, %14, %15, %16, %17 in 2 : vector<17x17x3xbf16>, vector<17x17x3xbf16>, vector<17x17x3xbf16>, vector<17x17x3xbf16>, vector<17x17x3xbf16>, vector<17x17x3xbf16>, vector<17x17x3xbf16>, vector<17x17x3xbf16>, vector<17x17x3xbf16>, vector<17x17x3xbf16>, vector<17x17x3xbf16>, vector<17x17x3xbf16>, vector<17x17x3xbf16>, vector<17x17x3xbf16>, vector<17x17x3xbf16>, vector<17x17x3xbf16> -> vector<17x17x48xbf16>
    %c0_3 = arith.constant 0 : index
    %c0_4 = arith.constant 0 : index
    %19 = vector.load %arg3[%c0_3, %c0_4] : memref<48x16xbf16, #tpu.memory_space<vmem>>, vector<48x16xbf16>
    "tpu.trace_start"() <{level = 10 : i32, message = "hwk,kc->hwc"}> : () -> ()
    %cst = arith.constant dense<0.000000e+00> : vector<17x17x16xf32>
    %20 = tpu.matmul %18, %19, %cst {dimension_numbers = #tpu.dot_dimension_numbers<[2], [0], [0, 1], [1], [0, 0, 0, 1, 1, 1], [], []>} : vector<17x17x48xbf16>, vector<48x16xbf16>, vector<17x17x16xf32> -> vector<17x17x16xf32>
    "tpu.trace_stop"() : () -> ()
    %c0_5 = arith.constant 0 : index
    %c0_6 = arith.constant 0 : index
    %21 = vector.load %arg4[%c0_5, %c0_6] : memref<1x16xf32, #tpu.memory_space<vmem>>, vector<1x16xf32>
    %22 = vector.shape_cast %21 : vector<1x16xf32> to vector<1x1x16xf32>
    %23 = vector.broadcast %22 : vector<1x1x16xf32> to vector<17x17x16xf32>
    %24 = arith.addf %20, %23 : vector<17x17x16xf32>
    %cst_7 = arith.constant 0.000000e+00 : f32
    %25 = vector.broadcast %cst_7 : f32 to vector<17x17x16xf32>
    %26 = arith.cmpf oge, %24, %25 : vector<17x17x16xf32>
    %cst_8 = arith.constant 2.000000e-01 : f32
    %27 = vector.broadcast %cst_8 : f32 to vector<17x17x16xf32>
    %28 = arith.mulf %27, %24 : vector<17x17x16xf32>
    %29 = arith.select %26, %24, %28 : vector<17x17x16xi1>, vector<17x17x16xf32>
    %30 = arith.truncf %29 : vector<17x17x16xf32> to vector<17x17x16xbf16>
    %c0_9 = arith.constant 0 : index
    %c0_10 = arith.constant 0 : index
    %c0_11 = arith.constant 0 : index
    %c0_12 = arith.constant 0 : index
    %31 = vector.load %arg5[%c0_9, %c0_10, %c0_11, %c0_12] : memref<1x17x17x16xbf16, #tpu.memory_space<vmem>>, vector<1x17x17x16xbf16>
    %32 = vector.shape_cast %31 : vector<1x17x17x16xbf16> to vector<17x17x16xbf16>
    %33 = vector.shape_cast %30 : vector<17x17x16xbf16> to vector<1x17x17x16xbf16>
    tpu.vector_store %arg5[%c0_9, %c0_10, %c0_11, %c0_12], %33 {strides = array<i32>} : memref<1x17x17x16xbf16, #tpu.memory_space<vmem>>, vector<1x17x17x16xbf16>,
    return
  }
  func.func @transform_0(%arg0: i32, %arg1: i32) -> (i32, i32, i32, i32) {
    %c0_i32 = arith.constant 0 : i32
    %c0_i32_0 = arith.constant 0 : i32
    %c0_i32_1 = arith.constant 0 : i32
    %c0_i32_2 = arith.constant 0 : i32
    return %arg0, %c0_i32, %c0_i32_0, %c0_i32_1 : i32, i32, i32, i32
  }
  func.func @transform_1(%arg0: i32, %arg1: i32) -> (i32, i32) {
    %c0_i32 = arith.constant 0 : i32
    %c0_i32_0 = arith.constant 0 : i32
    return %c0_i32, %arg1 : i32, i32
  }
  func.func @transform_2(%arg0: i32, %arg1: i32) -> (i32, i32) {
    %c0_i32 = arith.constant 0 : i32
    %c0_i32_0 = arith.constant 0 : i32
    return %c0_i32, %arg1 : i32, i32
  }
  func.func @transform_3(%arg0: i32, %arg1: i32) -> (i32, i32, i32, i32) {
    %c0_i32 = arith.constant 0 : i32
    %c0_i32_0 = arith.constant 0 : i32
    %c0_i32_1 = arith.constant 0 : i32
    return %arg0, %c0_i32, %c0_i32_0, %arg1 : i32, i32, i32, i32
  }
}

</mosaic_0001>

<llo_original>
// kernel: tpu_custom_call.1
$region0: #{tpu_custom_call.1}
  #allocation0 [shape = 'u32[]', space=smem, size = 0x4, offset = 0x4, fixed_abs, tag = 'smem constant byte address 0x4 - core index']
  #allocation1 [shape = 'u32[72,128]{1,0:T(1,128)}', space=vmem, size = 0x9000, scoped, tag = 'internal scratch']
  %s0 = inlined_call_operand.vmem [shape: bf16[2,72,18,3], index: 0, kind: input, shape index: {}]
  %s1 = inlined_call_operand.vmem [shape: bf16[48,16], index: 1, kind: input, shape index: {}]
  %s2 = inlined_call_operand.vmem [shape: f32[1,16], index: 2, kind: input, shape index: {}]
  %s3 = inlined_call_operand.vmem [shape: bf16[2,17,17,16], index: 3, kind: output, shape index: {}]
  %s4 = sld [smem:[#allocation0]]
  $region45: #{tpu_custom_call.1} parent=0
    _
  %s6 = ssub.s32 1, %s4
  %s7 = scalar_select 0, %s6, %s4
  loop: start=0, step=1, limit=4
  $region2: #{tpu_custom_call.1} parent=0 // loop_pre_header
    _
  $region3: #{tpu_custom_call.1} parent=0 // loop_header
    %s9 = sphi 0, %s13
    %p10 = scmp.ge.s32.totalorder %s9, 4
    %s16 = sphi 0, %s28
    %s17 = sphi 0, %s24
    %s18 = sphi 0, %s16
    %s19 = sphi 0, %s17
    %s20 = sphi 0, %s18
    %s21 = sphi 0, %s19
    %s31 = sphi 0, %s33
    %s34 = sphi 0, %s31
    %s35 = sphi 0, %s34
    %s51 = sphi 0, %s35
    %s57 = sphi 0, %s59
    %s60 = sphi 0, %s57
    %s61 = sphi 0, %s60
    %s77 = sphi 0, %s61
    %s83 = sphi 0, %s85
    %s86 = sphi 0, %s83
    %s87 = sphi 0, %s86
    %s103 = sphi 0, %s87
    %s111 = sphi 0, %s113
    %s114 = sphi 0, %s111
    %s115 = sphi 0, %s114
    %s131 = sphi 0, %s115
  $region4: #{tpu_custom_call.1} parent=0 // loop_header_branch
    %12 = sbr.rel (%p10) target = $region8
  $region5: #{tpu_custom_call.1} parent=0 // loop_body
    %s14 = ssub.s32 %s9, 1
    %s15 = ssub.s32 %s9, 2
    %s22 = sadd.s32 1, %s17
    %p23 = scmp.ge.s32.totalorder %s22, 1
    %s24 = scalar_select %p23, 0, %s22
    %s25 = sadd.s32 1, %s16
    %s26 = scalar_select %p23, %s25, %s16
    %p27 = scmp.ge.s32.totalorder %s26, 2
    %s28 = scalar_select %p27, 0, %s26
    %s29 = ssub.s32 %s16, %s28
    %p30 = scmp.eq.s32.totalorder %s29, 0
    %s32 = sadd.s32 %s31, 1
    %s33 = scalar_select %p30, %s31, %s32
    %p36 = pneg %p30
    %p37 = scmp.eq.s32.totalorder %s9, 1
    %p38 = por %p36, %p37
    %p39 = scmp.ne.s32.totalorder %s31, %s34
    %p40 = scmp.eq.s32.totalorder %s9, 0
    %p41 = por %p39, %p40
    %p42 = scmp.ne.s32.totalorder %s31, %s34
    %p43 = scmp.eq.s32.totalorder %s14, 1
    %p44 = por %p42, %p43
    %p45 = scmp.ne.s32.totalorder %s34, %s35
    %p46 = scmp.eq.s32.totalorder %s14, 0
    %p47 = por %p45, %p46
    %p48 = scmp.ne.s32.totalorder %s34, %s35
    %p49 = scmp.eq.s32.totalorder %s15, 1
    %p50 = por %p48, %p49
    %p52 = scmp.ne.s32.totalorder %s35, %s51
    %p53 = scmp.eq.s32.totalorder %s15, 0
    %p54 = por %p52, %p53
    %s55 = ssub.s32 %s17, %s24
    %p56 = scmp.eq.s32.totalorder %s55, 0
    %s58 = sadd.s32 %s57, 1
    %s59 = scalar_select %p56, %s57, %s58
    %p62 = pneg %p56
    %p63 = scmp.eq.s32.totalorder %s9, 1
    %p64 = por %p62, %p63
    %p65 = scmp.ne.s32.totalorder %s57, %s60
    %p66 = scmp.eq.s32.totalorder %s9, 0
    %p67 = por %p65, %p66
    %p68 = scmp.ne.s32.totalorder %s57, %s60
    %p69 = scmp.eq.s32.totalorder %s14, 1
    %p70 = por %p68, %p69
    %p71 = scmp.ne.s32.totalorder %s60, %s61
    %p72 = scmp.eq.s32.totalorder %s14, 0
    %p73 = por %p71, %p72
    %p74 = scmp.ne.s32.totalorder %s60, %s61
    %p75 = scmp.eq.s32.totalorder %s15, 1
    %p76 = por %p74, %p75
    %p78 = scmp.ne.s32.totalorder %s61, %s77
    %p79 = scmp.eq.s32.totalorder %s15, 0
    %p80 = por %p78, %p79
    %s81 = ssub.s32 %s17, %s24
    %p82 = scmp.eq.s32.totalorder %s81, 0
    %s84 = sadd.s32 %s83, 1
    %s85 = scalar_select %p82, %s83, %s84
    %p88 = pneg %p82
    %p89 = scmp.eq.s32.totalorder %s9, 1
    %p90 = por %p88, %p89
    %p91 = scmp.ne.s32.totalorder %s83, %s86
    %p92 = scmp.eq.s32.totalorder %s9, 0
    %p93 = por %p91, %p92
    %p94 = scmp.ne.s32.totalorder %s83, %s86
    %p95 = scmp.eq.s32.totalorder %s14, 1
    %p96 = por %p94, %p95
    %p97 = scmp.ne.s32.totalorder %s86, %s87
    %p98 = scmp.eq.s32.totalorder %s14, 0
    %p99 = por %p97, %p98
    %p100 = scmp.ne.s32.totalorder %s86, %s87
    %p101 = scmp.eq.s32.totalorder %s15, 1
    %p102 = por %p100, %p101
    %p104 = scmp.ne.s32.totalorder %s87, %s103
    %p105 = scmp.eq.s32.totalorder %s15, 0
    %p106 = por %p104, %p105
    %s107 = ssub.s32 %s16, %s28
    %s108 = ssub.s32 %s17, %s24
    %s109 = sor.u32 %s107, %s108
    %p110 = scmp.eq.s32.totalorder %s109, 0
    %s112 = sadd.s32 %s111, 1
    %s113 = scalar_select %p110, %s111, %s112
    %p116 = pneg %p110
    %p117 = scmp.eq.s32.totalorder %s9, 1
    %p118 = por %p116, %p117
    %p119 = scmp.ne.s32.totalorder %s111, %s114
    %p120 = scmp.eq.s32.totalorder %s9, 0
    %p121 = por %p119, %p120
    %p122 = scmp.ne.s32.totalorder %s111, %s114
    %p123 = scmp.eq.s32.totalorder %s14, 1
    %p124 = por %p122, %p123
    %p125 = scmp.ne.s32.totalorder %s114, %s115
    %p126 = scmp.eq.s32.totalorder %s14, 0
    %p127 = por %p125, %p126
    %p128 = scmp.ne.s32.totalorder %s114, %s115
    %p129 = scmp.eq.s32.totalorder %s15, 1
    %p130 = por %p128, %p129
    %p132 = scmp.ne.s32.totalorder %s115, %s131
    %p133 = scmp.eq.s32.totalorder %s15, 0
    %p134 = por %p132, %p133
    %p135 = scmp.le.s32.totalorder 1, %s9
    %p136 = scmp.lt.s32.totalorder %s9, 3
    %p137 = pnand %p135, %p136
    %p138 = pneg %p137
    // Predicated region
    $region9: #{tpu_custom_call.1} parent=5 // pred_check
      _
    $region10: #{tpu_custom_call.1} parent=5 // pred_check_branch
      %140 = sbr.rel (%p137) target = $region12
    $region11: #{tpu_custom_call.1} parent=5 // pred_region
      %s141 = ssub.s32 %s9, 1
      // Predicated region
      $region13: #{tpu_custom_call.1} parent=11 // pred_check
        %p142 = pneg %p73
      $region14: #{tpu_custom_call.1} parent=11 // pred_check_branch
        %144 = sbr.rel (%p142) target = $region16
      $region15: #{tpu_custom_call.1} parent=11 // pred_region
        %p145 = scmp.lt.s32.totalorder %s19, 0
        %s146 = scalar_select %p145, %s19, 0
        %s147 = smul.addr %s146, 4
        %s148 = scalar_lea.vmem %s1, %s147
      $region16: #{tpu_custom_call.1} parent=11 // pred_fallthru
        _
      // Predicated region
      $region17: #{tpu_custom_call.1} parent=11 // pred_check
        %p149 = pneg %p99
      $region18: #{tpu_custom_call.1} parent=11 // pred_check_branch
        %151 = sbr.rel (%p149) target = $region20
      $region19: #{tpu_custom_call.1} parent=11 // pred_region
        %p152 = scmp.lt.s32.totalorder %s19, 0
        %s153 = scalar_select %p152, %s19, 0
        %s154 = scalar_lea.vmem %s2, %s153
      $region20: #{tpu_custom_call.1} parent=11 // pred_fallthru
        _
    $region12: #{tpu_custom_call.1} parent=5 // pred_fallthru
      _
    %p155 = scmp.lt.s32.totalorder %s9, 2
    // Predicated region
    $region21: #{tpu_custom_call.1} parent=5 // pred_check
      %p156 = pneg %p155
    $region22: #{tpu_custom_call.1} parent=5 // pred_check_branch
      %158 = sbr.rel (%p156) target = $region24
    $region23: #{tpu_custom_call.1} parent=5 // pred_region
      // Predicated region
      $region25: #{tpu_custom_call.1} parent=23 // pred_check
        %p159 = pneg %p41
      $region26: #{tpu_custom_call.1} parent=23 // pred_check_branch
        %161 = sbr.rel (%p159) target = $region28
      $region27: #{tpu_custom_call.1} parent=23 // pred_region
        %p162 = scmp.lt.s32.totalorder %s16, 1
        %s163 = scalar_select %p162, %s16, 1
        %s164 = smul.addr %s163, 216
        %s165 = smul.addr %s164, 4
        %s166 = scalar_lea.vmem %s0, %s165
      $region28: #{tpu_custom_call.1} parent=23 // pred_fallthru
        _
    $region24: #{tpu_custom_call.1} parent=5 // pred_fallthru
      _
    %p167 = scmp.le.s32.totalorder 1, %s9
    %p168 = scmp.lt.s32.totalorder %s9, 3
    %p169 = pnand %p167, %p168
    %p170 = pneg %p169
    // Predicated region
    $region29: #{tpu_custom_call.1} parent=5 // pred_check
      _
    $region30: #{tpu_custom_call.1} parent=5 // pred_check_branch
      %172 = sbr.rel (%p169) target = $region32
    $region31: #{tpu_custom_call.1} parent=5 // pred_region
      %s173 = ssub.s32 %s9, 1
      %p174 = scmp.lt.s32.totalorder %s18, 1
      %s175 = scalar_select %p174, %s18, 1
      %s176 = smul.addr %s175, 216
      %s177 = smul.addr %s176, 4
      %s178 = scalar_lea.vmem %s0, %s177
      %p179 = pneg %p47
      %p180 = pneg %p44
      %p181 = scmp.lt.s32.totalorder %s19, 0
      %s182 = scalar_select %p181, %s19, 0
      %s183 = smul.addr %s182, 4
      %s184 = scalar_lea.vmem %s1, %s183
      %p185 = pneg %p73
      %p186 = pneg %p70
      %p187 = scmp.lt.s32.totalorder %s19, 0
      %s188 = scalar_select %p187, %s19, 0
      %s189 = scalar_lea.vmem %s2, %s188
      %p190 = pneg %p99
      %p191 = pneg %p96
      %p192 = pneg %p127
      %p193 = pneg %p124
      %p194 = scmp.lt.s32.totalorder %s18, 1
      %s195 = scalar_select %p194, %s18, 1
      %p196 = scmp.lt.s32.totalorder %s19, 0
      %s197 = scalar_select %p196, %s19, 0
      %s198 = smul.addr %s195, 51
      %s199 = sadd.s32 %s197, %s198
      %s200 = smul.addr %s199, 4
      %s201 = scalar_lea.vmem %s3, %s200
      %p202 = scmp.lt.s32.totalorder %s18, 1
      %s203 = scalar_select %p202, %s18, 1
      %s204 = smul.addr %s203, 216
      %s205 = smul.addr %s204, 4
      %s206 = scalar_lea.vmem %s0, %s205
      %p207 = scmp.lt.s32.totalorder %s19, 0
      %s208 = scalar_select %p207, %s19, 0
      %s209 = smul.addr %s208, 4
      %s210 = scalar_lea.vmem %s1, %s209
      %p211 = scmp.lt.s32.totalorder %s19, 0
      %s212 = scalar_select %p211, %s19, 0
      %s213 = scalar_lea.vmem %s2, %s212
      %p214 = scmp.lt.s32.totalorder %s18, 1
      %s215 = scalar_select %p214, %s18, 1
      %p216 = scmp.lt.s32.totalorder %s19, 0
      %s217 = scalar_select %p216, %s19, 0
      %s218 = smul.addr %s215, 51
      %s219 = sadd.s32 %s217, %s218
      %s220 = smul.addr %s219, 4
      %s221 = scalar_lea.vmem %s3, %s220
      %v223 = vld [vmem:[%s206] sm:$0xf]
      %v224 = vld [vmem:[%s206 + $0x4] sm:$0xf]
      %v225 = vld [vmem:[%s206 + $0x8] sm:$0x1]
      %v226 = vld [vmem:[%s206 + $0xc] sm:$0xf]
      %v227 = vld [vmem:[%s206 + $0x10] sm:$0xf]
      %v228 = vld [vmem:[%s206 + $0x14] sm:$0x1]
      %v229 = vld [vmem:[%s206 + $0x18] sm:$0xf]
      %v230 = vld [vmem:[%s206 + $0x1c] sm:$0xf]
      %v231 = vld [vmem:[%s206 + $0x20] sm:$0x1]
      %v232 = vld [vmem:[%s206 + $0x24] sm:$0xf]
      %v233 = vld [vmem:[%s206 + $0x28] sm:$0xf]
      %v234 = vld [vmem:[%s206 + $0x2c] sm:$0x1]
      %v235 = vld [vmem:[%s206 + $0x30] sm:$0xf]
      %v236 = vld [vmem:[%s206 + $0x34] sm:$0xf]
      %v237 = vld [vmem:[%s206 + $0x38] sm:$0x1]
      %v238 = vld [vmem:[%s206 + $0x3c] sm:$0xf]
      %v239 = vld [vmem:[%s206 + $0x40] sm:$0xf]
      %v240 = vld [vmem:[%s206 + $0x44] sm:$0x1]
      %v241 = vld [vmem:[%s206 + $0x48] sm:$0xf]
      %v242 = vld [vmem:[%s206 + $0x4c] sm:$0xf]
      %v243 = vld [vmem:[%s206 + $0x50] sm:$0x1]
      %v244 = vld [vmem:[%s206 + $0x54] sm:$0xf]
      %v245 = vld [vmem:[%s206 + $0x58] sm:$0xf]
      %v246 = vld [vmem:[%s206 + $0x5c] sm:$0x1]
      %v247 = vld [vmem:[%s206 + $0x60] sm:$0xf]
      %v248 = vld [vmem:[%s206 + $0x64] sm:$0xf]
      %v249 = vld [vmem:[%s206 + $0x68] sm:$0x1]
      %v250 = vld [vmem:[%s206 + $0x6c] sm:$0xf]
      %v251 = vld [vmem:[%s206 + $0x70] sm:$0xf]
      %v252 = vld [vmem:[%s206 + $0x74] sm:$0x1]
      %v253 = vld [vmem:[%s206 + $0x78] sm:$0xf]
      %v254 = vld [vmem:[%s206 + $0x7c] sm:$0xf]
      %v255 = vld [vmem:[%s206 + $0x80] sm:$0x1]
      %v256 = vld [vmem:[%s206 + $0x84] sm:$0xf]
      %v257 = vld [vmem:[%s206 + $0x88] sm:$0xf]
      %v258 = vld [vmem:[%s206 + $0x8c] sm:$0x1]
      %v259 = vld [vmem:[%s206 + $0x90] sm:$0xf]
      %v260 = vld [vmem:[%s206 + $0x94] sm:$0xf]
      %v261 = vld [vmem:[%s206 + $0x98] sm:$0x1]
      %v262 = vld [vmem:[%s206 + $0x9c] sm:$0xf]
      %v263 = vld [vmem:[%s206 + $0xa0] sm:$0xf]
      %v264 = vld [vmem:[%s206 + $0xa4] sm:$0x1]
      %v265 = vld [vmem:[%s206 + $0xa8] sm:$0xf]
      %v266 = vld [vmem:[%s206 + $0xac] sm:$0xf]
      %v267 = vld [vmem:[%s206 + $0xb0] sm:$0x1]
      %v268 = vld [vmem:[%s206 + $0xb4] sm:$0xf]
      %v269 = vld [vmem:[%s206 + $0xb8] sm:$0xf]
      %v270 = vld [vmem:[%s206 + $0xbc] sm:$0x1]
      %v271 = vld [vmem:[%s206 + $0xc0] sm:$0xf]
      %v272 = vld [vmem:[%s206 + $0xc4] sm:$0xf]
      %v273 = vld [vmem:[%s206 + $0xc8] sm:$0x1]
      %v274 = vld [vmem:[%s206 + $0xcc] sm:$0xf]
      %v275 = vld [vmem:[%s206 + $0xd0] sm:$0xf]
      %v276 = vld [vmem:[%s206 + $0xd4] sm:$0x1]
      %v277 = vld [vmem:[%s206 + $0xd8] sm:$0xf]
      %v278 = vld [vmem:[%s206 + $0xdc] sm:$0xf]
      %v279 = vld [vmem:[%s206 + $0xe0] sm:$0x1]
      %v280 = vld [vmem:[%s206 + $0xe4] sm:$0xf]
      %v281 = vld [vmem:[%s206 + $0xe8] sm:$0xf]
      %v282 = vld [vmem:[%s206 + $0xec] sm:$0x1]
      %v283 = vld [vmem:[%s206 + $0xf0] sm:$0xf]
      %v284 = vld [vmem:[%s206 + $0xf4] sm:$0xf]
      %v285 = vld [vmem:[%s206 + $0xf8] sm:$0x1]
      %v286 = vld [vmem:[%s206 + $0xfc] sm:$0xf]
      %v287 = vld [vmem:[%s206 + $0x100] sm:$0xf]
      %v288 = vld [vmem:[%s206 + $0x104] sm:$0x1]
      %v289 = vld [vmem:[%s206 + $0x108] sm:$0xf]
      %v290 = vld [vmem:[%s206 + $0x10c] sm:$0xf]
      %v291 = vld [vmem:[%s206 + $0x110] sm:$0x1]
      %v292 = vld [vmem:[%s206 + $0x114] sm:$0xf]
      %v293 = vld [vmem:[%s206 + $0x118] sm:$0xf]
      %v294 = vld [vmem:[%s206 + $0x11c] sm:$0x1]
      %v295 = vld [vmem:[%s206 + $0x120] sm:$0xf]
      %v296 = vld [vmem:[%s206 + $0x124] sm:$0xf]
      %v297 = vld [vmem:[%s206 + $0x128] sm:$0x1]
      %v298 = vld [vmem:[%s206 + $0x12c] sm:$0xf]
      %v299 = vld [vmem:[%s206 + $0x130] sm:$0xf]
      %v300 = vld [vmem:[%s206 + $0x134] sm:$0x1]
      %v301 = vld [vmem:[%s206 + $0x138] sm:$0xf]
      %v302 = vld [vmem:[%s206 + $0x13c] sm:$0xf]
      %v303 = vld [vmem:[%s206 + $0x140] sm:$0x1]
      %v304 = vld [vmem:[%s206 + $0x144] sm:$0xf]
      %v305 = vld [vmem:[%s206 + $0x148] sm:$0xf]
      %v306 = vld [vmem:[%s206 + $0x14c] sm:$0x1]
      %v307 = vld [vmem:[%s206 + $0x150] sm:$0xf]
      %v308 = vld [vmem:[%s206 + $0x154] sm:$0xf]
      %v309 = vld [vmem:[%s206 + $0x158] sm:$0x1]
      %v310 = vld [vmem:[%s206 + $0x15c] sm:$0xf]
      %v311 = vld [vmem:[%s206 + $0x160] sm:$0xf]
      %v312 = vld [vmem:[%s206 + $0x164] sm:$0x1]
      %v313 = vld [vmem:[%s206 + $0x168] sm:$0xf]
      %v314 = vld [vmem:[%s206 + $0x16c] sm:$0xf]
      %v315 = vld [vmem:[%s206 + $0x170] sm:$0x1]
      %v316 = vld [vmem:[%s206 + $0x174] sm:$0xf]
      %v317 = vld [vmem:[%s206 + $0x178] sm:$0xf]
      %v318 = vld [vmem:[%s206 + $0x17c] sm:$0x1]
      %v319 = vld [vmem:[%s206 + $0x180] sm:$0xf]
      %v320 = vld [vmem:[%s206 + $0x184] sm:$0xf]
      %v321 = vld [vmem:[%s206 + $0x188] sm:$0x1]
      %v322 = vld [vmem:[%s206 + $0x18c] sm:$0xf]
      %v323 = vld [vmem:[%s206 + $0x190] sm:$0xf]
      %v324 = vld [vmem:[%s206 + $0x194] sm:$0x1]
      %v325 = vld [vmem:[%s206 + $0x198] sm:$0xf]
      %v326 = vld [vmem:[%s206 + $0x19c] sm:$0xf]
      %v327 = vld [vmem:[%s206 + $0x1a0] sm:$0x1]
      %v328 = vld [vmem:[%s206 + $0x1a4] sm:$0xf]
      %v329 = vld [vmem:[%s206 + $0x1a8] sm:$0xf]
      %v330 = vld [vmem:[%s206 + $0x1ac] sm:$0x1]
      %v331 = vld [vmem:[%s206 + $0x1b0] sm:$0xf]
      %v332 = vld [vmem:[%s206 + $0x1b4] sm:$0xf]
      %v333 = vld [vmem:[%s206 + $0x1b8] sm:$0x1]
      %v334 = vld [vmem:[%s206 + $0x1bc] sm:$0xf]
      %v335 = vld [vmem:[%s206 + $0x1c0] sm:$0xf]
      %v336 = vld [vmem:[%s206 + $0x1c4] sm:$0x1]
      %v337 = vld [vmem:[%s206 + $0x1c8] sm:$0xf]
      %v338 = vld [vmem:[%s206 + $0x1cc] sm:$0xf]
      %v339 = vld [vmem:[%s206 + $0x1d0] sm:$0x1]
      %v340 = vld [vmem:[%s206 + $0x1d4] sm:$0xf]
      %v341 = vld [vmem:[%s206 + $0x1d8] sm:$0xf]
      %v342 = vld [vmem:[%s206 + $0x1dc] sm:$0x1]
      %v343 = vld [vmem:[%s206 + $0x1e0] sm:$0xf]
      %v344 = vld [vmem:[%s206 + $0x1e4] sm:$0xf]
      %v345 = vld [vmem:[%s206 + $0x1e8] sm:$0x1]
      %v346 = vld [vmem:[%s206 + $0x1ec] sm:$0xf]
      %v347 = vld [vmem:[%s206 + $0x1f0] sm:$0xf]
      %v348 = vld [vmem:[%s206 + $0x1f4] sm:$0x1]
      %v349 = vld [vmem:[%s206 + $0x1f8] sm:$0xf]
      %v350 = vld [vmem:[%s206 + $0x1fc] sm:$0xf]
      %v351 = vld [vmem:[%s206 + $0x200] sm:$0x1]
      %v352 = vld [vmem:[%s206 + $0x204] sm:$0xf]
      %v353 = vld [vmem:[%s206 + $0x208] sm:$0xf]
      %v354 = vld [vmem:[%s206 + $0x20c] sm:$0x1]
      %v355 = vld [vmem:[%s206 + $0x210] sm:$0xf]
      %v356 = vld [vmem:[%s206 + $0x214] sm:$0xf]
      %v357 = vld [vmem:[%s206 + $0x218] sm:$0x1]
      %v358 = vld [vmem:[%s206 + $0x21c] sm:$0xf]
      %v359 = vld [vmem:[%s206 + $0x220] sm:$0xf]
      %v360 = vld [vmem:[%s206 + $0x224] sm:$0x1]
      %v361 = vld [vmem:[%s206 + $0x228] sm:$0xf]
      %v362 = vld [vmem:[%s206 + $0x22c] sm:$0xf]
      %v363 = vld [vmem:[%s206 + $0x230] sm:$0x1]
      %v364 = vld [vmem:[%s206 + $0x234] sm:$0xf]
      %v365 = vld [vmem:[%s206 + $0x238] sm:$0xf]
      %v366 = vld [vmem:[%s206 + $0x23c] sm:$0x1]
      %v367 = vld [vmem:[%s206 + $0x240] sm:$0xf]
      %v368 = vld [vmem:[%s206 + $0x244] sm:$0xf]
      %v369 = vld [vmem:[%s206 + $0x248] sm:$0x1]
      %v370 = vld [vmem:[%s206 + $0x24c] sm:$0xf]
      %v371 = vld [vmem:[%s206 + $0x250] sm:$0xf]
      %v372 = vld [vmem:[%s206 + $0x254] sm:$0x1]
      %v373 = vld [vmem:[%s206 + $0x258] sm:$0xf]
      %v374 = vld [vmem:[%s206 + $0x25c] sm:$0xf]
      %v375 = vld [vmem:[%s206 + $0x260] sm:$0x1]
      %v376 = vld [vmem:[%s206 + $0x264] sm:$0xf]
      %v377 = vld [vmem:[%s206 + $0x268] sm:$0xf]
      %v378 = vld [vmem:[%s206 + $0x26c] sm:$0x1]
      %v379 = vld [vmem:[%s206 + $0x270] sm:$0xf]
      %v380 = vld [vmem:[%s206 + $0x274] sm:$0xf]
      %v381 = vld [vmem:[%s206 + $0x278] sm:$0x1]
      %v382 = vld [vmem:[%s206 + $0x27c] sm:$0xf]
      %v383 = vld [vmem:[%s206 + $0x280] sm:$0xf]
      %v384 = vld [vmem:[%s206 + $0x284] sm:$0x1]
      %v385 = vld [vmem:[%s206 + $0x288] sm:$0xf]
      %v386 = vld [vmem:[%s206 + $0x28c] sm:$0xf]
      %v387 = vld [vmem:[%s206 + $0x290] sm:$0x1]
      %v388 = vld [vmem:[%s206 + $0x294] sm:$0xf]
      %v389 = vld [vmem:[%s206 + $0x298] sm:$0xf]
      %v390 = vld [vmem:[%s206 + $0x29c] sm:$0x1]
      %v391 = vld [vmem:[%s206 + $0x2a0] sm:$0xf]
      %v392 = vld [vmem:[%s206 + $0x2a4] sm:$0xf]
      %v393 = vld [vmem:[%s206 + $0x2a8] sm:$0x1]
      %v394 = vld [vmem:[%s206 + $0x2ac] sm:$0xf]
      %v395 = vld [vmem:[%s206 + $0x2b0] sm:$0xf]
      %v396 = vld [vmem:[%s206 + $0x2b4] sm:$0x1]
      %v397 = vld [vmem:[%s206 + $0x2b8] sm:$0xf]
      %v398 = vld [vmem:[%s206 + $0x2bc] sm:$0xf]
      %v399 = vld [vmem:[%s206 + $0x2c0] sm:$0x1]
      %v400 = vld [vmem:[%s206 + $0x2c4] sm:$0xf]
      %v401 = vld [vmem:[%s206 + $0x2c8] sm:$0xf]
      %v402 = vld [vmem:[%s206 + $0x2cc] sm:$0x1]
      %v403 = vld [vmem:[%s206 + $0x2d0] sm:$0xf]
      %v404 = vld [vmem:[%s206 + $0x2d4] sm:$0xf]
      %v405 = vld [vmem:[%s206 + $0x2d8] sm:$0x1]
      %v406 = vld [vmem:[%s206 + $0x2dc] sm:$0xf]
      %v407 = vld [vmem:[%s206 + $0x2e0] sm:$0xf]
      %v408 = vld [vmem:[%s206 + $0x2e4] sm:$0x1]
      %v409 = vld [vmem:[%s206 + $0x2e8] sm:$0xf]
      %v410 = vld [vmem:[%s206 + $0x2ec] sm:$0xf]
      %v411 = vld [vmem:[%s206 + $0x2f0] sm:$0x1]
      %v412 = vld [vmem:[%s206 + $0x2f4] sm:$0xf]
      %v413 = vld [vmem:[%s206 + $0x2f8] sm:$0xf]
      %v414 = vld [vmem:[%s206 + $0x2fc] sm:$0x1]
      %v415 = vld [vmem:[%s206 + $0x300] sm:$0xf]
      %v416 = vld [vmem:[%s206 + $0x304] sm:$0xf]
      %v417 = vld [vmem:[%s206 + $0x308] sm:$0x1]
      %v418 = vld [vmem:[%s206 + $0x30c] sm:$0xf]
      %v419 = vld [vmem:[%s206 + $0x310] sm:$0xf]
      %v420 = vld [vmem:[%s206 + $0x314] sm:$0x1]
      %v421 = vld [vmem:[%s206 + $0x318] sm:$0xf]
      %v422 = vld [vmem:[%s206 + $0x31c] sm:$0xf]
      %v423 = vld [vmem:[%s206 + $0x320] sm:$0x1]
      %v424 = vld [vmem:[%s206 + $0x324] sm:$0xf]
      %v425 = vld [vmem:[%s206 + $0x328] sm:$0xf]
      %v426 = vld [vmem:[%s206 + $0x32c] sm:$0x1]
      %v427 = vld [vmem:[%s206 + $0x330] sm:$0xf]
      %v428 = vld [vmem:[%s206 + $0x334] sm:$0xf]
      %v429 = vld [vmem:[%s206 + $0x338] sm:$0x1]
      %v430 = vld [vmem:[%s206 + $0x33c] sm:$0xf]
      %v431 = vld [vmem:[%s206 + $0x340] sm:$0xf]
      %v432 = vld [vmem:[%s206 + $0x344] sm:$0x1]
      %v433 = vld [vmem:[%s206 + $0x348] sm:$0xf]
      %v434 = vld [vmem:[%s206 + $0x34c] sm:$0xf]
      %v435 = vld [vmem:[%s206 + $0x350] sm:$0x1]
      %v436 = vld [vmem:[%s206 + $0x354] sm:$0xf]
      %v437 = vld [vmem:[%s206 + $0x358] sm:$0xf]
      %v438 = vld [vmem:[%s206 + $0x35c] sm:$0x1]
      %v490 = vunpack.c.l.b16 %v223
      %v491 = vunpack.c.l.b16 %v224
      %v492 = vunpack.c.l.b16 %v225
      %v493 = vunpack.c.l.b16 %v226
      %v494 = vunpack.c.l.b16 %v227
      %v495 = vunpack.c.l.b16 %v228
      %v496 = vunpack.c.l.b16 %v229
      %v497 = vunpack.c.l.b16 %v230
      %v498 = vunpack.c.l.b16 %v231
      %v499 = vunpack.c.l.b16 %v232
      %v500 = vunpack.c.l.b16 %v233
      %v501 = vunpack.c.l.b16 %v234
      %v502 = vunpack.c.l.b16 %v235
      %v503 = vunpack.c.l.b16 %v236
      %v504 = vunpack.c.l.b16 %v237
      %v505 = vunpack.c.l.b16 %v238
      %v506 = vunpack.c.l.b16 %v239
      %v507 = vunpack.c.l.b16 %v240
      %v508 = vunpack.c.l.b16 %v241
      %v509 = vunpack.c.l.b16 %v242
      %v510 = vunpack.c.l.b16 %v243
      %v511 = vunpack.c.l.b16 %v244
      %v512 = vunpack.c.l.b16 %v245
      %v513 = vunpack.c.l.b16 %v246
      %v514 = vunpack.c.l.b16 %v247
      %v515 = vunpack.c.l.b16 %v248
      %v516 = vunpack.c.l.b16 %v249
      %v517 = vunpack.c.l.b16 %v250
      %v518 = vunpack.c.l.b16 %v251
      %v519 = vunpack.c.l.b16 %v252
      %v520 = vunpack.c.l.b16 %v253
      %v521 = vunpack.c.l.b16 %v254
      %v522 = vunpack.c.l.b16 %v255
      %v523 = vunpack.c.l.b16 %v256
      %v524 = vunpack.c.l.b16 %v257
      %v525 = vunpack.c.l.b16 %v258
      %v526 = vunpack.c.l.b16 %v259
      %v527 = vunpack.c.l.b16 %v260
      %v528 = vunpack.c.l.b16 %v261
      %v529 = vunpack.c.l.b16 %v262
      %v530 = vunpack.c.l.b16 %v263
      %v531 = vunpack.c.l.b16 %v264
      %v532 = vunpack.c.l.b16 %v265
      %v533 = vunpack.c.l.b16 %v266
      %v534 = vunpack.c.l.b16 %v267
      %v535 = vunpack.c.l.b16 %v268
      %v536 = vunpack.c.l.b16 %v269
      %v537 = vunpack.c.l.b16 %v270
      %v538 = vunpack.c.l.b16 %v271
      %v539 = vunpack.c.l.b16 %v272
      %v540 = vunpack.c.l.b16 %v273
      %v541 = vpack.c.b16 %v491, %v490
      %v542 = vpack.c.b16 %v492, %v492
      %v543 = vpack.c.b16 %v494, %v493
      %v544 = vpack.c.b16 %v495, %v495
      %v545 = vpack.c.b16 %v497, %v496
      %v546 = vpack.c.b16 %v498, %v498
      %v547 = vpack.c.b16 %v500, %v499
      %v548 = vpack.c.b16 %v501, %v501
      %v549 = vpack.c.b16 %v503, %v502
      %v550 = vpack.c.b16 %v504, %v504
      %v551 = vpack.c.b16 %v506, %v505
      %v552 = vpack.c.b16 %v507, %v507
      %v553 = vpack.c.b16 %v509, %v508
      %v554 = vpack.c.b16 %v510, %v510
      %v555 = vpack.c.b16 %v512, %v511
      %v556 = vpack.c.b16 %v513, %v513
      %v557 = vpack.c.b16 %v515, %v514
      %v558 = vpack.c.b16 %v516, %v516
      %v559 = vpack.c.b16 %v518, %v517
      %v560 = vpack.c.b16 %v519, %v519
      %v561 = vpack.c.b16 %v521, %v520
      %v562 = vpack.c.b16 %v522, %v522
      %v563 = vpack.c.b16 %v524, %v523
      %v564 = vpack.c.b16 %v525, %v525
      %v565 = vpack.c.b16 %v527, %v526
      %v566 = vpack.c.b16 %v528, %v528
      %v567 = vpack.c.b16 %v530, %v529
      %v568 = vpack.c.b16 %v531, %v531
      %v569 = vpack.c.b16 %v533, %v532
      %v570 = vpack.c.b16 %v534, %v534
      %v571 = vpack.c.b16 %v536, %v535
      %v572 = vpack.c.b16 %v537, %v537
      %v573 = vpack.c.b16 %v539, %v538
      %v574 = vpack.c.b16 %v540, %v540
      %v626 = vunpack.c.l.b16 %v277
      %v627 = vunpack.c.l.b16 %v278
      %v628 = vunpack.c.l.b16 %v279
      %v629 = vunpack.c.l.b16 %v280
      %v630 = vunpack.c.l.b16 %v281
      %v631 = vunpack.c.l.b16 %v282
      %v632 = vunpack.c.l.b16 %v283
      %v633 = vunpack.c.l.b16 %v284
      %v634 = vunpack.c.l.b16 %v285
      %v635 = vunpack.c.l.b16 %v286
      %v636 = vunpack.c.l.b16 %v287
      %v637 = vunpack.c.l.b16 %v288
      %v638 = vunpack.c.l.b16 %v289
      %v639 = vunpack.c.l.b16 %v290
      %v640 = vunpack.c.l.b16 %v291
      %v641 = vunpack.c.l.b16 %v292
      %v642 = vunpack.c.l.b16 %v293
      %v643 = vunpack.c.l.b16 %v294
      %v644 = vunpack.c.l.b16 %v295
      %v645 = vunpack.c.l.b16 %v296
      %v646 = vunpack.c.l.b16 %v297
      %v647 = vunpack.c.l.b16 %v298
      %v648 = vunpack.c.l.b16 %v299
      %v649 = vunpack.c.l.b16 %v300
      %v650 = vunpack.c.l.b16 %v301
      %v651 = vunpack.c.l.b16 %v302
      %v652 = vunpack.c.l.b16 %v303
      %v653 = vunpack.c.l.b16 %v304
      %v654 = vunpack.c.l.b16 %v305
      %v655 = vunpack.c.l.b16 %v306
      %v656 = vunpack.c.l.b16 %v307
      %v657 = vunpack.c.l.b16 %v308
      %v658 = vunpack.c.l.b16 %v309
      %v659 = vunpack.c.l.b16 %v310
      %v660 = vunpack.c.l.b16 %v311
      %v661 = vunpack.c.l.b16 %v312
      %v662 = vunpack.c.l.b16 %v313
      %v663 = vunpack.c.l.b16 %v314
      %v664 = vunpack.c.l.b16 %v315
      %v665 = vunpack.c.l.b16 %v316
      %v666 = vunpack.c.l.b16 %v317
      %v667 = vunpack.c.l.b16 %v318
      %v668 = vunpack.c.l.b16 %v319
      %v669 = vunpack.c.l.b16 %v320
      %v670 = vunpack.c.l.b16 %v321
      %v671 = vunpack.c.l.b16 %v322
      %v672 = vunpack.c.l.b16 %v323
      %v673 = vunpack.c.l.b16 %v324
      %v674 = vunpack.c.l.b16 %v325
      %v675 = vunpack.c.l.b16 %v326
      %v676 = vunpack.c.l.b16 %v327
      %v677 = vpack.c.b16 %v627, %v626
      %v678 = vpack.c.b16 %v628, %v628
      %v679 = vpack.c.b16 %v630, %v629
      %v680 = vpack.c.b16 %v631, %v631
      %v681 = vpack.c.b16 %v633, %v632
      %v682 = vpack.c.b16 %v634, %v634
      %v683 = vpack.c.b16 %v636, %v635
      %v684 = vpack.c.b16 %v637, %v637
      %v685 = vpack.c.b16 %v639, %v638
      %v686 = vpack.c.b16 %v640, %v640
      %v687 = vpack.c.b16 %v642, %v641
      %v688 = vpack.c.b16 %v643, %v643
      %v689 = vpack.c.b16 %v645, %v644
      %v690 = vpack.c.b16 %v646, %v646
      %v691 = vpack.c.b16 %v648, %v647
      %v692 = vpack.c.b16 %v649, %v649
      %v693 = vpack.c.b16 %v651, %v650
      %v694 = vpack.c.b16 %v652, %v652
      %v695 = vpack.c.b16 %v654, %v653
      %v696 = vpack.c.b16 %v655, %v655
      %v697 = vpack.c.b16 %v657, %v656
      %v698 = vpack.c.b16 %v658, %v658
      %v699 = vpack.c.b16 %v660, %v659
      %v700 = vpack.c.b16 %v661, %v661
      %v701 = vpack.c.b16 %v663, %v662
      %v702 = vpack.c.b16 %v664, %v664
      %v703 = vpack.c.b16 %v666, %v665
      %v704 = vpack.c.b16 %v667, %v667
      %v705 = vpack.c.b16 %v669, %v668
      %v706 = vpack.c.b16 %v670, %v670
      %v707 = vpack.c.b16 %v672, %v671
      %v708 = vpack.c.b16 %v673, %v673
      %v709 = vpack.c.b16 %v675, %v674
      %v710 = vpack.c.b16 %v676, %v676
      %711 = vrot.lane.b32.xlu0 %v677, 3
      %v712 = vpop.permute.xlu0 %711
      %713 = vrot.lane.b32.xlu0 %v678, 3
      %v714 = vpop.permute.xlu0 %713
      %715 = vrot.lane.b32.xlu0 %v679, 3
      %v716 = vpop.permute.xlu0 %715
      %717 = vrot.lane.b32.xlu0 %v680, 3
      %v718 = vpop.permute.xlu0 %717
      %719 = vrot.lane.b32.xlu0 %v681, 3
      %v720 = vpop.permute.xlu0 %719
      %721 = vrot.lane.b32.xlu0 %v682, 3
      %v722 = vpop.permute.xlu0 %721
      %723 = vrot.lane.b32.xlu0 %v683, 3
      %v724 = vpop.permute.xlu0 %723
      %725 = vrot.lane.b32.xlu0 %v684, 3
      %v726 = vpop.permute.xlu0 %725
      %727 = vrot.lane.b32.xlu0 %v685, 3
      %v728 = vpop.permute.xlu0 %727
      %729 = vrot.lane.b32.xlu0 %v686, 3
      %v730 = vpop.permute.xlu0 %729
      %731 = vrot.lane.b32.xlu0 %v687, 3
      %v732 = vpop.permute.xlu0 %731
      %733 = vrot.lane.b32.xlu0 %v688, 3
      %v734 = vpop.permute.xlu0 %733
      %735 = vrot.lane.b32.xlu0 %v689, 3
      %v736 = vpop.permute.xlu0 %735
      %737 = vrot.lane.b32.xlu0 %v690, 3
      %v738 = vpop.permute.xlu0 %737
      %739 = vrot.lane.b32.xlu0 %v691, 3
      %v740 = vpop.permute.xlu0 %739
      %741 = vrot.lane.b32.xlu0 %v692, 3
      %v742 = vpop.permute.xlu0 %741
      %743 = vrot.lane.b32.xlu0 %v693, 3
      %v744 = vpop.permute.xlu0 %743
      %745 = vrot.lane.b32.xlu0 %v694, 3
      %v746 = vpop.permute.xlu0 %745
      %747 = vrot.lane.b32.xlu0 %v695, 3
      %v748 = vpop.permute.xlu0 %747
      %749 = vrot.lane.b32.xlu0 %v696, 3
      %v750 = vpop.permute.xlu0 %749
      %751 = vrot.lane.b32.xlu0 %v697, 3
      %v752 = vpop.permute.xlu0 %751
      %753 = vrot.lane.b32.xlu0 %v698, 3
      %v754 = vpop.permute.xlu0 %753
      %755 = vrot.lane.b32.xlu0 %v699, 3
      %v756 = vpop.permute.xlu0 %755
      %757 = vrot.lane.b32.xlu0 %v700, 3
      %v758 = vpop.permute.xlu0 %757
      %759 = vrot.lane.b32.xlu0 %v701, 3
      %v760 = vpop.permute.xlu0 %759
      %761 = vrot.lane.b32.xlu0 %v702, 3
      %v762 = vpop.permute.xlu0 %761
      %763 = vrot.lane.b32.xlu0 %v703, 3
      %v764 = vpop.permute.xlu0 %763
      %765 = vrot.lane.b32.xlu0 %v704, 3
      %v766 = vpop.permute.xlu0 %765
      %767 = vrot.lane.b32.xlu0 %v705, 3
      %v768 = vpop.permute.xlu0 %767
      %769 = vrot.lane.b32.xlu0 %v706, 3
      %v770 = vpop.permute.xlu0 %769
      %771 = vrot.lane.b32.xlu0 %v707, 3
      %v772 = vpop.permute.xlu0 %771
      %773 = vrot.lane.b32.xlu0 %v708, 3
      %v774 = vpop.permute.xlu0 %773
      %775 = vrot.lane.b32.xlu0 %v709, 3
      %v776 = vpop.permute.xlu0 %775
      %777 = vrot.lane.b32.xlu0 %v710, 3
      %v778 = vpop.permute.xlu0 %777
      %vm779 = vsmask.f32 7424
      %v781 = vshrl.u32 %v541, 16
      %v783 = vshll.u32 %v541, 16
      %v785 = vrot.slane %v783, 1
      %v786 = vor.u32 %v781, %v785
      %v788 = vshll.u32 %v542, 16
      %v790 = vrot.slane %v788, 1
      %v791 = vsel %vm779, %v786, %v790
      %v792 = vshrl.u32 %v542, 16
      %v795 = vshrl.u32 %v543, 16
      %v797 = vshll.u32 %v543, 16
      %v799 = vrot.slane %v797, 1
      %v800 = vor.u32 %v795, %v799
      %v802 = vshll.u32 %v544, 16
      %v804 = vrot.slane %v802, 1
      %v805 = vsel %vm779, %v800, %v804
      %v806 = vshrl.u32 %v544, 16
      %v809 = vshrl.u32 %v545, 16
      %v811 = vshll.u32 %v545, 16
      %v813 = vrot.slane %v811, 1
      %v814 = vor.u32 %v809, %v813
      %v816 = vshll.u32 %v546, 16
      %v818 = vrot.slane %v816, 1
      %v819 = vsel %vm779, %v814, %v818
      %v820 = vshrl.u32 %v546, 16
      %v823 = vshrl.u32 %v547, 16
      %v825 = vshll.u32 %v547, 16
      %v827 = vrot.slane %v825, 1
      %v828 = vor.u32 %v823, %v827
      %v830 = vshll.u32 %v548, 16
      %v832 = vrot.slane %v830, 1
      %v833 = vsel %vm779, %v828, %v832
      %v834 = vshrl.u32 %v548, 16
      %v837 = vshrl.u32 %v549, 16
      %v839 = vshll.u32 %v549, 16
      %v841 = vrot.slane %v839, 1
      %v842 = vor.u32 %v837, %v841
      %v844 = vshll.u32 %v550, 16
      %v846 = vrot.slane %v844, 1
      %v847 = vsel %vm779, %v842, %v846
      %v848 = vshrl.u32 %v550, 16
      %v851 = vshrl.u32 %v551, 16
      %v853 = vshll.u32 %v551, 16
      %v855 = vrot.slane %v853, 1
      %v856 = vor.u32 %v851, %v855
      %v858 = vshll.u32 %v552, 16
      %v860 = vrot.slane %v858, 1
      %v861 = vsel %vm779, %v856, %v860
      %v862 = vshrl.u32 %v552, 16
      %v865 = vshrl.u32 %v553, 16
      %v867 = vshll.u32 %v553, 16
      %v869 = vrot.slane %v867, 1
      %v870 = vor.u32 %v865, %v869
      %v872 = vshll.u32 %v554, 16
      %v874 = vrot.slane %v872, 1
      %v875 = vsel %vm779, %v870, %v874
      %v876 = vshrl.u32 %v554, 16
      %v879 = vshrl.u32 %v555, 16
      %v881 = vshll.u32 %v555, 16
      %v883 = vrot.slane %v881, 1
      %v884 = vor.u32 %v879, %v883
      %v886 = vshll.u32 %v556, 16
      %v888 = vrot.slane %v886, 1
      %v889 = vsel %vm779, %v884, %v888
      %v890 = vshrl.u32 %v556, 16
      %v893 = vshrl.u32 %v557, 16
      %v895 = vshll.u32 %v557, 16
      %v897 = vrot.slane %v895, 1
      %v898 = vor.u32 %v893, %v897
      %v900 = vshll.u32 %v558, 16
      %v902 = vrot.slane %v900, 1
      %v903 = vsel %vm779, %v898, %v902
      %v904 = vshrl.u32 %v558, 16
      %v907 = vshrl.u32 %v559, 16
      %v909 = vshll.u32 %v559, 16
      %v911 = vrot.slane %v909, 1
      %v912 = vor.u32 %v907, %v911
      %v914 = vshll.u32 %v560, 16
      %v916 = vrot.slane %v914, 1
      %v917 = vsel %vm779, %v912, %v916
      %v918 = vshrl.u32 %v560, 16
      %v921 = vshrl.u32 %v561, 16
      %v923 = vshll.u32 %v561, 16
      %v925 = vrot.slane %v923, 1
      %v926 = vor.u32 %v921, %v925
      %v928 = vshll.u32 %v562, 16
      %v930 = vrot.slane %v928, 1
      %v931 = vsel %vm779, %v926, %v930
      %v932 = vshrl.u32 %v562, 16
      %v935 = vshrl.u32 %v563, 16
      %v937 = vshll.u32 %v563, 16
      %v939 = vrot.slane %v937, 1
      %v940 = vor.u32 %v935, %v939
      %v942 = vshll.u32 %v564, 16
      %v944 = vrot.slane %v942, 1
      %v945 = vsel %vm779, %v940, %v944
      %v946 = vshrl.u32 %v564, 16
      %v949 = vshrl.u32 %v565, 16
      %v951 = vshll.u32 %v565, 16
      %v953 = vrot.slane %v951, 1
      %v954 = vor.u32 %v949, %v953
      %v956 = vshll.u32 %v566, 16
      %v958 = vrot.slane %v956, 1
      %v959 = vsel %vm779, %v954, %v958
      %v960 = vshrl.u32 %v566, 16
      %v963 = vshrl.u32 %v567, 16
      %v965 = vshll.u32 %v567, 16
      %v967 = vrot.slane %v965, 1
      %v968 = vor.u32 %v963, %v967
      %v970 = vshll.u32 %v568, 16
      %v972 = vrot.slane %v970, 1
      %v973 = vsel %vm779, %v968, %v972
      %v974 = vshrl.u32 %v568, 16
      %v977 = vshrl.u32 %v569, 16
      %v979 = vshll.u32 %v569, 16
      %v981 = vrot.slane %v979, 1
      %v982 = vor.u32 %v977, %v981
      %v984 = vshll.u32 %v570, 16
      %v986 = vrot.slane %v984, 1
      %v987 = vsel %vm779, %v982, %v986
      %v988 = vshrl.u32 %v570, 16
      %v991 = vshrl.u32 %v571, 16
      %v993 = vshll.u32 %v571, 16
      %v995 = vrot.slane %v993, 1
      %v996 = vor.u32 %v991, %v995
      %v998 = vshll.u32 %v572, 16
      %v1000 = vrot.slane %v998, 1
      %v1001 = vsel %vm779, %v996, %v1000
      %v1002 = vshrl.u32 %v572, 16
      %v1005 = vshrl.u32 %v573, 16
      %v1007 = vshll.u32 %v573, 16
      %v1009 = vrot.slane %v1007, 1
      %v1010 = vor.u32 %v1005, %v1009
      %v1012 = vshll.u32 %v574, 16
      %v1014 = vrot.slane %v1012, 1
      %v1015 = vsel %vm779, %v1010, %v1014
      %v1016 = vshrl.u32 %v574, 16
      %1018 = vrot.lane.b32.xlu0 %v791, 6
      %v1019 = vpop.permute.xlu0 %1018
      %1020 = vrot.lane.b32.xlu0 %v792, 6
      %v1021 = vpop.permute.xlu0 %1020
      %1022 = vrot.lane.b32.xlu0 %v805, 6
      %v1023 = vpop.permute.xlu0 %1022
      %1024 = vrot.lane.b32.xlu0 %v806, 6
      %v1025 = vpop.permute.xlu0 %1024
      %1026 = vrot.lane.b32.xlu0 %v819, 6
      %v1027 = vpop.permute.xlu0 %1026
      %1028 = vrot.lane.b32.xlu0 %v820, 6
      %v1029 = vpop.permute.xlu0 %1028
      %1030 = vrot.lane.b32.xlu0 %v833, 6
      %v1031 = vpop.permute.xlu0 %1030
      %1032 = vrot.lane.b32.xlu0 %v834, 6
      %v1033 = vpop.permute.xlu0 %1032
      %1034 = vrot.lane.b32.xlu0 %v847, 6
      %v1035 = vpop.permute.xlu0 %1034
      %1036 = vrot.lane.b32.xlu0 %v848, 6
      %v1037 = vpop.permute.xlu0 %1036
      %1038 = vrot.lane.b32.xlu0 %v861, 6
      %v1039 = vpop.permute.xlu0 %1038
      %1040 = vrot.lane.b32.xlu0 %v862, 6
      %v1041 = vpop.permute.xlu0 %1040
      %1042 = vrot.lane.b32.xlu0 %v875, 6
      %v1043 = vpop.permute.xlu0 %1042
      %1044 = vrot.lane.b32.xlu0 %v876, 6
      %v1045 = vpop.permute.xlu0 %1044
      %1046 = vrot.lane.b32.xlu0 %v889, 6
      %v1047 = vpop.permute.xlu0 %1046
      %1048 = vrot.lane.b32.xlu0 %v890, 6
      %v1049 = vpop.permute.xlu0 %1048
      %1050 = vrot.lane.b32.xlu0 %v903, 6
      %v1051 = vpop.permute.xlu0 %1050
      %1052 = vrot.lane.b32.xlu0 %v904, 6
      %v1053 = vpop.permute.xlu0 %1052
      %1054 = vrot.lane.b32.xlu0 %v917, 6
      %v1055 = vpop.permute.xlu0 %1054
      %1056 = vrot.lane.b32.xlu0 %v918, 6
      %v1057 = vpop.permute.xlu0 %1056
      %1058 = vrot.lane.b32.xlu0 %v931, 6
      %v1059 = vpop.permute.xlu0 %1058
      %1060 = vrot.lane.b32.xlu0 %v932, 6
      %v1061 = vpop.permute.xlu0 %1060
      %1062 = vrot.lane.b32.xlu0 %v945, 6
      %v1063 = vpop.permute.xlu0 %1062
      %1064 = vrot.lane.b32.xlu0 %v946, 6
      %v1065 = vpop.permute.xlu0 %1064
      %1066 = vrot.lane.b32.xlu0 %v959, 6
      %v1067 = vpop.permute.xlu0 %1066
      %1068 = vrot.lane.b32.xlu0 %v960, 6
      %v1069 = vpop.permute.xlu0 %1068
      %1070 = vrot.lane.b32.xlu0 %v973, 6
      %v1071 = vpop.permute.xlu0 %1070
      %1072 = vrot.lane.b32.xlu0 %v974, 6
      %v1073 = vpop.permute.xlu0 %1072
      %1074 = vrot.lane.b32.xlu0 %v987, 6
      %v1075 = vpop.permute.xlu0 %1074
      %1076 = vrot.lane.b32.xlu0 %v988, 6
      %v1077 = vpop.permute.xlu0 %1076
      %1078 = vrot.lane.b32.xlu0 %v1001, 6
      %v1079 = vpop.permute.xlu0 %1078
      %1080 = vrot.lane.b32.xlu0 %v1002, 6
      %v1081 = vpop.permute.xlu0 %1080
      %1082 = vrot.lane.b32.xlu0 %v1015, 6
      %v1083 = vpop.permute.xlu0 %1082
      %1084 = vrot.lane.b32.xlu0 %v1016, 6
      %v1085 = vpop.permute.xlu0 %1084
      %v1087 = vshrl.u32 %v677, 16
      %v1089 = vshll.u32 %v677, 16
      %v1091 = vrot.slane %v1089, 1
      %v1092 = vor.u32 %v1087, %v1091
      %v1094 = vshll.u32 %v678, 16
      %v1096 = vrot.slane %v1094, 1
      %v1097 = vsel %vm779, %v1092, %v1096
      %v1098 = vshrl.u32 %v678, 16
      %v1101 = vshrl.u32 %v679, 16
      %v1103 = vshll.u32 %v679, 16
      %v1105 = vrot.slane %v1103, 1
      %v1106 = vor.u32 %v1101, %v1105
      %v1108 = vshll.u32 %v680, 16
      %v1110 = vrot.slane %v1108, 1
      %v1111 = vsel %vm779, %v1106, %v1110
      %v1112 = vshrl.u32 %v680, 16
      %v1115 = vshrl.u32 %v681, 16
      %v1117 = vshll.u32 %v681, 16
      %v1119 = vrot.slane %v1117, 1
      %v1120 = vor.u32 %v1115, %v1119
      %v1122 = vshll.u32 %v682, 16
      %v1124 = vrot.slane %v1122, 1
      %v1125 = vsel %vm779, %v1120, %v1124
      %v1126 = vshrl.u32 %v682, 16
      %v1129 = vshrl.u32 %v683, 16
      %v1131 = vshll.u32 %v683, 16
      %v1133 = vrot.slane %v1131, 1
      %v1134 = vor.u32 %v1129, %v1133
      %v1136 = vshll.u32 %v684, 16
      %v1138 = vrot.slane %v1136, 1
      %v1139 = vsel %vm779, %v1134, %v1138
      %v1140 = vshrl.u32 %v684, 16
      %v1143 = vshrl.u32 %v685, 16
      %v1145 = vshll.u32 %v685, 16
      %v1147 = vrot.slane %v1145, 1
      %v1148 = vor.u32 %v1143, %v1147
      %v1150 = vshll.u32 %v686, 16
      %v1152 = vrot.slane %v1150, 1
      %v1153 = vsel %vm779, %v1148, %v1152
      %v1154 = vshrl.u32 %v686, 16
      %v1157 = vshrl.u32 %v687, 16
      %v1159 = vshll.u32 %v687, 16
      %v1161 = vrot.slane %v1159, 1
      %v1162 = vor.u32 %v1157, %v1161
      %v1164 = vshll.u32 %v688, 16
      %v1166 = vrot.slane %v1164, 1
      %v1167 = vsel %vm779, %v1162, %v1166
      %v1168 = vshrl.u32 %v688, 16
      %v1171 = vshrl.u32 %v689, 16
      %v1173 = vshll.u32 %v689, 16
      %v1175 = vrot.slane %v1173, 1
      %v1176 = vor.u32 %v1171, %v1175
      %v1178 = vshll.u32 %v690, 16
      %v1180 = vrot.slane %v1178, 1
      %v1181 = vsel %vm779, %v1176, %v1180
      %v1182 = vshrl.u32 %v690, 16
      %v1185 = vshrl.u32 %v691, 16
      %v1187 = vshll.u32 %v691, 16
      %v1189 = vrot.slane %v1187, 1
      %v1190 = vor.u32 %v1185, %v1189
      %v1192 = vshll.u32 %v692, 16
      %v1194 = vrot.slane %v1192, 1
      %v1195 = vsel %vm779, %v1190, %v1194
      %v1196 = vshrl.u32 %v692, 16
      %v1199 = vshrl.u32 %v693, 16
      %v1201 = vshll.u32 %v693, 16
      %v1203 = vrot.slane %v1201, 1
      %v1204 = vor.u32 %v1199, %v1203
      %v1206 = vshll.u32 %v694, 16
      %v1208 = vrot.slane %v1206, 1
      %v1209 = vsel %vm779, %v1204, %v1208
      %v1210 = vshrl.u32 %v694, 16
      %v1213 = vshrl.u32 %v695, 16
      %v1215 = vshll.u32 %v695, 16
      %v1217 = vrot.slane %v1215, 1
      %v1218 = vor.u32 %v1213, %v1217
      %v1220 = vshll.u32 %v696, 16
      %v1222 = vrot.slane %v1220, 1
      %v1223 = vsel %vm779, %v1218, %v1222
      %v1224 = vshrl.u32 %v696, 16
      %v1227 = vshrl.u32 %v697, 16
      %v1229 = vshll.u32 %v697, 16
      %v1231 = vrot.slane %v1229, 1
      %v1232 = vor.u32 %v1227, %v1231
      %v1234 = vshll.u32 %v698, 16
      %v1236 = vrot.slane %v1234, 1
      %v1237 = vsel %vm779, %v1232, %v1236
      %v1238 = vshrl.u32 %v698, 16
      %v1241 = vshrl.u32 %v699, 16
      %v1243 = vshll.u32 %v699, 16
      %v1245 = vrot.slane %v1243, 1
      %v1246 = vor.u32 %v1241, %v1245
      %v1248 = vshll.u32 %v700, 16
      %v1250 = vrot.slane %v1248, 1
      %v1251 = vsel %vm779, %v1246, %v1250
      %v1252 = vshrl.u32 %v700, 16
      %v1255 = vshrl.u32 %v701, 16
      %v1257 = vshll.u32 %v701, 16
      %v1259 = vrot.slane %v1257, 1
      %v1260 = vor.u32 %v1255, %v1259
      %v1262 = vshll.u32 %v702, 16
      %v1264 = vrot.slane %v1262, 1
      %v1265 = vsel %vm779, %v1260, %v1264
      %v1266 = vshrl.u32 %v702, 16
      %v1269 = vshrl.u32 %v703, 16
      %v1271 = vshll.u32 %v703, 16
      %v1273 = vrot.slane %v1271, 1
      %v1274 = vor.u32 %v1269, %v1273
      %v1276 = vshll.u32 %v704, 16
      %v1278 = vrot.slane %v1276, 1
      %v1279 = vsel %vm779, %v1274, %v1278
      %v1280 = vshrl.u32 %v704, 16
      %v1283 = vshrl.u32 %v705, 16
      %v1285 = vshll.u32 %v705, 16
      %v1287 = vrot.slane %v1285, 1
      %v1288 = vor.u32 %v1283, %v1287
      %v1290 = vshll.u32 %v706, 16
      %v1292 = vrot.slane %v1290, 1
      %v1293 = vsel %vm779, %v1288, %v1292
      %v1294 = vshrl.u32 %v706, 16
      %v1297 = vshrl.u32 %v707, 16
      %v1299 = vshll.u32 %v707, 16
      %v1301 = vrot.slane %v1299, 1
      %v1302 = vor.u32 %v1297, %v1301
      %v1304 = vshll.u32 %v708, 16
      %v1306 = vrot.slane %v1304, 1
      %v1307 = vsel %vm779, %v1302, %v1306
      %v1308 = vshrl.u32 %v708, 16
      %v1311 = vshrl.u32 %v709, 16
      %v1313 = vshll.u32 %v709, 16
      %v1315 = vrot.slane %v1313, 1
      %v1316 = vor.u32 %v1311, %v1315
      %v1318 = vshll.u32 %v710, 16
      %v1320 = vrot.slane %v1318, 1
      %v1321 = vsel %vm779, %v1316, %v1320
      %v1322 = vshrl.u32 %v710, 16
      %1324 = vrot.lane.b32.xlu0 %v1097, 9
      %v1325 = vpop.permute.xlu0 %1324
      %1326 = vrot.lane.b32.xlu0 %v1098, 9
      %v1327 = vpop.permute.xlu0 %1326
      %1328 = vrot.lane.b32.xlu0 %v1111, 9
      %v1329 = vpop.permute.xlu0 %1328
      %1330 = vrot.lane.b32.xlu0 %v1112, 9
      %v1331 = vpop.permute.xlu0 %1330
      %1332 = vrot.lane.b32.xlu0 %v1125, 9
      %v1333 = vpop.permute.xlu0 %1332
      %1334 = vrot.lane.b32.xlu0 %v1126, 9
      %v1335 = vpop.permute.xlu0 %1334
      %1336 = vrot.lane.b32.xlu0 %v1139, 9
      %v1337 = vpop.permute.xlu0 %1336
      %1338 = vrot.lane.b32.xlu0 %v1140, 9
      %v1339 = vpop.permute.xlu0 %1338
      %1340 = vrot.lane.b32.xlu0 %v1153, 9
      %v1341 = vpop.permute.xlu0 %1340
      %1342 = vrot.lane.b32.xlu0 %v1154, 9
      %v1343 = vpop.permute.xlu0 %1342
      %1344 = vrot.lane.b32.xlu0 %v1167, 9
      %v1345 = vpop.permute.xlu0 %1344
      %1346 = vrot.lane.b32.xlu0 %v1168, 9
      %v1347 = vpop.permute.xlu0 %1346
      %1348 = vrot.lane.b32.xlu0 %v1181, 9
      %v1349 = vpop.permute.xlu0 %1348
      %1350 = vrot.lane.b32.xlu0 %v1182, 9
      %v1351 = vpop.permute.xlu0 %1350
      %1352 = vrot.lane.b32.xlu0 %v1195, 9
      %v1353 = vpop.permute.xlu0 %1352
      %1354 = vrot.lane.b32.xlu0 %v1196, 9
      %v1355 = vpop.permute.xlu0 %1354
      %1356 = vrot.lane.b32.xlu0 %v1209, 9
      %v1357 = vpop.permute.xlu0 %1356
      %1358 = vrot.lane.b32.xlu0 %v1210, 9
      %v1359 = vpop.permute.xlu0 %1358
      %1360 = vrot.lane.b32.xlu0 %v1223, 9
      %v1361 = vpop.permute.xlu0 %1360
      %1362 = vrot.lane.b32.xlu0 %v1224, 9
      %v1363 = vpop.permute.xlu0 %1362
      %1364 = vrot.lane.b32.xlu0 %v1237, 9
      %v1365 = vpop.permute.xlu0 %1364
      %1366 = vrot.lane.b32.xlu0 %v1238, 9
      %v1367 = vpop.permute.xlu0 %1366
      %1368 = vrot.lane.b32.xlu0 %v1251, 9
      %v1369 = vpop.permute.xlu0 %1368
      %1370 = vrot.lane.b32.xlu0 %v1252, 9
      %v1371 = vpop.permute.xlu0 %1370
      %1372 = vrot.lane.b32.xlu0 %v1265, 9
      %v1373 = vpop.permute.xlu0 %1372
      %1374 = vrot.lane.b32.xlu0 %v1266, 9
      %v1375 = vpop.permute.xlu0 %1374
      %1376 = vrot.lane.b32.xlu0 %v1279, 9
      %v1377 = vpop.permute.xlu0 %1376
      %1378 = vrot.lane.b32.xlu0 %v1280, 9
      %v1379 = vpop.permute.xlu0 %1378
      %1380 = vrot.lane.b32.xlu0 %v1293, 9
      %v1381 = vpop.permute.xlu0 %1380
      %1382 = vrot.lane.b32.xlu0 %v1294, 9
      %v1383 = vpop.permute.xlu0 %1382
      %1384 = vrot.lane.b32.xlu0 %v1307, 9
      %v1385 = vpop.permute.xlu0 %1384
      %1386 = vrot.lane.b32.xlu0 %v1308, 9
      %v1387 = vpop.permute.xlu0 %1386
      %1388 = vrot.lane.b32.xlu0 %v1321, 9
      %v1389 = vpop.permute.xlu0 %1388
      %1390 = vrot.lane.b32.xlu0 %v1322, 9
      %v1391 = vpop.permute.xlu0 %1390
      %v1443 = vunpack.c.l.b16 %v331
      %v1444 = vunpack.c.l.b16 %v332
      %v1445 = vunpack.c.l.b16 %v333
      %v1446 = vunpack.c.l.b16 %v334
      %v1447 = vunpack.c.l.b16 %v335
      %v1448 = vunpack.c.l.b16 %v336
      %v1449 = vunpack.c.l.b16 %v337
      %v1450 = vunpack.c.l.b16 %v338
      %v1451 = vunpack.c.l.b16 %v339
      %v1452 = vunpack.c.l.b16 %v340
      %v1453 = vunpack.c.l.b16 %v341
      %v1454 = vunpack.c.l.b16 %v342
      %v1455 = vunpack.c.l.b16 %v343
      %v1456 = vunpack.c.l.b16 %v344
      %v1457 = vunpack.c.l.b16 %v345
      %v1458 = vunpack.c.l.b16 %v346
      %v1459 = vunpack.c.l.b16 %v347
      %v1460 = vunpack.c.l.b16 %v348
      %v1461 = vunpack.c.l.b16 %v349
      %v1462 = vunpack.c.l.b16 %v350
      %v1463 = vunpack.c.l.b16 %v351
      %v1464 = vunpack.c.l.b16 %v352
      %v1465 = vunpack.c.l.b16 %v353
      %v1466 = vunpack.c.l.b16 %v354
      %v1467 = vunpack.c.l.b16 %v355
      %v1468 = vunpack.c.l.b16 %v356
      %v1469 = vunpack.c.l.b16 %v357
      %v1470 = vunpack.c.l.b16 %v358
      %v1471 = vunpack.c.l.b16 %v359
      %v1472 = vunpack.c.l.b16 %v360
      %v1473 = vunpack.c.l.b16 %v361
      %v1474 = vunpack.c.l.b16 %v362
      %v1475 = vunpack.c.l.b16 %v363
      %v1476 = vunpack.c.l.b16 %v364
      %v1477 = vunpack.c.l.b16 %v365
      %v1478 = vunpack.c.l.b16 %v366
      %v1479 = vunpack.c.l.b16 %v367
      %v1480 = vunpack.c.l.b16 %v368
      %v1481 = vunpack.c.l.b16 %v369
      %v1482 = vunpack.c.l.b16 %v370
      %v1483 = vunpack.c.l.b16 %v371
      %v1484 = vunpack.c.l.b16 %v372
      %v1485 = vunpack.c.l.b16 %v373
      %v1486 = vunpack.c.l.b16 %v374
      %v1487 = vunpack.c.l.b16 %v375
      %v1488 = vunpack.c.l.b16 %v376
      %v1489 = vunpack.c.l.b16 %v377
      %v1490 = vunpack.c.l.b16 %v378
      %v1491 = vunpack.c.l.b16 %v379
      %v1492 = vunpack.c.l.b16 %v380
      %v1493 = vunpack.c.l.b16 %v381
      %v1494 = vpack.c.b16 %v1444, %v1443
      %v1495 = vpack.c.b16 %v1445, %v1445
      %v1496 = vpack.c.b16 %v1447, %v1446
      %v1497 = vpack.c.b16 %v1448, %v1448
      %v1498 = vpack.c.b16 %v1450, %v1449
      %v1499 = vpack.c.b16 %v1451, %v1451
      %v1500 = vpack.c.b16 %v1453, %v1452
      %v1501 = vpack.c.b16 %v1454, %v1454
      %v1502 = vpack.c.b16 %v1456, %v1455
      %v1503 = vpack.c.b16 %v1457, %v1457
      %v1504 = vpack.c.b16 %v1459, %v1458
      %v1505 = vpack.c.b16 %v1460, %v1460
      %v1506 = vpack.c.b16 %v1462, %v1461
      %v1507 = vpack.c.b16 %v1463, %v1463
      %v1508 = vpack.c.b16 %v1465, %v1464
      %v1509 = vpack.c.b16 %v1466, %v1466
      %v1510 = vpack.c.b16 %v1468, %v1467
      %v1511 = vpack.c.b16 %v1469, %v1469
      %v1512 = vpack.c.b16 %v1471, %v1470
      %v1513 = vpack.c.b16 %v1472, %v1472
      %v1514 = vpack.c.b16 %v1474, %v1473
      %v1515 = vpack.c.b16 %v1475, %v1475
      %v1516 = vpack.c.b16 %v1477, %v1476
      %v1517 = vpack.c.b16 %v1478, %v1478
      %v1518 = vpack.c.b16 %v1480, %v1479
      %v1519 = vpack.c.b16 %v1481, %v1481
      %v1520 = vpack.c.b16 %v1483, %v1482
      %v1521 = vpack.c.b16 %v1484, %v1484
      %v1522 = vpack.c.b16 %v1486, %v1485
      %v1523 = vpack.c.b16 %v1487, %v1487
      %v1524 = vpack.c.b16 %v1489, %v1488
      %v1525 = vpack.c.b16 %v1490, %v1490
      %v1526 = vpack.c.b16 %v1492, %v1491
      %v1527 = vpack.c.b16 %v1493, %v1493
      %1528 = vrot.lane.b32.xlu0 %v1494, 12
      %v1529 = vpop.permute.xlu0 %1528
      %1530 = vrot.lane.b32.xlu0 %v1495, 12
      %v1531 = vpop.permute.xlu0 %1530
      %1532 = vrot.lane.b32.xlu0 %v1496, 12
      %v1533 = vpop.permute.xlu0 %1532
      %1534 = vrot.lane.b32.xlu0 %v1497, 12
      %v1535 = vpop.permute.xlu0 %1534
      %1536 = vrot.lane.b32.xlu0 %v1498, 12
      %v1537 = vpop.permute.xlu0 %1536
      %1538 = vrot.lane.b32.xlu0 %v1499, 12
      %v1539 = vpop.permute.xlu0 %1538
      %1540 = vrot.lane.b32.xlu0 %v1500, 12
      %v1541 = vpop.permute.xlu0 %1540
      %1542 = vrot.lane.b32.xlu0 %v1501, 12
      %v1543 = vpop.permute.xlu0 %1542
      %1544 = vrot.lane.b32.xlu0 %v1502, 12
      %v1545 = vpop.permute.xlu0 %1544
      %1546 = vrot.lane.b32.xlu0 %v1503, 12
      %v1547 = vpop.permute.xlu0 %1546
      %1548 = vrot.lane.b32.xlu0 %v1504, 12
      %v1549 = vpop.permute.xlu0 %1548
      %1550 = vrot.lane.b32.xlu0 %v1505, 12
      %v1551 = vpop.permute.xlu0 %1550
      %1552 = vrot.lane.b32.xlu0 %v1506, 12
      %v1553 = vpop.permute.xlu0 %1552
      %1554 = vrot.lane.b32.xlu0 %v1507, 12
      %v1555 = vpop.permute.xlu0 %1554
      %1556 = vrot.lane.b32.xlu0 %v1508, 12
      %v1557 = vpop.permute.xlu0 %1556
      %1558 = vrot.lane.b32.xlu0 %v1509, 12
      %v1559 = vpop.permute.xlu0 %1558
      %1560 = vrot.lane.b32.xlu0 %v1510, 12
      %v1561 = vpop.permute.xlu0 %1560
      %1562 = vrot.lane.b32.xlu0 %v1511, 12
      %v1563 = vpop.permute.xlu0 %1562
      %1564 = vrot.lane.b32.xlu0 %v1512, 12
      %v1565 = vpop.permute.xlu0 %1564
      %1566 = vrot.lane.b32.xlu0 %v1513, 12
      %v1567 = vpop.permute.xlu0 %1566
      %1568 = vrot.lane.b32.xlu0 %v1514, 12
      %v1569 = vpop.permute.xlu0 %1568
      %1570 = vrot.lane.b32.xlu0 %v1515, 12
      %v1571 = vpop.permute.xlu0 %1570
      %1572 = vrot.lane.b32.xlu0 %v1516, 12
      %v1573 = vpop.permute.xlu0 %1572
      %1574 = vrot.lane.b32.xlu0 %v1517, 12
      %v1575 = vpop.permute.xlu0 %1574
      %1576 = vrot.lane.b32.xlu0 %v1518, 12
      %v1577 = vpop.permute.xlu0 %1576
      %1578 = vrot.lane.b32.xlu0 %v1519, 12
      %v1579 = vpop.permute.xlu0 %1578
      %1580 = vrot.lane.b32.xlu0 %v1520, 12
      %v1581 = vpop.permute.xlu0 %1580
      %1582 = vrot.lane.b32.xlu0 %v1521, 12
      %v1583 = vpop.permute.xlu0 %1582
      %1584 = vrot.lane.b32.xlu0 %v1522, 12
      %v1585 = vpop.permute.xlu0 %1584
      %1586 = vrot.lane.b32.xlu0 %v1523, 12
      %v1587 = vpop.permute.xlu0 %1586
      %1588 = vrot.lane.b32.xlu0 %v1524, 12
      %v1589 = vpop.permute.xlu0 %1588
      %1590 = vrot.lane.b32.xlu0 %v1525, 12
      %v1591 = vpop.permute.xlu0 %1590
      %1592 = vrot.lane.b32.xlu0 %v1526, 12
      %v1593 = vpop.permute.xlu0 %1592
      %1594 = vrot.lane.b32.xlu0 %v1527, 12
      %v1595 = vpop.permute.xlu0 %1594
      %v1647 = vunpack.c.l.b16 %v385
      %v1648 = vunpack.c.l.b16 %v386
      %v1649 = vunpack.c.l.b16 %v387
      %v1650 = vunpack.c.l.b16 %v388
      %v1651 = vunpack.c.l.b16 %v389
      %v1652 = vunpack.c.l.b16 %v390
      %v1653 = vunpack.c.l.b16 %v391
      %v1654 = vunpack.c.l.b16 %v392
      %v1655 = vunpack.c.l.b16 %v393
      %v1656 = vunpack.c.l.b16 %v394
      %v1657 = vunpack.c.l.b16 %v395
      %v1658 = vunpack.c.l.b16 %v396
      %v1659 = vunpack.c.l.b16 %v397
      %v1660 = vunpack.c.l.b16 %v398
      %v1661 = vunpack.c.l.b16 %v399
      %v1662 = vunpack.c.l.b16 %v400
      %v1663 = vunpack.c.l.b16 %v401
      %v1664 = vunpack.c.l.b16 %v402
      %v1665 = vunpack.c.l.b16 %v403
      %v1666 = vunpack.c.l.b16 %v404
      %v1667 = vunpack.c.l.b16 %v405
      %v1668 = vunpack.c.l.b16 %v406
      %v1669 = vunpack.c.l.b16 %v407
      %v1670 = vunpack.c.l.b16 %v408
      %v1671 = vunpack.c.l.b16 %v409
      %v1672 = vunpack.c.l.b16 %v410
      %v1673 = vunpack.c.l.b16 %v411
      %v1674 = vunpack.c.l.b16 %v412
      %v1675 = vunpack.c.l.b16 %v413
      %v1676 = vunpack.c.l.b16 %v414
      %v1677 = vunpack.c.l.b16 %v415
      %v1678 = vunpack.c.l.b16 %v416
      %v1679 = vunpack.c.l.b16 %v417
      %v1680 = vunpack.c.l.b16 %v418
      %v1681 = vunpack.c.l.b16 %v419
      %v1682 = vunpack.c.l.b16 %v420
      %v1683 = vunpack.c.l.b16 %v421
      %v1684 = vunpack.c.l.b16 %v422
      %v1685 = vunpack.c.l.b16 %v423
      %v1686 = vunpack.c.l.b16 %v424
      %v1687 = vunpack.c.l.b16 %v425
      %v1688 = vunpack.c.l.b16 %v426
      %v1689 = vunpack.c.l.b16 %v427
      %v1690 = vunpack.c.l.b16 %v428
      %v1691 = vunpack.c.l.b16 %v429
      %v1692 = vunpack.c.l.b16 %v430
      %v1693 = vunpack.c.l.b16 %v431
      %v1694 = vunpack.c.l.b16 %v432
      %v1695 = vunpack.c.l.b16 %v433
      %v1696 = vunpack.c.l.b16 %v434
      %v1697 = vunpack.c.l.b16 %v435
      %v1698 = vpack.c.b16 %v1648, %v1647
      %v1699 = vpack.c.b16 %v1649, %v1649
      %v1700 = vpack.c.b16 %v1651, %v1650
      %v1701 = vpack.c.b16 %v1652, %v1652
      %v1702 = vpack.c.b16 %v1654, %v1653
      %v1703 = vpack.c.b16 %v1655, %v1655
      %v1704 = vpack.c.b16 %v1657, %v1656
      %v1705 = vpack.c.b16 %v1658, %v1658
      %v1706 = vpack.c.b16 %v1660, %v1659
      %v1707 = vpack.c.b16 %v1661, %v1661
      %v1708 = vpack.c.b16 %v1663, %v1662
      %v1709 = vpack.c.b16 %v1664, %v1664
      %v1710 = vpack.c.b16 %v1666, %v1665
      %v1711 = vpack.c.b16 %v1667, %v1667
      %v1712 = vpack.c.b16 %v1669, %v1668
      %v1713 = vpack.c.b16 %v1670, %v1670
      %v1714 = vpack.c.b16 %v1672, %v1671
      %v1715 = vpack.c.b16 %v1673, %v1673
      %v1716 = vpack.c.b16 %v1675, %v1674
      %v1717 = vpack.c.b16 %v1676, %v1676
      %v1718 = vpack.c.b16 %v1678, %v1677
      %v1719 = vpack.c.b16 %v1679, %v1679
      %v1720 = vpack.c.b16 %v1681, %v1680
      %v1721 = vpack.c.b16 %v1682, %v1682
      %v1722 = vpack.c.b16 %v1684, %v1683
      %v1723 = vpack.c.b16 %v1685, %v1685
      %v1724 = vpack.c.b16 %v1687, %v1686
      %v1725 = vpack.c.b16 %v1688, %v1688
      %v1726 = vpack.c.b16 %v1690, %v1689
      %v1727 = vpack.c.b16 %v1691, %v1691
      %v1728 = vpack.c.b16 %v1693, %v1692
      %v1729 = vpack.c.b16 %v1694, %v1694
      %v1730 = vpack.c.b16 %v1696, %v1695
      %v1731 = vpack.c.b16 %v1697, %v1697
      %1732 = vrot.lane.b32.xlu0 %v1698, 15
      %v1733 = vpop.permute.xlu0 %1732
      %1734 = vrot.lane.b32.xlu0 %v1699, 15
      %v1735 = vpop.permute.xlu0 %1734
      %1736 = vrot.lane.b32.xlu0 %v1700, 15
      %v1737 = vpop.permute.xlu0 %1736
      %1738 = vrot.lane.b32.xlu0 %v1701, 15
      %v1739 = vpop.permute.xlu0 %1738
      %1740 = vrot.lane.b32.xlu0 %v1702, 15
      %v1741 = vpop.permute.xlu0 %1740
      %1742 = vrot.lane.b32.xlu0 %v1703, 15
      %v1743 = vpop.permute.xlu0 %1742
      %1744 = vrot.lane.b32.xlu0 %v1704, 15
      %v1745 = vpop.permute.xlu0 %1744
      %1746 = vrot.lane.b32.xlu0 %v1705, 15
      %v1747 = vpop.permute.xlu0 %1746
      %1748 = vrot.lane.b32.xlu0 %v1706, 15
      %v1749 = vpop.permute.xlu0 %1748
      %1750 = vrot.lane.b32.xlu0 %v1707, 15
      %v1751 = vpop.permute.xlu0 %1750
      %1752 = vrot.lane.b32.xlu0 %v1708, 15
      %v1753 = vpop.permute.xlu0 %1752
      %1754 = vrot.lane.b32.xlu0 %v1709, 15
      %v1755 = vpop.permute.xlu0 %1754
      %1756 = vrot.lane.b32.xlu0 %v1710, 15
      %v1757 = vpop.permute.xlu0 %1756
      %1758 = vrot.lane.b32.xlu0 %v1711, 15
      %v1759 = vpop.permute.xlu0 %1758
      %1760 = vrot.lane.b32.xlu0 %v1712, 15
      %v1761 = vpop.permute.xlu0 %1760
      %1762 = vrot.lane.b32.xlu0 %v1713, 15
      %v1763 = vpop.permute.xlu0 %1762
      %1764 = vrot.lane.b32.xlu0 %v1714, 15
      %v1765 = vpop.permute.xlu0 %1764
      %1766 = vrot.lane.b32.xlu0 %v1715, 15
      %v1767 = vpop.permute.xlu0 %1766
      %1768 = vrot.lane.b32.xlu0 %v1716, 15
      %v1769 = vpop.permute.xlu0 %1768
      %1770 = vrot.lane.b32.xlu0 %v1717, 15
      %v1771 = vpop.permute.xlu0 %1770
      %1772 = vrot.lane.b32.xlu0 %v1718, 15
      %v1773 = vpop.permute.xlu0 %1772
      %1774 = vrot.lane.b32.xlu0 %v1719, 15
      %v1775 = vpop.permute.xlu0 %1774
      %1776 = vrot.lane.b32.xlu0 %v1720, 15
      %v1777 = vpop.permute.xlu0 %1776
      %1778 = vrot.lane.b32.xlu0 %v1721, 15
      %v1779 = vpop.permute.xlu0 %1778
      %1780 = vrot.lane.b32.xlu0 %v1722, 15
      %v1781 = vpop.permute.xlu0 %1780
      %1782 = vrot.lane.b32.xlu0 %v1723, 15
      %v1783 = vpop.permute.xlu0 %1782
      %1784 = vrot.lane.b32.xlu0 %v1724, 15
      %v1785 = vpop.permute.xlu0 %1784
      %1786 = vrot.lane.b32.xlu0 %v1725, 15
      %v1787 = vpop.permute.xlu0 %1786
      %1788 = vrot.lane.b32.xlu0 %v1726, 15
      %v1789 = vpop.permute.xlu0 %1788
      %1790 = vrot.lane.b32.xlu0 %v1727, 15
      %v1791 = vpop.permute.xlu0 %1790
      %1792 = vrot.lane.b32.xlu0 %v1728, 15
      %v1793 = vpop.permute.xlu0 %1792
      %1794 = vrot.lane.b32.xlu0 %v1729, 15
      %v1795 = vpop.permute.xlu0 %1794
      %1796 = vrot.lane.b32.xlu0 %v1730, 15
      %v1797 = vpop.permute.xlu0 %1796
      %1798 = vrot.lane.b32.xlu0 %v1731, 15
      %v1799 = vpop.permute.xlu0 %1798
      %v1801 = vshrl.u32 %v1494, 16
      %v1803 = vshll.u32 %v1494, 16
      %v1805 = vrot.slane %v1803, 1
      %v1806 = vor.u32 %v1801, %v1805
      %v1808 = vshll.u32 %v1495, 16
      %v1810 = vrot.slane %v1808, 1
      %v1811 = vsel %vm779, %v1806, %v1810
      %v1812 = vshrl.u32 %v1495, 16
      %v1815 = vshrl.u32 %v1496, 16
      %v1817 = vshll.u32 %v1496, 16
      %v1819 = vrot.slane %v1817, 1
      %v1820 = vor.u32 %v1815, %v1819
      %v1822 = vshll.u32 %v1497, 16
      %v1824 = vrot.slane %v1822, 1
      %v1825 = vsel %vm779, %v1820, %v1824
      %v1826 = vshrl.u32 %v1497, 16
      %v1829 = vshrl.u32 %v1498, 16
      %v1831 = vshll.u32 %v1498, 16
      %v1833 = vrot.slane %v1831, 1
      %v1834 = vor.u32 %v1829, %v1833
      %v1836 = vshll.u32 %v1499, 16
      %v1838 = vrot.slane %v1836, 1
      %v1839 = vsel %vm779, %v1834, %v1838
      %v1840 = vshrl.u32 %v1499, 16
      %v1843 = vshrl.u32 %v1500, 16
      %v1845 = vshll.u32 %v1500, 16
      %v1847 = vrot.slane %v1845, 1
      %v1848 = vor.u32 %v1843, %v1847
      %v1850 = vshll.u32 %v1501, 16
      %v1852 = vrot.slane %v1850, 1
      %v1853 = vsel %vm779, %v1848, %v1852
      %v1854 = vshrl.u32 %v1501, 16
      %v1857 = vshrl.u32 %v1502, 16
      %v1859 = vshll.u32 %v1502, 16
      %v1861 = vrot.slane %v1859, 1
      %v1862 = vor.u32 %v1857, %v1861
      %v1864 = vshll.u32 %v1503, 16
      %v1866 = vrot.slane %v1864, 1
      %v1867 = vsel %vm779, %v1862, %v1866
      %v1868 = vshrl.u32 %v1503, 16
      %v1871 = vshrl.u32 %v1504, 16
      %v1873 = vshll.u32 %v1504, 16
      %v1875 = vrot.slane %v1873, 1
      %v1876 = vor.u32 %v1871, %v1875
      %v1878 = vshll.u32 %v1505, 16
      %v1880 = vrot.slane %v1878, 1
      %v1881 = vsel %vm779, %v1876, %v1880
      %v1882 = vshrl.u32 %v1505, 16
      %v1885 = vshrl.u32 %v1506, 16
      %v1887 = vshll.u32 %v1506, 16
      %v1889 = vrot.slane %v1887, 1
      %v1890 = vor.u32 %v1885, %v1889
      %v1892 = vshll.u32 %v1507, 16
      %v1894 = vrot.slane %v1892, 1
      %v1895 = vsel %vm779, %v1890, %v1894
      %v1896 = vshrl.u32 %v1507, 16
      %v1899 = vshrl.u32 %v1508, 16
      %v1901 = vshll.u32 %v1508, 16
      %v1903 = vrot.slane %v1901, 1
      %v1904 = vor.u32 %v1899, %v1903
      %v1906 = vshll.u32 %v1509, 16
      %v1908 = vrot.slane %v1906, 1
      %v1909 = vsel %vm779, %v1904, %v1908
      %v1910 = vshrl.u32 %v1509, 16
      %v1913 = vshrl.u32 %v1510, 16
      %v1915 = vshll.u32 %v1510, 16
      %v1917 = vrot.slane %v1915, 1
      %v1918 = vor.u32 %v1913, %v1917
      %v1920 = vshll.u32 %v1511, 16
      %v1922 = vrot.slane %v1920, 1
      %v1923 = vsel %vm779, %v1918, %v1922
      %v1924 = vshrl.u32 %v1511, 16
      %v1927 = vshrl.u32 %v1512, 16
      %v1929 = vshll.u32 %v1512, 16
      %v1931 = vrot.slane %v1929, 1
      %v1932 = vor.u32 %v1927, %v1931
      %v1934 = vshll.u32 %v1513, 16
      %v1936 = vrot.slane %v1934, 1
      %v1937 = vsel %vm779, %v1932, %v1936
      %v1938 = vshrl.u32 %v1513, 16
      %v1941 = vshrl.u32 %v1514, 16
      %v1943 = vshll.u32 %v1514, 16
      %v1945 = vrot.slane %v1943, 1
      %v1946 = vor.u32 %v1941, %v1945
      %v1948 = vshll.u32 %v1515, 16
      %v1950 = vrot.slane %v1948, 1
      %v1951 = vsel %vm779, %v1946, %v1950
      %v1952 = vshrl.u32 %v1515, 16
      %v1955 = vshrl.u32 %v1516, 16
      %v1957 = vshll.u32 %v1516, 16
      %v1959 = vrot.slane %v1957, 1
      %v1960 = vor.u32 %v1955, %v1959
      %v1962 = vshll.u32 %v1517, 16
      %v1964 = vrot.slane %v1962, 1
      %v1965 = vsel %vm779, %v1960, %v1964
      %v1966 = vshrl.u32 %v1517, 16
      %v1969 = vshrl.u32 %v1518, 16
      %v1971 = vshll.u32 %v1518, 16
      %v1973 = vrot.slane %v1971, 1
      %v1974 = vor.u32 %v1969, %v1973
      %v1976 = vshll.u32 %v1519, 16
      %v1978 = vrot.slane %v1976, 1
      %v1979 = vsel %vm779, %v1974, %v1978
      %v1980 = vshrl.u32 %v1519, 16
      %v1983 = vshrl.u32 %v1520, 16
      %v1985 = vshll.u32 %v1520, 16
      %v1987 = vrot.slane %v1985, 1
      %v1988 = vor.u32 %v1983, %v1987
      %v1990 = vshll.u32 %v1521, 16
      %v1992 = vrot.slane %v1990, 1
      %v1993 = vsel %vm779, %v1988, %v1992
      %v1994 = vshrl.u32 %v1521, 16
      %v1997 = vshrl.u32 %v1522, 16
      %v1999 = vshll.u32 %v1522, 16
      %v2001 = vrot.slane %v1999, 1
      %v2002 = vor.u32 %v1997, %v2001
      %v2004 = vshll.u32 %v1523, 16
      %v2006 = vrot.slane %v2004, 1
      %v2007 = vsel %vm779, %v2002, %v2006
      %v2008 = vshrl.u32 %v1523, 16
      %v2011 = vshrl.u32 %v1524, 16
      %v2013 = vshll.u32 %v1524, 16
      %v2015 = vrot.slane %v2013, 1
      %v2016 = vor.u32 %v2011, %v2015
      %v2018 = vshll.u32 %v1525, 16
      %v2020 = vrot.slane %v2018, 1
      %v2021 = vsel %vm779, %v2016, %v2020
      %v2022 = vshrl.u32 %v1525, 16
      %v2025 = vshrl.u32 %v1526, 16
      %v2027 = vshll.u32 %v1526, 16
      %v2029 = vrot.slane %v2027, 1
      %v2030 = vor.u32 %v2025, %v2029
      %v2032 = vshll.u32 %v1527, 16
      %v2034 = vrot.slane %v2032, 1
      %v2035 = vsel %vm779, %v2030, %v2034
      %v2036 = vshrl.u32 %v1527, 16
      %2038 = vrot.lane.b32.xlu0 %v1811, 18
      %v2039 = vpop.permute.xlu0 %2038
      %2040 = vrot.lane.b32.xlu0 %v1812, 18
      %v2041 = vpop.permute.xlu0 %2040
      %2042 = vrot.lane.b32.xlu0 %v1825, 18
      %v2043 = vpop.permute.xlu0 %2042
      %2044 = vrot.lane.b32.xlu0 %v1826, 18
      %v2045 = vpop.permute.xlu0 %2044
      %2046 = vrot.lane.b32.xlu0 %v1839, 18
      %v2047 = vpop.permute.xlu0 %2046
      %2048 = vrot.lane.b32.xlu0 %v1840, 18
      %v2049 = vpop.permute.xlu0 %2048
      %2050 = vrot.lane.b32.xlu0 %v1853, 18
      %v2051 = vpop.permute.xlu0 %2050
      %2052 = vrot.lane.b32.xlu0 %v1854, 18
      %v2053 = vpop.permute.xlu0 %2052
      %2054 = vrot.lane.b32.xlu0 %v1867, 18
      %v2055 = vpop.permute.xlu0 %2054
      %2056 = vrot.lane.b32.xlu0 %v1868, 18
      %v2057 = vpop.permute.xlu0 %2056
      %2058 = vrot.lane.b32.xlu0 %v1881, 18
      %v2059 = vpop.permute.xlu0 %2058
      %2060 = vrot.lane.b32.xlu0 %v1882, 18
      %v2061 = vpop.permute.xlu0 %2060
      %2062 = vrot.lane.b32.xlu0 %v1895, 18
      %v2063 = vpop.permute.xlu0 %2062
      %2064 = vrot.lane.b32.xlu0 %v1896, 18
      %v2065 = vpop.permute.xlu0 %2064
      %2066 = vrot.lane.b32.xlu0 %v1909, 18
      %v2067 = vpop.permute.xlu0 %2066
      %2068 = vrot.lane.b32.xlu0 %v1910, 18
      %v2069 = vpop.permute.xlu0 %2068
      %2070 = vrot.lane.b32.xlu0 %v1923, 18
      %v2071 = vpop.permute.xlu0 %2070
      %2072 = vrot.lane.b32.xlu0 %v1924, 18
      %v2073 = vpop.permute.xlu0 %2072
      %2074 = vrot.lane.b32.xlu0 %v1937, 18
      %v2075 = vpop.permute.xlu0 %2074
      %2076 = vrot.lane.b32.xlu0 %v1938, 18
      %v2077 = vpop.permute.xlu0 %2076
      %2078 = vrot.lane.b32.xlu0 %v1951, 18
      %v2079 = vpop.permute.xlu0 %2078
      %2080 = vrot.lane.b32.xlu0 %v1952, 18
      %v2081 = vpop.permute.xlu0 %2080
      %2082 = vrot.lane.b32.xlu0 %v1965, 18
      %v2083 = vpop.permute.xlu0 %2082
      %2084 = vrot.lane.b32.xlu0 %v1966, 18
      %v2085 = vpop.permute.xlu0 %2084
      %2086 = vrot.lane.b32.xlu0 %v1979, 18
      %v2087 = vpop.permute.xlu0 %2086
      %2088 = vrot.lane.b32.xlu0 %v1980, 18
      %v2089 = vpop.permute.xlu0 %2088
      %2090 = vrot.lane.b32.xlu0 %v1993, 18
      %v2091 = vpop.permute.xlu0 %2090
      %2092 = vrot.lane.b32.xlu0 %v1994, 18
      %v2093 = vpop.permute.xlu0 %2092
      %2094 = vrot.lane.b32.xlu0 %v2007, 18
      %v2095 = vpop.permute.xlu0 %2094
      %2096 = vrot.lane.b32.xlu0 %v2008, 18
      %v2097 = vpop.permute.xlu0 %2096
      %2098 = vrot.lane.b32.xlu0 %v2021, 18
      %v2099 = vpop.permute.xlu0 %2098
      %2100 = vrot.lane.b32.xlu0 %v2022, 18
      %v2101 = vpop.permute.xlu0 %2100
      %2102 = vrot.lane.b32.xlu0 %v2035, 18
      %v2103 = vpop.permute.xlu0 %2102
      %2104 = vrot.lane.b32.xlu0 %v2036, 18
      %v2105 = vpop.permute.xlu0 %2104
      %v2107 = vshrl.u32 %v1698, 16
      %v2109 = vshll.u32 %v1698, 16
      %v2111 = vrot.slane %v2109, 1
      %v2112 = vor.u32 %v2107, %v2111
      %v2114 = vshll.u32 %v1699, 16
      %v2116 = vrot.slane %v2114, 1
      %v2117 = vsel %vm779, %v2112, %v2116
      %v2118 = vshrl.u32 %v1699, 16
      %v2121 = vshrl.u32 %v1700, 16
      %v2123 = vshll.u32 %v1700, 16
      %v2125 = vrot.slane %v2123, 1
      %v2126 = vor.u32 %v2121, %v2125
      %v2128 = vshll.u32 %v1701, 16
      %v2130 = vrot.slane %v2128, 1
      %v2131 = vsel %vm779, %v2126, %v2130
      %v2132 = vshrl.u32 %v1701, 16
      %v2135 = vshrl.u32 %v1702, 16
      %v2137 = vshll.u32 %v1702, 16
      %v2139 = vrot.slane %v2137, 1
      %v2140 = vor.u32 %v2135, %v2139
      %v2142 = vshll.u32 %v1703, 16
      %v2144 = vrot.slane %v2142, 1
      %v2145 = vsel %vm779, %v2140, %v2144
      %v2146 = vshrl.u32 %v1703, 16
      %v2149 = vshrl.u32 %v1704, 16
      %v2151 = vshll.u32 %v1704, 16
      %v2153 = vrot.slane %v2151, 1
      %v2154 = vor.u32 %v2149, %v2153
      %v2156 = vshll.u32 %v1705, 16
      %v2158 = vrot.slane %v2156, 1
      %v2159 = vsel %vm779, %v2154, %v2158
      %v2160 = vshrl.u32 %v1705, 16
      %v2163 = vshrl.u32 %v1706, 16
      %v2165 = vshll.u32 %v1706, 16
      %v2167 = vrot.slane %v2165, 1
      %v2168 = vor.u32 %v2163, %v2167
      %v2170 = vshll.u32 %v1707, 16
      %v2172 = vrot.slane %v2170, 1
      %v2173 = vsel %vm779, %v2168, %v2172
      %v2174 = vshrl.u32 %v1707, 16
      %v2177 = vshrl.u32 %v1708, 16
      %v2179 = vshll.u32 %v1708, 16
      %v2181 = vrot.slane %v2179, 1
      %v2182 = vor.u32 %v2177, %v2181
      %v2184 = vshll.u32 %v1709, 16
      %v2186 = vrot.slane %v2184, 1
      %v2187 = vsel %vm779, %v2182, %v2186
      %v2188 = vshrl.u32 %v1709, 16
      %v2191 = vshrl.u32 %v1710, 16
      %v2193 = vshll.u32 %v1710, 16
      %v2195 = vrot.slane %v2193, 1
      %v2196 = vor.u32 %v2191, %v2195
      %v2198 = vshll.u32 %v1711, 16
      %v2200 = vrot.slane %v2198, 1
      %v2201 = vsel %vm779, %v2196, %v2200
      %v2202 = vshrl.u32 %v1711, 16
      %v2205 = vshrl.u32 %v1712, 16
      %v2207 = vshll.u32 %v1712, 16
      %v2209 = vrot.slane %v2207, 1
      %v2210 = vor.u32 %v2205, %v2209
      %v2212 = vshll.u32 %v1713, 16
      %v2214 = vrot.slane %v2212, 1
      %v2215 = vsel %vm779, %v2210, %v2214
      %v2216 = vshrl.u32 %v1713, 16
      %v2219 = vshrl.u32 %v1714, 16
      %v2221 = vshll.u32 %v1714, 16
      %v2223 = vrot.slane %v2221, 1
      %v2224 = vor.u32 %v2219, %v2223
      %v2226 = vshll.u32 %v1715, 16
      %v2228 = vrot.slane %v2226, 1
      %v2229 = vsel %vm779, %v2224, %v2228
      %v2230 = vshrl.u32 %v1715, 16
      %v2233 = vshrl.u32 %v1716, 16
      %v2235 = vshll.u32 %v1716, 16
      %v2237 = vrot.slane %v2235, 1
      %v2238 = vor.u32 %v2233, %v2237
      %v2240 = vshll.u32 %v1717, 16
      %v2242 = vrot.slane %v2240, 1
      %v2243 = vsel %vm779, %v2238, %v2242
      %v2244 = vshrl.u32 %v1717, 16
      %v2247 = vshrl.u32 %v1718, 16
      %v2249 = vshll.u32 %v1718, 16
      %v2251 = vrot.slane %v2249, 1
      %v2252 = vor.u32 %v2247, %v2251
      %v2254 = vshll.u32 %v1719, 16
      %v2256 = vrot.slane %v2254, 1
      %v2257 = vsel %vm779, %v2252, %v2256
      %v2258 = vshrl.u32 %v1719, 16
      %v2261 = vshrl.u32 %v1720, 16
      %v2263 = vshll.u32 %v1720, 16
      %v2265 = vrot.slane %v2263, 1
      %v2266 = vor.u32 %v2261, %v2265
      %v2268 = vshll.u32 %v1721, 16
      %v2270 = vrot.slane %v2268, 1
      %v2271 = vsel %vm779, %v2266, %v2270
      %v2272 = vshrl.u32 %v1721, 16
      %v2275 = vshrl.u32 %v1722, 16
      %v2277 = vshll.u32 %v1722, 16
      %v2279 = vrot.slane %v2277, 1
      %v2280 = vor.u32 %v2275, %v2279
      %v2282 = vshll.u32 %v1723, 16
      %v2284 = vrot.slane %v2282, 1
      %v2285 = vsel %vm779, %v2280, %v2284
      %v2286 = vshrl.u32 %v1723, 16
      %v2289 = vshrl.u32 %v1724, 16
      %v2291 = vshll.u32 %v1724, 16
      %v2293 = vrot.slane %v2291, 1
      %v2294 = vor.u32 %v2289, %v2293
      %v2296 = vshll.u32 %v1725, 16
      %v2298 = vrot.slane %v2296, 1
      %v2299 = vsel %vm779, %v2294, %v2298
      %v2300 = vshrl.u32 %v1725, 16
      %v2303 = vshrl.u32 %v1726, 16
      %v2305 = vshll.u32 %v1726, 16
      %v2307 = vrot.slane %v2305, 1
      %v2308 = vor.u32 %v2303, %v2307
      %v2310 = vshll.u32 %v1727, 16
      %v2312 = vrot.slane %v2310, 1
      %v2313 = vsel %vm779, %v2308, %v2312
      %v2314 = vshrl.u32 %v1727, 16
      %v2317 = vshrl.u32 %v1728, 16
      %v2319 = vshll.u32 %v1728, 16
      %v2321 = vrot.slane %v2319, 1
      %v2322 = vor.u32 %v2317, %v2321
      %v2324 = vshll.u32 %v1729, 16
      %v2326 = vrot.slane %v2324, 1
      %v2327 = vsel %vm779, %v2322, %v2326
      %v2328 = vshrl.u32 %v1729, 16
      %v2331 = vshrl.u32 %v1730, 16
      %v2333 = vshll.u32 %v1730, 16
      %v2335 = vrot.slane %v2333, 1
      %v2336 = vor.u32 %v2331, %v2335
      %v2338 = vshll.u32 %v1731, 16
      %v2340 = vrot.slane %v2338, 1
      %v2341 = vsel %vm779, %v2336, %v2340
      %v2342 = vshrl.u32 %v1731, 16
      %2344 = vrot.lane.b32.xlu0 %v2117, 21
      %v2345 = vpop.permute.xlu0 %2344
      %2346 = vrot.lane.b32.xlu0 %v2118, 21
      %v2347 = vpop.permute.xlu0 %2346
      %2348 = vrot.lane.b32.xlu0 %v2131, 21
      %v2349 = vpop.permute.xlu0 %2348
      %2350 = vrot.lane.b32.xlu0 %v2132, 21
      %v2351 = vpop.permute.xlu0 %2350
      %2352 = vrot.lane.b32.xlu0 %v2145, 21
      %v2353 = vpop.permute.xlu0 %2352
      %2354 = vrot.lane.b32.xlu0 %v2146, 21
      %v2355 = vpop.permute.xlu0 %2354
      %2356 = vrot.lane.b32.xlu0 %v2159, 21
      %v2357 = vpop.permute.xlu0 %2356
      %2358 = vrot.lane.b32.xlu0 %v2160, 21
      %v2359 = vpop.permute.xlu0 %2358
      %2360 = vrot.lane.b32.xlu0 %v2173, 21
      %v2361 = vpop.permute.xlu0 %2360
      %2362 = vrot.lane.b32.xlu0 %v2174, 21
      %v2363 = vpop.permute.xlu0 %2362
      %2364 = vrot.lane.b32.xlu0 %v2187, 21
      %v2365 = vpop.permute.xlu0 %2364
      %2366 = vrot.lane.b32.xlu0 %v2188, 21
      %v2367 = vpop.permute.xlu0 %2366
      %2368 = vrot.lane.b32.xlu0 %v2201, 21
      %v2369 = vpop.permute.xlu0 %2368
      %2370 = vrot.lane.b32.xlu0 %v2202, 21
      %v2371 = vpop.permute.xlu0 %2370
      %2372 = vrot.lane.b32.xlu0 %v2215, 21
      %v2373 = vpop.permute.xlu0 %2372
      %2374 = vrot.lane.b32.xlu0 %v2216, 21
      %v2375 = vpop.permute.xlu0 %2374
      %2376 = vrot.lane.b32.xlu0 %v2229, 21
      %v2377 = vpop.permute.xlu0 %2376
      %2378 = vrot.lane.b32.xlu0 %v2230, 21
      %v2379 = vpop.permute.xlu0 %2378
      %2380 = vrot.lane.b32.xlu0 %v2243, 21
      %v2381 = vpop.permute.xlu0 %2380
      %2382 = vrot.lane.b32.xlu0 %v2244, 21
      %v2383 = vpop.permute.xlu0 %2382
      %2384 = vrot.lane.b32.xlu0 %v2257, 21
      %v2385 = vpop.permute.xlu0 %2384
      %2386 = vrot.lane.b32.xlu0 %v2258, 21
      %v2387 = vpop.permute.xlu0 %2386
      %2388 = vrot.lane.b32.xlu0 %v2271, 21
      %v2389 = vpop.permute.xlu0 %2388
      %2390 = vrot.lane.b32.xlu0 %v2272, 21
      %v2391 = vpop.permute.xlu0 %2390
      %2392 = vrot.lane.b32.xlu0 %v2285, 21
      %v2393 = vpop.permute.xlu0 %2392
      %2394 = vrot.lane.b32.xlu0 %v2286, 21
      %v2395 = vpop.permute.xlu0 %2394
      %2396 = vrot.lane.b32.xlu0 %v2299, 21
      %v2397 = vpop.permute.xlu0 %2396
      %2398 = vrot.lane.b32.xlu0 %v2300, 21
      %v2399 = vpop.permute.xlu0 %2398
      %2400 = vrot.lane.b32.xlu0 %v2313, 21
      %v2401 = vpop.permute.xlu0 %2400
      %2402 = vrot.lane.b32.xlu0 %v2314, 21
      %v2403 = vpop.permute.xlu0 %2402
      %2404 = vrot.lane.b32.xlu0 %v2327, 21
      %v2405 = vpop.permute.xlu0 %2404
      %2406 = vrot.lane.b32.xlu0 %v2328, 21
      %v2407 = vpop.permute.xlu0 %2406
      %2408 = vrot.lane.b32.xlu0 %v2341, 21
      %v2409 = vpop.permute.xlu0 %2408
      %2410 = vrot.lane.b32.xlu0 %v2342, 21
      %v2411 = vpop.permute.xlu0 %2410
      %v2415 = vunpack.c.l.b16 %v274
      %v2416 = vunpack.c.l.b16 %v275
      %v2417 = vunpack.c.l.b16 %v276
      %v2418 = vpack.c.b16 %v2416, %v2415
      %v2419 = vpack.c.b16 %v2417, %v2417
      %2420 = vrot.lane.b32.xlu0 %v543, 24
      %v2421 = vpop.permute.xlu0 %2420
      %2422 = vrot.lane.b32.xlu0 %v544, 24
      %v2423 = vpop.permute.xlu0 %2422
      %2424 = vrot.lane.b32.xlu0 %v545, 24
      %v2425 = vpop.permute.xlu0 %2424
      %2426 = vrot.lane.b32.xlu0 %v546, 24
      %v2427 = vpop.permute.xlu0 %2426
      %2428 = vrot.lane.b32.xlu0 %v547, 24
      %v2429 = vpop.permute.xlu0 %2428
      %2430 = vrot.lane.b32.xlu0 %v548, 24
      %v2431 = vpop.permute.xlu0 %2430
      %2432 = vrot.lane.b32.xlu0 %v549, 24
      %v2433 = vpop.permute.xlu0 %2432
      %2434 = vrot.lane.b32.xlu0 %v550, 24
      %v2435 = vpop.permute.xlu0 %2434
      %2436 = vrot.lane.b32.xlu0 %v551, 24
      %v2437 = vpop.permute.xlu0 %2436
      %2438 = vrot.lane.b32.xlu0 %v552, 24
      %v2439 = vpop.permute.xlu0 %2438
      %2440 = vrot.lane.b32.xlu0 %v553, 24
      %v2441 = vpop.permute.xlu0 %2440
      %2442 = vrot.lane.b32.xlu0 %v554, 24
      %v2443 = vpop.permute.xlu0 %2442
      %2444 = vrot.lane.b32.xlu0 %v555, 24
      %v2445 = vpop.permute.xlu0 %2444
      %2446 = vrot.lane.b32.xlu0 %v556, 24
      %v2447 = vpop.permute.xlu0 %2446
      %2448 = vrot.lane.b32.xlu0 %v557, 24
      %v2449 = vpop.permute.xlu0 %2448
      %2450 = vrot.lane.b32.xlu0 %v558, 24
      %v2451 = vpop.permute.xlu0 %2450
      %2452 = vrot.lane.b32.xlu0 %v559, 24
      %v2453 = vpop.permute.xlu0 %2452
      %2454 = vrot.lane.b32.xlu0 %v560, 24
      %v2455 = vpop.permute.xlu0 %2454
      %2456 = vrot.lane.b32.xlu0 %v561, 24
      %v2457 = vpop.permute.xlu0 %2456
      %2458 = vrot.lane.b32.xlu0 %v562, 24
      %v2459 = vpop.permute.xlu0 %2458
      %2460 = vrot.lane.b32.xlu0 %v563, 24
      %v2461 = vpop.permute.xlu0 %2460
      %2462 = vrot.lane.b32.xlu0 %v564, 24
      %v2463 = vpop.permute.xlu0 %2462
      %2464 = vrot.lane.b32.xlu0 %v565, 24
      %v2465 = vpop.permute.xlu0 %2464
      %2466 = vrot.lane.b32.xlu0 %v566, 24
      %v2467 = vpop.permute.xlu0 %2466
      %2468 = vrot.lane.b32.xlu0 %v567, 24
      %v2469 = vpop.permute.xlu0 %2468
      %2470 = vrot.lane.b32.xlu0 %v568, 24
      %v2471 = vpop.permute.xlu0 %2470
      %2472 = vrot.lane.b32.xlu0 %v569, 24
      %v2473 = vpop.permute.xlu0 %2472
      %2474 = vrot.lane.b32.xlu0 %v570, 24
      %v2475 = vpop.permute.xlu0 %2474
      %2476 = vrot.lane.b32.xlu0 %v571, 24
      %v2477 = vpop.permute.xlu0 %2476
      %2478 = vrot.lane.b32.xlu0 %v572, 24
      %v2479 = vpop.permute.xlu0 %2478
      %2480 = vrot.lane.b32.xlu0 %v573, 24
      %v2481 = vpop.permute.xlu0 %2480
      %2482 = vrot.lane.b32.xlu0 %v574, 24
      %v2483 = vpop.permute.xlu0 %2482
      %2484 = vrot.lane.b32.xlu0 %v2418, 24
      %v2485 = vpop.permute.xlu0 %2484
      %2486 = vrot.lane.b32.xlu0 %v2419, 24
      %v2487 = vpop.permute.xlu0 %2486
      %v2491 = vunpack.c.l.b16 %v328
      %v2492 = vunpack.c.l.b16 %v329
      %v2493 = vunpack.c.l.b16 %v330
      %v2494 = vpack.c.b16 %v2492, %v2491
      %v2495 = vpack.c.b16 %v2493, %v2493
      %2496 = vrot.lane.b32.xlu0 %v679, 27
      %v2497 = vpop.permute.xlu0 %2496
      %2498 = vrot.lane.b32.xlu0 %v680, 27
      %v2499 = vpop.permute.xlu0 %2498
      %2500 = vrot.lane.b32.xlu0 %v681, 27
      %v2501 = vpop.permute.xlu0 %2500
      %2502 = vrot.lane.b32.xlu0 %v682, 27
      %v2503 = vpop.permute.xlu0 %2502
      %2504 = vrot.lane.b32.xlu0 %v683, 27
      %v2505 = vpop.permute.xlu0 %2504
      %2506 = vrot.lane.b32.xlu0 %v684, 27
      %v2507 = vpop.permute.xlu0 %2506
      %2508 = vrot.lane.b32.xlu0 %v685, 27
      %v2509 = vpop.permute.xlu0 %2508
      %2510 = vrot.lane.b32.xlu0 %v686, 27
      %v2511 = vpop.permute.xlu0 %2510
      %2512 = vrot.lane.b32.xlu0 %v687, 27
      %v2513 = vpop.permute.xlu0 %2512
      %2514 = vrot.lane.b32.xlu0 %v688, 27
      %v2515 = vpop.permute.xlu0 %2514
      %2516 = vrot.lane.b32.xlu0 %v689, 27
      %v2517 = vpop.permute.xlu0 %2516
      %2518 = vrot.lane.b32.xlu0 %v690, 27
      %v2519 = vpop.permute.xlu0 %2518
      %2520 = vrot.lane.b32.xlu0 %v691, 27
      %v2521 = vpop.permute.xlu0 %2520
      %2522 = vrot.lane.b32.xlu0 %v692, 27
      %v2523 = vpop.permute.xlu0 %2522
      %2524 = vrot.lane.b32.xlu0 %v693, 27
      %v2525 = vpop.permute.xlu0 %2524
      %2526 = vrot.lane.b32.xlu0 %v694, 27
      %v2527 = vpop.permute.xlu0 %2526
      %2528 = vrot.lane.b32.xlu0 %v695, 27
      %v2529 = vpop.permute.xlu0 %2528
      %2530 = vrot.lane.b32.xlu0 %v696, 27
      %v2531 = vpop.permute.xlu0 %2530
      %2532 = vrot.lane.b32.xlu0 %v697, 27
      %v2533 = vpop.permute.xlu0 %2532
      %2534 = vrot.lane.b32.xlu0 %v698, 27
      %v2535 = vpop.permute.xlu0 %2534
      %2536 = vrot.lane.b32.xlu0 %v699, 27
      %v2537 = vpop.permute.xlu0 %2536
      %2538 = vrot.lane.b32.xlu0 %v700, 27
      %v2539 = vpop.permute.xlu0 %2538
      %2540 = vrot.lane.b32.xlu0 %v701, 27
      %v2541 = vpop.permute.xlu0 %2540
      %2542 = vrot.lane.b32.xlu0 %v702, 27
      %v2543 = vpop.permute.xlu0 %2542
      %2544 = vrot.lane.b32.xlu0 %v703, 27
      %v2545 = vpop.permute.xlu0 %2544
      %2546 = vrot.lane.b32.xlu0 %v704, 27
      %v2547 = vpop.permute.xlu0 %2546
      %2548 = vrot.lane.b32.xlu0 %v705, 27
      %v2549 = vpop.permute.xlu0 %2548
      %2550 = vrot.lane.b32.xlu0 %v706, 27
      %v2551 = vpop.permute.xlu0 %2550
      %2552 = vrot.lane.b32.xlu0 %v707, 27
      %v2553 = vpop.permute.xlu0 %2552
      %2554 = vrot.lane.b32.xlu0 %v708, 27
      %v2555 = vpop.permute.xlu0 %2554
      %2556 = vrot.lane.b32.xlu0 %v709, 27
      %v2557 = vpop.permute.xlu0 %2556
      %2558 = vrot.lane.b32.xlu0 %v710, 27
      %v2559 = vpop.permute.xlu0 %2558
      %2560 = vrot.lane.b32.xlu0 %v2494, 27
      %v2561 = vpop.permute.xlu0 %2560
      %2562 = vrot.lane.b32.xlu0 %v2495, 27
      %v2563 = vpop.permute.xlu0 %2562
      %v2565 = vshrl.u32 %v2418, 16
      %v2567 = vshll.u32 %v2418, 16
      %v2569 = vrot.slane %v2567, 1
      %v2570 = vor.u32 %v2565, %v2569
      %v2572 = vshll.u32 %v2419, 16
      %v2574 = vrot.slane %v2572, 1
      %v2575 = vsel %vm779, %v2570, %v2574
      %v2576 = vshrl.u32 %v2419, 16
      %2578 = vrot.lane.b32.xlu0 %v805, 30
      %v2579 = vpop.permute.xlu0 %2578
      %2580 = vrot.lane.b32.xlu0 %v806, 30
      %v2581 = vpop.permute.xlu0 %2580
      %2582 = vrot.lane.b32.xlu0 %v819, 30
      %v2583 = vpop.permute.xlu0 %2582
      %2584 = vrot.lane.b32.xlu0 %v820, 30
      %v2585 = vpop.permute.xlu0 %2584
      %2586 = vrot.lane.b32.xlu0 %v833, 30
      %v2587 = vpop.permute.xlu0 %2586
      %2588 = vrot.lane.b32.xlu0 %v834, 30
      %v2589 = vpop.permute.xlu0 %2588
      %2590 = vrot.lane.b32.xlu0 %v847, 30
      %v2591 = vpop.permute.xlu0 %2590
      %2592 = vrot.lane.b32.xlu0 %v848, 30
      %v2593 = vpop.permute.xlu0 %2592
      %2594 = vrot.lane.b32.xlu0 %v861, 30
      %v2595 = vpop.permute.xlu0 %2594
      %2596 = vrot.lane.b32.xlu0 %v862, 30
      %v2597 = vpop.permute.xlu0 %2596
      %2598 = vrot.lane.b32.xlu0 %v875, 30
      %v2599 = vpop.permute.xlu0 %2598
      %2600 = vrot.lane.b32.xlu0 %v876, 30
      %v2601 = vpop.permute.xlu0 %2600
      %2602 = vrot.lane.b32.xlu0 %v889, 30
      %v2603 = vpop.permute.xlu0 %2602
      %2604 = vrot.lane.b32.xlu0 %v890, 30
      %v2605 = vpop.permute.xlu0 %2604
      %2606 = vrot.lane.b32.xlu0 %v903, 30
      %v2607 = vpop.permute.xlu0 %2606
      %2608 = vrot.lane.b32.xlu0 %v904, 30
      %v2609 = vpop.permute.xlu0 %2608
      %2610 = vrot.lane.b32.xlu0 %v917, 30
      %v2611 = vpop.permute.xlu0 %2610
      %2612 = vrot.lane.b32.xlu0 %v918, 30
      %v2613 = vpop.permute.xlu0 %2612
      %2614 = vrot.lane.b32.xlu0 %v931, 30
      %v2615 = vpop.permute.xlu0 %2614
      %2616 = vrot.lane.b32.xlu0 %v932, 30
      %v2617 = vpop.permute.xlu0 %2616
      %2618 = vrot.lane.b32.xlu0 %v945, 30
      %v2619 = vpop.permute.xlu0 %2618
      %2620 = vrot.lane.b32.xlu0 %v946, 30
      %v2621 = vpop.permute.xlu0 %2620
      %2622 = vrot.lane.b32.xlu0 %v959, 30
      %v2623 = vpop.permute.xlu0 %2622
      %2624 = vrot.lane.b32.xlu0 %v960, 30
      %v2625 = vpop.permute.xlu0 %2624
      %2626 = vrot.lane.b32.xlu0 %v973, 30
      %v2627 = vpop.permute.xlu0 %2626
      %2628 = vrot.lane.b32.xlu0 %v974, 30
      %v2629 = vpop.permute.xlu0 %2628
      %2630 = vrot.lane.b32.xlu0 %v987, 30
      %v2631 = vpop.permute.xlu0 %2630
      %2632 = vrot.lane.b32.xlu0 %v988, 30
      %v2633 = vpop.permute.xlu0 %2632
      %2634 = vrot.lane.b32.xlu0 %v1001, 30
      %v2635 = vpop.permute.xlu0 %2634
      %2636 = vrot.lane.b32.xlu0 %v1002, 30
      %v2637 = vpop.permute.xlu0 %2636
      %2638 = vrot.lane.b32.xlu0 %v1015, 30
      %v2639 = vpop.permute.xlu0 %2638
      %2640 = vrot.lane.b32.xlu0 %v1016, 30
      %v2641 = vpop.permute.xlu0 %2640
      %2642 = vrot.lane.b32.xlu0 %v2575, 30
      %v2643 = vpop.permute.xlu0 %2642
      %2644 = vrot.lane.b32.xlu0 %v2576, 30
      %v2645 = vpop.permute.xlu0 %2644
      %v2647 = vshrl.u32 %v2494, 16
      %v2649 = vshll.u32 %v2494, 16
      %v2651 = vrot.slane %v2649, 1
      %v2652 = vor.u32 %v2647, %v2651
      %v2654 = vshll.u32 %v2495, 16
      %v2656 = vrot.slane %v2654, 1
      %v2657 = vsel %vm779, %v2652, %v2656
      %v2658 = vshrl.u32 %v2495, 16
      %2660 = vrot.lane.b32.xlu0 %v1111, 33
      %v2661 = vpop.permute.xlu0 %2660
      %2662 = vrot.lane.b32.xlu0 %v1112, 33
      %v2663 = vpop.permute.xlu0 %2662
      %2664 = vrot.lane.b32.xlu0 %v1125, 33
      %v2665 = vpop.permute.xlu0 %2664
      %2666 = vrot.lane.b32.xlu0 %v1126, 33
      %v2667 = vpop.permute.xlu0 %2666
      %2668 = vrot.lane.b32.xlu0 %v1139, 33
      %v2669 = vpop.permute.xlu0 %2668
      %2670 = vrot.lane.b32.xlu0 %v1140, 33
      %v2671 = vpop.permute.xlu0 %2670
      %2672 = vrot.lane.b32.xlu0 %v1153, 33
      %v2673 = vpop.permute.xlu0 %2672
      %2674 = vrot.lane.b32.xlu0 %v1154, 33
      %v2675 = vpop.permute.xlu0 %2674
      %2676 = vrot.lane.b32.xlu0 %v1167, 33
      %v2677 = vpop.permute.xlu0 %2676
      %2678 = vrot.lane.b32.xlu0 %v1168, 33
      %v2679 = vpop.permute.xlu0 %2678
      %2680 = vrot.lane.b32.xlu0 %v1181, 33
      %v2681 = vpop.permute.xlu0 %2680
      %2682 = vrot.lane.b32.xlu0 %v1182, 33
      %v2683 = vpop.permute.xlu0 %2682
      %2684 = vrot.lane.b32.xlu0 %v1195, 33
      %v2685 = vpop.permute.xlu0 %2684
      %2686 = vrot.lane.b32.xlu0 %v1196, 33
      %v2687 = vpop.permute.xlu0 %2686
      %2688 = vrot.lane.b32.xlu0 %v1209, 33
      %v2689 = vpop.permute.xlu0 %2688
      %2690 = vrot.lane.b32.xlu0 %v1210, 33
      %v2691 = vpop.permute.xlu0 %2690
      %2692 = vrot.lane.b32.xlu0 %v1223, 33
      %v2693 = vpop.permute.xlu0 %2692
      %2694 = vrot.lane.b32.xlu0 %v1224, 33
      %v2695 = vpop.permute.xlu0 %2694
      %2696 = vrot.lane.b32.xlu0 %v1237, 33
      %v2697 = vpop.permute.xlu0 %2696
      %2698 = vrot.lane.b32.xlu0 %v1238, 33
      %v2699 = vpop.permute.xlu0 %2698
      %2700 = vrot.lane.b32.xlu0 %v1251, 33
      %v2701 = vpop.permute.xlu0 %2700
      %2702 = vrot.lane.b32.xlu0 %v1252, 33
      %v2703 = vpop.permute.xlu0 %2702
      %2704 = vrot.lane.b32.xlu0 %v1265, 33
      %v2705 = vpop.permute.xlu0 %2704
      %2706 = vrot.lane.b32.xlu0 %v1266, 33
      %v2707 = vpop.permute.xlu0 %2706
      %2708 = vrot.lane.b32.xlu0 %v1279, 33
      %v2709 = vpop.permute.xlu0 %2708
      %2710 = vrot.lane.b32.xlu0 %v1280, 33
      %v2711 = vpop.permute.xlu0 %2710
      %2712 = vrot.lane.b32.xlu0 %v1293, 33
      %v2713 = vpop.permute.xlu0 %2712
      %2714 = vrot.lane.b32.xlu0 %v1294, 33
      %v2715 = vpop.permute.xlu0 %2714
      %2716 = vrot.lane.b32.xlu0 %v1307, 33
      %v2717 = vpop.permute.xlu0 %2716
      %2718 = vrot.lane.b32.xlu0 %v1308, 33
      %v2719 = vpop.permute.xlu0 %2718
      %2720 = vrot.lane.b32.xlu0 %v1321, 33
      %v2721 = vpop.permute.xlu0 %2720
      %2722 = vrot.lane.b32.xlu0 %v1322, 33
      %v2723 = vpop.permute.xlu0 %2722
      %2724 = vrot.lane.b32.xlu0 %v2657, 33
      %v2725 = vpop.permute.xlu0 %2724
      %2726 = vrot.lane.b32.xlu0 %v2658, 33
      %v2727 = vpop.permute.xlu0 %2726
      %v2731 = vunpack.c.l.b16 %v382
      %v2732 = vunpack.c.l.b16 %v383
      %v2733 = vunpack.c.l.b16 %v384
      %v2734 = vpack.c.b16 %v2732, %v2731
      %v2735 = vpack.c.b16 %v2733, %v2733
      %2736 = vrot.lane.b32.xlu0 %v1496, 36
      %v2737 = vpop.permute.xlu0 %2736
      %2738 = vrot.lane.b32.xlu0 %v1497, 36
      %v2739 = vpop.permute.xlu0 %2738
      %2740 = vrot.lane.b32.xlu0 %v1498, 36
      %v2741 = vpop.permute.xlu0 %2740
      %2742 = vrot.lane.b32.xlu0 %v1499, 36
      %v2743 = vpop.permute.xlu0 %2742
      %2744 = vrot.lane.b32.xlu0 %v1500, 36
      %v2745 = vpop.permute.xlu0 %2744
      %2746 = vrot.lane.b32.xlu0 %v1501, 36
      %v2747 = vpop.permute.xlu0 %2746
      %2748 = vrot.lane.b32.xlu0 %v1502, 36
      %v2749 = vpop.permute.xlu0 %2748
      %2750 = vrot.lane.b32.xlu0 %v1503, 36
      %v2751 = vpop.permute.xlu0 %2750
      %2752 = vrot.lane.b32.xlu0 %v1504, 36
      %v2753 = vpop.permute.xlu0 %2752
      %2754 = vrot.lane.b32.xlu0 %v1505, 36
      %v2755 = vpop.permute.xlu0 %2754
      %2756 = vrot.lane.b32.xlu0 %v1506, 36
      %v2757 = vpop.permute.xlu0 %2756
      %2758 = vrot.lane.b32.xlu0 %v1507, 36
      %v2759 = vpop.permute.xlu0 %2758
      %2760 = vrot.lane.b32.xlu0 %v1508, 36
      %v2761 = vpop.permute.xlu0 %2760
      %2762 = vrot.lane.b32.xlu0 %v1509, 36
      %v2763 = vpop.permute.xlu0 %2762
      %2764 = vrot.lane.b32.xlu0 %v1510, 36
      %v2765 = vpop.permute.xlu0 %2764
      %2766 = vrot.lane.b32.xlu0 %v1511, 36
      %v2767 = vpop.permute.xlu0 %2766
      %2768 = vrot.lane.b32.xlu0 %v1512, 36
      %v2769 = vpop.permute.xlu0 %2768
      %2770 = vrot.lane.b32.xlu0 %v1513, 36
      %v2771 = vpop.permute.xlu0 %2770
      %2772 = vrot.lane.b32.xlu0 %v1514, 36
      %v2773 = vpop.permute.xlu0 %2772
      %2774 = vrot.lane.b32.xlu0 %v1515, 36
      %v2775 = vpop.permute.xlu0 %2774
      %2776 = vrot.lane.b32.xlu0 %v1516, 36
      %v2777 = vpop.permute.xlu0 %2776
      %2778 = vrot.lane.b32.xlu0 %v1517, 36
      %v2779 = vpop.permute.xlu0 %2778
      %2780 = vrot.lane.b32.xlu0 %v1518, 36
      %v2781 = vpop.permute.xlu0 %2780
      %2782 = vrot.lane.b32.xlu0 %v1519, 36
      %v2783 = vpop.permute.xlu0 %2782
      %2784 = vrot.lane.b32.xlu0 %v1520, 36
      %v2785 = vpop.permute.xlu0 %2784
      %2786 = vrot.lane.b32.xlu0 %v1521, 36
      %v2787 = vpop.permute.xlu0 %2786
      %2788 = vrot.lane.b32.xlu0 %v1522, 36
      %v2789 = vpop.permute.xlu0 %2788
      %2790 = vrot.lane.b32.xlu0 %v1523, 36
      %v2791 = vpop.permute.xlu0 %2790
      %2792 = vrot.lane.b32.xlu0 %v1524, 36
      %v2793 = vpop.permute.xlu0 %2792
      %2794 = vrot.lane.b32.xlu0 %v1525, 36
      %v2795 = vpop.permute.xlu0 %2794
      %2796 = vrot.lane.b32.xlu0 %v1526, 36
      %v2797 = vpop.permute.xlu0 %2796
      %2798 = vrot.lane.b32.xlu0 %v1527, 36
      %v2799 = vpop.permute.xlu0 %2798
      %2800 = vrot.lane.b32.xlu0 %v2734, 36
      %v2801 = vpop.permute.xlu0 %2800
      %2802 = vrot.lane.b32.xlu0 %v2735, 36
      %v2803 = vpop.permute.xlu0 %2802
      %v2807 = vunpack.c.l.b16 %v436
      %v2808 = vunpack.c.l.b16 %v437
      %v2809 = vunpack.c.l.b16 %v438
      %v2810 = vpack.c.b16 %v2808, %v2807
      %v2811 = vpack.c.b16 %v2809, %v2809
      %2812 = vrot.lane.b32.xlu0 %v1700, 39
      %v2813 = vpop.permute.xlu0 %2812
      %2814 = vrot.lane.b32.xlu0 %v1701, 39
      %v2815 = vpop.permute.xlu0 %2814
      %2816 = vrot.lane.b32.xlu0 %v1702, 39
      %v2817 = vpop.permute.xlu0 %2816
      %2818 = vrot.lane.b32.xlu0 %v1703, 39
      %v2819 = vpop.permute.xlu0 %2818
      %2820 = vrot.lane.b32.xlu0 %v1704, 39
      %v2821 = vpop.permute.xlu0 %2820
      %2822 = vrot.lane.b32.xlu0 %v1705, 39
      %v2823 = vpop.permute.xlu0 %2822
      %2824 = vrot.lane.b32.xlu0 %v1706, 39
      %v2825 = vpop.permute.xlu0 %2824
      %2826 = vrot.lane.b32.xlu0 %v1707, 39
      %v2827 = vpop.permute.xlu0 %2826
      %2828 = vrot.lane.b32.xlu0 %v1708, 39
      %v2829 = vpop.permute.xlu0 %2828
      %2830 = vrot.lane.b32.xlu0 %v1709, 39
      %v2831 = vpop.permute.xlu0 %2830
      %2832 = vrot.lane.b32.xlu0 %v1710, 39
      %v2833 = vpop.permute.xlu0 %2832
      %2834 = vrot.lane.b32.xlu0 %v1711, 39
      %v2835 = vpop.permute.xlu0 %2834
      %2836 = vrot.lane.b32.xlu0 %v1712, 39
      %v2837 = vpop.permute.xlu0 %2836
      %2838 = vrot.lane.b32.xlu0 %v1713, 39
      %v2839 = vpop.permute.xlu0 %2838
      %2840 = vrot.lane.b32.xlu0 %v1714, 39
      %v2841 = vpop.permute.xlu0 %2840
      %2842 = vrot.lane.b32.xlu0 %v1715, 39
      %v2843 = vpop.permute.xlu0 %2842
      %2844 = vrot.lane.b32.xlu0 %v1716, 39
      %v2845 = vpop.permute.xlu0 %2844
      %2846 = vrot.lane.b32.xlu0 %v1717, 39
      %v2847 = vpop.permute.xlu0 %2846
      %2848 = vrot.lane.b32.xlu0 %v1718, 39
      %v2849 = vpop.permute.xlu0 %2848
      %2850 = vrot.lane.b32.xlu0 %v1719, 39
      %v2851 = vpop.permute.xlu0 %2850
      %2852 = vrot.lane.b32.xlu0 %v1720, 39
      %v2853 = vpop.permute.xlu0 %2852
      %2854 = vrot.lane.b32.xlu0 %v1721, 39
      %v2855 = vpop.permute.xlu0 %2854
      %2856 = vrot.lane.b32.xlu0 %v1722, 39
      %v2857 = vpop.permute.xlu0 %2856
      %2858 = vrot.lane.b32.xlu0 %v1723, 39
      %v2859 = vpop.permute.xlu0 %2858
      %2860 = vrot.lane.b32.xlu0 %v1724, 39
      %v2861 = vpop.permute.xlu0 %2860
      %2862 = vrot.lane.b32.xlu0 %v1725, 39
      %v2863 = vpop.permute.xlu0 %2862
      %2864 = vrot.lane.b32.xlu0 %v1726, 39
      %v2865 = vpop.permute.xlu0 %2864
      %2866 = vrot.lane.b32.xlu0 %v1727, 39
      %v2867 = vpop.permute.xlu0 %2866
      %2868 = vrot.lane.b32.xlu0 %v1728, 39
      %v2869 = vpop.permute.xlu0 %2868
      %2870 = vrot.lane.b32.xlu0 %v1729, 39
      %v2871 = vpop.permute.xlu0 %2870
      %2872 = vrot.lane.b32.xlu0 %v1730, 39
      %v2873 = vpop.permute.xlu0 %2872
      %2874 = vrot.lane.b32.xlu0 %v1731, 39
      %v2875 = vpop.permute.xlu0 %2874
      %2876 = vrot.lane.b32.xlu0 %v2810, 39
      %v2877 = vpop.permute.xlu0 %2876
      %2878 = vrot.lane.b32.xlu0 %v2811, 39
      %v2879 = vpop.permute.xlu0 %2878
      %v2881 = vshrl.u32 %v2734, 16
      %v2883 = vshll.u32 %v2734, 16
      %v2885 = vrot.slane %v2883, 1
      %v2886 = vor.u32 %v2881, %v2885
      %v2888 = vshll.u32 %v2735, 16
      %v2890 = vrot.slane %v2888, 1
      %v2891 = vsel %vm779, %v2886, %v2890
      %v2892 = vshrl.u32 %v2735, 16
      %2894 = vrot.lane.b32.xlu0 %v1825, 42
      %v2895 = vpop.permute.xlu0 %2894
      %2896 = vrot.lane.b32.xlu0 %v1826, 42
      %v2897 = vpop.permute.xlu0 %2896
      %2898 = vrot.lane.b32.xlu0 %v1839, 42
      %v2899 = vpop.permute.xlu0 %2898
      %2900 = vrot.lane.b32.xlu0 %v1840, 42
      %v2901 = vpop.permute.xlu0 %2900
      %2902 = vrot.lane.b32.xlu0 %v1853, 42
      %v2903 = vpop.permute.xlu0 %2902
      %2904 = vrot.lane.b32.xlu0 %v1854, 42
      %v2905 = vpop.permute.xlu0 %2904
      %2906 = vrot.lane.b32.xlu0 %v1867, 42
      %v2907 = vpop.permute.xlu0 %2906
      %2908 = vrot.lane.b32.xlu0 %v1868, 42
      %v2909 = vpop.permute.xlu0 %2908
      %2910 = vrot.lane.b32.xlu0 %v1881, 42
      %v2911 = vpop.permute.xlu0 %2910
      %2912 = vrot.lane.b32.xlu0 %v1882, 42
      %v2913 = vpop.permute.xlu0 %2912
      %2914 = vrot.lane.b32.xlu0 %v1895, 42
      %v2915 = vpop.permute.xlu0 %2914
      %2916 = vrot.lane.b32.xlu0 %v1896, 42
      %v2917 = vpop.permute.xlu0 %2916
      %2918 = vrot.lane.b32.xlu0 %v1909, 42
      %v2919 = vpop.permute.xlu0 %2918
      %2920 = vrot.lane.b32.xlu0 %v1910, 42
      %v2921 = vpop.permute.xlu0 %2920
      %2922 = vrot.lane.b32.xlu0 %v1923, 42
      %v2923 = vpop.permute.xlu0 %2922
      %2924 = vrot.lane.b32.xlu0 %v1924, 42
      %v2925 = vpop.permute.xlu0 %2924
      %2926 = vrot.lane.b32.xlu0 %v1937, 42
      %v2927 = vpop.permute.xlu0 %2926
      %2928 = vrot.lane.b32.xlu0 %v1938, 42
      %v2929 = vpop.permute.xlu0 %2928
      %2930 = vrot.lane.b32.xlu0 %v1951, 42
      %v2931 = vpop.permute.xlu0 %2930
      %2932 = vrot.lane.b32.xlu0 %v1952, 42
      %v2933 = vpop.permute.xlu0 %2932
      %2934 = vrot.lane.b32.xlu0 %v1965, 42
      %v2935 = vpop.permute.xlu0 %2934
      %2936 = vrot.lane.b32.xlu0 %v1966, 42
      %v2937 = vpop.permute.xlu0 %2936
      %2938 = vrot.lane.b32.xlu0 %v1979, 42
      %v2939 = vpop.permute.xlu0 %2938
      %2940 = vrot.lane.b32.xlu0 %v1980, 42
      %v2941 = vpop.permute.xlu0 %2940
      %2942 = vrot.lane.b32.xlu0 %v1993, 42
      %v2943 = vpop.permute.xlu0 %2942
      %2944 = vrot.lane.b32.xlu0 %v1994, 42
      %v2945 = vpop.permute.xlu0 %2944
      %2946 = vrot.lane.b32.xlu0 %v2007, 42
      %v2947 = vpop.permute.xlu0 %2946
      %2948 = vrot.lane.b32.xlu0 %v2008, 42
      %v2949 = vpop.permute.xlu0 %2948
      %2950 = vrot.lane.b32.xlu0 %v2021, 42
      %v2951 = vpop.permute.xlu0 %2950
      %2952 = vrot.lane.b32.xlu0 %v2022, 42
      %v2953 = vpop.permute.xlu0 %2952
      %2954 = vrot.lane.b32.xlu0 %v2035, 42
      %v2955 = vpop.permute.xlu0 %2954
      %2956 = vrot.lane.b32.xlu0 %v2036, 42
      %v2957 = vpop.permute.xlu0 %2956
      %2958 = vrot.lane.b32.xlu0 %v2891, 42
      %v2959 = vpop.permute.xlu0 %2958
      %2960 = vrot.lane.b32.xlu0 %v2892, 42
      %v2961 = vpop.permute.xlu0 %2960
      %v2963 = vshrl.u32 %v2810, 16
      %v2965 = vshll.u32 %v2810, 16
      %v2967 = vrot.slane %v2965, 1
      %v2968 = vor.u32 %v2963, %v2967
      %v2970 = vshll.u32 %v2811, 16
      %v2972 = vrot.slane %v2970, 1
      %v2973 = vsel %vm779, %v2968, %v2972
      %v2974 = vshrl.u32 %v2811, 16
      %2976 = vrot.lane.b32.xlu0 %v2131, 45
      %v2977 = vpop.permute.xlu0 %2976
      %2978 = vrot.lane.b32.xlu0 %v2132, 45
      %v2979 = vpop.permute.xlu0 %2978
      %2980 = vrot.lane.b32.xlu0 %v2145, 45
      %v2981 = vpop.permute.xlu0 %2980
      %2982 = vrot.lane.b32.xlu0 %v2146, 45
      %v2983 = vpop.permute.xlu0 %2982
      %2984 = vrot.lane.b32.xlu0 %v2159, 45
      %v2985 = vpop.permute.xlu0 %2984
      %2986 = vrot.lane.b32.xlu0 %v2160, 45
      %v2987 = vpop.permute.xlu0 %2986
      %2988 = vrot.lane.b32.xlu0 %v2173, 45
      %v2989 = vpop.permute.xlu0 %2988
      %2990 = vrot.lane.b32.xlu0 %v2174, 45
      %v2991 = vpop.permute.xlu0 %2990
      %2992 = vrot.lane.b32.xlu0 %v2187, 45
      %v2993 = vpop.permute.xlu0 %2992
      %2994 = vrot.lane.b32.xlu0 %v2188, 45
      %v2995 = vpop.permute.xlu0 %2994
      %2996 = vrot.lane.b32.xlu0 %v2201, 45
      %v2997 = vpop.permute.xlu0 %2996
      %2998 = vrot.lane.b32.xlu0 %v2202, 45
      %v2999 = vpop.permute.xlu0 %2998
      %3000 = vrot.lane.b32.xlu0 %v2215, 45
      %v3001 = vpop.permute.xlu0 %3000
      %3002 = vrot.lane.b32.xlu0 %v2216, 45
      %v3003 = vpop.permute.xlu0 %3002
      %3004 = vrot.lane.b32.xlu0 %v2229, 45
      %v3005 = vpop.permute.xlu0 %3004
      %3006 = vrot.lane.b32.xlu0 %v2230, 45
      %v3007 = vpop.permute.xlu0 %3006
      %3008 = vrot.lane.b32.xlu0 %v2243, 45
      %v3009 = vpop.permute.xlu0 %3008
      %3010 = vrot.lane.b32.xlu0 %v2244, 45
      %v3011 = vpop.permute.xlu0 %3010
      %3012 = vrot.lane.b32.xlu0 %v2257, 45
      %v3013 = vpop.permute.xlu0 %3012
      %3014 = vrot.lane.b32.xlu0 %v2258, 45
      %v3015 = vpop.permute.xlu0 %3014
      %3016 = vrot.lane.b32.xlu0 %v2271, 45
      %v3017 = vpop.permute.xlu0 %3016
      %3018 = vrot.lane.b32.xlu0 %v2272, 45
      %v3019 = vpop.permute.xlu0 %3018
      %3020 = vrot.lane.b32.xlu0 %v2285, 45
      %v3021 = vpop.permute.xlu0 %3020
      %3022 = vrot.lane.b32.xlu0 %v2286, 45
      %v3023 = vpop.permute.xlu0 %3022
      %3024 = vrot.lane.b32.xlu0 %v2299, 45
      %v3025 = vpop.permute.xlu0 %3024
      %3026 = vrot.lane.b32.xlu0 %v2300, 45
      %v3027 = vpop.permute.xlu0 %3026
      %3028 = vrot.lane.b32.xlu0 %v2313, 45
      %v3029 = vpop.permute.xlu0 %3028
      %3030 = vrot.lane.b32.xlu0 %v2314, 45
      %v3031 = vpop.permute.xlu0 %3030
      %3032 = vrot.lane.b32.xlu0 %v2327, 45
      %v3033 = vpop.permute.xlu0 %3032
      %3034 = vrot.lane.b32.xlu0 %v2328, 45
      %v3035 = vpop.permute.xlu0 %3034
      %3036 = vrot.lane.b32.xlu0 %v2341, 45
      %v3037 = vpop.permute.xlu0 %3036
      %3038 = vrot.lane.b32.xlu0 %v2342, 45
      %v3039 = vpop.permute.xlu0 %3038
      %3040 = vrot.lane.b32.xlu0 %v2973, 45
      %v3041 = vpop.permute.xlu0 %3040
      %3042 = vrot.lane.b32.xlu0 %v2974, 45
      %v3043 = vpop.permute.xlu0 %3042
      %vm3044 = vcmask 23552
      %v3046 = vsel %vm3044, %v541, %v712
      %v3048 = vsel %vm3044, %v542, %v714
      %v3050 = vsel %vm3044, %v543, %v716
      %v3052 = vsel %vm3044, %v544, %v718
      %v3054 = vsel %vm3044, %v545, %v720
      %v3056 = vsel %vm3044, %v546, %v722
      %v3058 = vsel %vm3044, %v547, %v724
      %v3060 = vsel %vm3044, %v548, %v726
      %v3062 = vsel %vm3044, %v549, %v728
      %v3064 = vsel %vm3044, %v550, %v730
      %v3066 = vsel %vm3044, %v551, %v732
      %v3068 = vsel %vm3044, %v552, %v734
      %v3070 = vsel %vm3044, %v553, %v736
      %v3072 = vsel %vm3044, %v554, %v738
      %v3074 = vsel %vm3044, %v555, %v740
      %v3076 = vsel %vm3044, %v556, %v742
      %v3078 = vsel %vm3044, %v557, %v744
      %v3080 = vsel %vm3044, %v558, %v746
      %v3082 = vsel %vm3044, %v559, %v748
      %v3084 = vsel %vm3044, %v560, %v750
      %v3086 = vsel %vm3044, %v561, %v752
      %v3088 = vsel %vm3044, %v562, %v754
      %v3090 = vsel %vm3044, %v563, %v756
      %v3092 = vsel %vm3044, %v564, %v758
      %v3094 = vsel %vm3044, %v565, %v760
      %v3096 = vsel %vm3044, %v566, %v762
      %v3098 = vsel %vm3044, %v567, %v764
      %v3100 = vsel %vm3044, %v568, %v766
      %v3102 = vsel %vm3044, %v569, %v768
      %v3104 = vsel %vm3044, %v570, %v770
      %v3106 = vsel %vm3044, %v571, %v772
      %v3108 = vsel %vm3044, %v572, %v774
      %v3110 = vsel %vm3044, %v573, %v776
      %v3112 = vsel %vm3044, %v574, %v778
      %vm3113 = vcmask 48128
      %v3115 = vsel %vm3113, %v3046, %v1019
      %v3117 = vsel %vm3113, %v3048, %v1021
      %v3119 = vsel %vm3113, %v3050, %v1023
      %v3121 = vsel %vm3113, %v3052, %v1025
      %v3123 = vsel %vm3113, %v3054, %v1027
      %v3125 = vsel %vm3113, %v3056, %v1029
      %v3127 = vsel %vm3113, %v3058, %v1031
      %v3129 = vsel %vm3113, %v3060, %v1033
      %v3131 = vsel %vm3113, %v3062, %v1035
      %v3133 = vsel %vm3113, %v3064, %v1037
      %v3135 = vsel %vm3113, %v3066, %v1039
      %v3137 = vsel %vm3113, %v3068, %v1041
      %v3139 = vsel %vm3113, %v3070, %v1043
      %v3141 = vsel %vm3113, %v3072, %v1045
      %v3143 = vsel %vm3113, %v3074, %v1047
      %v3145 = vsel %vm3113, %v3076, %v1049
      %v3147 = vsel %vm3113, %v3078, %v1051
      %v3149 = vsel %vm3113, %v3080, %v1053
      %v3151 = vsel %vm3113, %v3082, %v1055
      %v3153 = vsel %vm3113, %v3084, %v1057
      %v3155 = vsel %vm3113, %v3086, %v1059
      %v3157 = vsel %vm3113, %v3088, %v1061
      %v3159 = vsel %vm3113, %v3090, %v1063
      %v3161 = vsel %vm3113, %v3092, %v1065
      %v3163 = vsel %vm3113, %v3094, %v1067
      %v3165 = vsel %vm3113, %v3096, %v1069
      %v3167 = vsel %vm3113, %v3098, %v1071
      %v3169 = vsel %vm3113, %v3100, %v1073
      %v3171 = vsel %vm3113, %v3102, %v1075
      %v3173 = vsel %vm3113, %v3104, %v1077
      %v3175 = vsel %vm3113, %v3106, %v1079
      %v3177 = vsel %vm3113, %v3108, %v1081
      %v3179 = vsel %vm3113, %v3110, %v1083
      %v3181 = vsel %vm3113, %v3112, %v1085
      %vm3182 = vcmask 72704
      %v3184 = vsel %vm3182, %v3115, %v1325
      %v3186 = vsel %vm3182, %v3117, %v1327
      %v3188 = vsel %vm3182, %v3119, %v1329
      %v3190 = vsel %vm3182, %v3121, %v1331
      %v3192 = vsel %vm3182, %v3123, %v1333
      %v3194 = vsel %vm3182, %v3125, %v1335
      %v3196 = vsel %vm3182, %v3127, %v1337
      %v3198 = vsel %vm3182, %v3129, %v1339
      %v3200 = vsel %vm3182, %v3131, %v1341
      %v3202 = vsel %vm3182, %v3133, %v1343
      %v3204 = vsel %vm3182, %v3135, %v1345
      %v3206 = vsel %vm3182, %v3137, %v1347
      %v3208 = vsel %vm3182, %v3139, %v1349
      %v3210 = vsel %vm3182, %v3141, %v1351
      %v3212 = vsel %vm3182, %v3143, %v1353
      %v3214 = vsel %vm3182, %v3145, %v1355
      %v3216 = vsel %vm3182, %v3147, %v1357
      %v3218 = vsel %vm3182, %v3149, %v1359
      %v3220 = vsel %vm3182, %v3151, %v1361
      %v3222 = vsel %vm3182, %v3153, %v1363
      %v3224 = vsel %vm3182, %v3155, %v1365
      %v3226 = vsel %vm3182, %v3157, %v1367
      %v3228 = vsel %vm3182, %v3159, %v1369
      %v3230 = vsel %vm3182, %v3161, %v1371
      %v3232 = vsel %vm3182, %v3163, %v1373
      %v3234 = vsel %vm3182, %v3165, %v1375
      %v3236 = vsel %vm3182, %v3167, %v1377
      %v3238 = vsel %vm3182, %v3169, %v1379
      %v3240 = vsel %vm3182, %v3171, %v1381
      %v3242 = vsel %vm3182, %v3173, %v1383
      %v3244 = vsel %vm3182, %v3175, %v1385
      %v3246 = vsel %vm3182, %v3177, %v1387
      %v3248 = vsel %vm3182, %v3179, %v1389
      %v3250 = vsel %vm3182, %v3181, %v1391
      %vm3251 = vcmask 97280
      %v3253 = vsel %vm3251, %v3184, %v1529
      %v3255 = vsel %vm3251, %v3186, %v1531
      %v3257 = vsel %vm3251, %v3188, %v1533
      %v3259 = vsel %vm3251, %v3190, %v1535
      %v3261 = vsel %vm3251, %v3192, %v1537
      %v3263 = vsel %vm3251, %v3194, %v1539
      %v3265 = vsel %vm3251, %v3196, %v1541
      %v3267 = vsel %vm3251, %v3198, %v1543
      %v3269 = vsel %vm3251, %v3200, %v1545
      %v3271 = vsel %vm3251, %v3202, %v1547
      %v3273 = vsel %vm3251, %v3204, %v1549
      %v3275 = vsel %vm3251, %v3206, %v1551
      %v3277 = vsel %vm3251, %v3208, %v1553
      %v3279 = vsel %vm3251, %v3210, %v1555
      %v3281 = vsel %vm3251, %v3212, %v1557
      %v3283 = vsel %vm3251, %v3214, %v1559
      %v3285 = vsel %vm3251, %v3216, %v1561
      %v3287 = vsel %vm3251, %v3218, %v1563
      %v3289 = vsel %vm3251, %v3220, %v1565
      %v3291 = vsel %vm3251, %v3222, %v1567
      %v3293 = vsel %vm3251, %v3224, %v1569
      %v3295 = vsel %vm3251, %v3226, %v1571
      %v3297 = vsel %vm3251, %v3228, %v1573
      %v3299 = vsel %vm3251, %v3230, %v1575
      %v3301 = vsel %vm3251, %v3232, %v1577
      %v3303 = vsel %vm3251, %v3234, %v1579
      %v3305 = vsel %vm3251, %v3236, %v1581
      %v3307 = vsel %vm3251, %v3238, %v1583
      %v3309 = vsel %vm3251, %v3240, %v1585
      %v3311 = vsel %vm3251, %v3242, %v1587
      %v3313 = vsel %vm3251, %v3244, %v1589
      %v3315 = vsel %vm3251, %v3246, %v1591
      %v3317 = vsel %vm3251, %v3248, %v1593
      %v3319 = vsel %vm3251, %v3250, %v1595
      %vm3320 = vcmask 121856
      %v3322 = vsel %vm3320, %v3253, %v1733
      %v3324 = vsel %vm3320, %v3255, %v1735
      %v3326 = vsel %vm3320, %v3257, %v1737
      %v3328 = vsel %vm3320, %v3259, %v1739
      %v3330 = vsel %vm3320, %v3261, %v1741
      %v3332 = vsel %vm3320, %v3263, %v1743
      %v3334 = vsel %vm3320, %v3265, %v1745
      %v3336 = vsel %vm3320, %v3267, %v1747
      %v3338 = vsel %vm3320, %v3269, %v1749
      %v3340 = vsel %vm3320, %v3271, %v1751
      %v3342 = vsel %vm3320, %v3273, %v1753
      %v3344 = vsel %vm3320, %v3275, %v1755
      %v3346 = vsel %vm3320, %v3277, %v1757
      %v3348 = vsel %vm3320, %v3279, %v1759
      %v3350 = vsel %vm3320, %v3281, %v1761
      %v3352 = vsel %vm3320, %v3283, %v1763
      %v3354 = vsel %vm3320, %v3285, %v1765
      %v3356 = vsel %vm3320, %v3287, %v1767
      %v3358 = vsel %vm3320, %v3289, %v1769
      %v3360 = vsel %vm3320, %v3291, %v1771
      %v3362 = vsel %vm3320, %v3293, %v1773
      %v3364 = vsel %vm3320, %v3295, %v1775
      %v3366 = vsel %vm3320, %v3297, %v1777
      %v3368 = vsel %vm3320, %v3299, %v1779
      %v3370 = vsel %vm3320, %v3301, %v1781
      %v3372 = vsel %vm3320, %v3303, %v1783
      %v3374 = vsel %vm3320, %v3305, %v1785
      %v3376 = vsel %vm3320, %v3307, %v1787
      %v3378 = vsel %vm3320, %v3309, %v1789
      %v3380 = vsel %vm3320, %v3311, %v1791
      %v3382 = vsel %vm3320, %v3313, %v1793
      %v3384 = vsel %vm3320, %v3315, %v1795
      %v3386 = vsel %vm3320, %v3317, %v1797
      %v3388 = vsel %vm3320, %v3319, %v1799
      %vm3389 = vcmask 146432
      %v3391 = vsel %vm3389, %v3322, %v2039
      %v3393 = vsel %vm3389, %v3324, %v2041
      %v3395 = vsel %vm3389, %v3326, %v2043
      %v3397 = vsel %vm3389, %v3328, %v2045
      %v3399 = vsel %vm3389, %v3330, %v2047
      %v3401 = vsel %vm3389, %v3332, %v2049
      %v3403 = vsel %vm3389, %v3334, %v2051
      %v3405 = vsel %vm3389, %v3336, %v2053
      %v3407 = vsel %vm3389, %v3338, %v2055
      %v3409 = vsel %vm3389, %v3340, %v2057
      %v3411 = vsel %vm3389, %v3342, %v2059
      %v3413 = vsel %vm3389, %v3344, %v2061
      %v3415 = vsel %vm3389, %v3346, %v2063
      %v3417 = vsel %vm3389, %v3348, %v2065
      %v3419 = vsel %vm3389, %v3350, %v2067
      %v3421 = vsel %vm3389, %v3352, %v2069
      %v3423 = vsel %vm3389, %v3354, %v2071
      %v3425 = vsel %vm3389, %v3356, %v2073
      %v3427 = vsel %vm3389, %v3358, %v2075
      %v3429 = vsel %vm3389, %v3360, %v2077
      %v3431 = vsel %vm3389, %v3362, %v2079
      %v3433 = vsel %vm3389, %v3364, %v2081
      %v3435 = vsel %vm3389, %v3366, %v2083
      %v3437 = vsel %vm3389, %v3368, %v2085
      %v3439 = vsel %vm3389, %v3370, %v2087
      %v3441 = vsel %vm3389, %v3372, %v2089
      %v3443 = vsel %vm3389, %v3374, %v2091
      %v3445 = vsel %vm3389, %v3376, %v2093
      %v3447 = vsel %vm3389, %v3378, %v2095
      %v3449 = vsel %vm3389, %v3380, %v2097
      %v3451 = vsel %vm3389, %v3382, %v2099
      %v3453 = vsel %vm3389, %v3384, %v2101
      %v3455 = vsel %vm3389, %v3386, %v2103
      %v3457 = vsel %vm3389, %v3388, %v2105
      %vm3458 = vcmask 171008
      %v3460 = vsel %vm3458, %v3391, %v2345
      %v3462 = vsel %vm3458, %v3393, %v2347
      %v3464 = vsel %vm3458, %v3395, %v2349
      %v3466 = vsel %vm3458, %v3397, %v2351
      %v3468 = vsel %vm3458, %v3399, %v2353
      %v3470 = vsel %vm3458, %v3401, %v2355
      %v3472 = vsel %vm3458, %v3403, %v2357
      %v3474 = vsel %vm3458, %v3405, %v2359
      %v3476 = vsel %vm3458, %v3407, %v2361
      %v3478 = vsel %vm3458, %v3409, %v2363
      %v3480 = vsel %vm3458, %v3411, %v2365
      %v3482 = vsel %vm3458, %v3413, %v2367
      %v3484 = vsel %vm3458, %v3415, %v2369
      %v3486 = vsel %vm3458, %v3417, %v2371
      %v3488 = vsel %vm3458, %v3419, %v2373
      %v3490 = vsel %vm3458, %v3421, %v2375
      %v3492 = vsel %vm3458, %v3423, %v2377
      %v3494 = vsel %vm3458, %v3425, %v2379
      %v3496 = vsel %vm3458, %v3427, %v2381
      %v3498 = vsel %vm3458, %v3429, %v2383
      %v3500 = vsel %vm3458, %v3431, %v2385
      %v3502 = vsel %vm3458, %v3433, %v2387
      %v3504 = vsel %vm3458, %v3435, %v2389
      %v3506 = vsel %vm3458, %v3437, %v2391
      %v3508 = vsel %vm3458, %v3439, %v2393
      %v3510 = vsel %vm3458, %v3441, %v2395
      %v3512 = vsel %vm3458, %v3443, %v2397
      %v3514 = vsel %vm3458, %v3445, %v2399
      %v3516 = vsel %vm3458, %v3447, %v2401
      %v3518 = vsel %vm3458, %v3449, %v2403
      %v3520 = vsel %vm3458, %v3451, %v2405
      %v3522 = vsel %vm3458, %v3453, %v2407
      %v3524 = vsel %vm3458, %v3455, %v2409
      %v3526 = vsel %vm3458, %v3457, %v2411
      %vm3527 = vcmask 195584
      %v3529 = vsel %vm3527, %v3460, %v2421
      %v3531 = vsel %vm3527, %v3462, %v2423
      %v3533 = vsel %vm3527, %v3464, %v2425
      %v3535 = vsel %vm3527, %v3466, %v2427
      %v3537 = vsel %vm3527, %v3468, %v2429
      %v3539 = vsel %vm3527, %v3470, %v2431
      %v3541 = vsel %vm3527, %v3472, %v2433
      %v3543 = vsel %vm3527, %v3474, %v2435
      %v3545 = vsel %vm3527, %v3476, %v2437
      %v3547 = vsel %vm3527, %v3478, %v2439
      %v3549 = vsel %vm3527, %v3480, %v2441
      %v3551 = vsel %vm3527, %v3482, %v2443
      %v3553 = vsel %vm3527, %v3484, %v2445
      %v3555 = vsel %vm3527, %v3486, %v2447
      %v3557 = vsel %vm3527, %v3488, %v2449
      %v3559 = vsel %vm3527, %v3490, %v2451
      %v3561 = vsel %vm3527, %v3492, %v2453
      %v3563 = vsel %vm3527, %v3494, %v2455
      %v3565 = vsel %vm3527, %v3496, %v2457
      %v3567 = vsel %vm3527, %v3498, %v2459
      %v3569 = vsel %vm3527, %v3500, %v2461
      %v3571 = vsel %vm3527, %v3502, %v2463
      %v3573 = vsel %vm3527, %v3504, %v2465
      %v3575 = vsel %vm3527, %v3506, %v2467
      %v3577 = vsel %vm3527, %v3508, %v2469
      %v3579 = vsel %vm3527, %v3510, %v2471
      %v3581 = vsel %vm3527, %v3512, %v2473
      %v3583 = vsel %vm3527, %v3514, %v2475
      %v3585 = vsel %vm3527, %v3516, %v2477
      %v3587 = vsel %vm3527, %v3518, %v2479
      %v3589 = vsel %vm3527, %v3520, %v2481
      %v3591 = vsel %vm3527, %v3522, %v2483
      %v3593 = vsel %vm3527, %v3524, %v2485
      %v3595 = vsel %vm3527, %v3526, %v2487
      %vm3596 = vcmask 220160
      %v3598 = vsel %vm3596, %v3529, %v2497
      %v3600 = vsel %vm3596, %v3531, %v2499
      %v3602 = vsel %vm3596, %v3533, %v2501
      %v3604 = vsel %vm3596, %v3535, %v2503
      %v3606 = vsel %vm3596, %v3537, %v2505
      %v3608 = vsel %vm3596, %v3539, %v2507
      %v3610 = vsel %vm3596, %v3541, %v2509
      %v3612 = vsel %vm3596, %v3543, %v2511
      %v3614 = vsel %vm3596, %v3545, %v2513
      %v3616 = vsel %vm3596, %v3547, %v2515
      %v3618 = vsel %vm3596, %v3549, %v2517
      %v3620 = vsel %vm3596, %v3551, %v2519
      %v3622 = vsel %vm3596, %v3553, %v2521
      %v3624 = vsel %vm3596, %v3555, %v2523
      %v3626 = vsel %vm3596, %v3557, %v2525
      %v3628 = vsel %vm3596, %v3559, %v2527
      %v3630 = vsel %vm3596, %v3561, %v2529
      %v3632 = vsel %vm3596, %v3563, %v2531
      %v3634 = vsel %vm3596, %v3565, %v2533
      %v3636 = vsel %vm3596, %v3567, %v2535
      %v3638 = vsel %vm3596, %v3569, %v2537
      %v3640 = vsel %vm3596, %v3571, %v2539
      %v3642 = vsel %vm3596, %v3573, %v2541
      %v3644 = vsel %vm3596, %v3575, %v2543
      %v3646 = vsel %vm3596, %v3577, %v2545
      %v3648 = vsel %vm3596, %v3579, %v2547
      %v3650 = vsel %vm3596, %v3581, %v2549
      %v3652 = vsel %vm3596, %v3583, %v2551
      %v3654 = vsel %vm3596, %v3585, %v2553
      %v3656 = vsel %vm3596, %v3587, %v2555
      %v3658 = vsel %vm3596, %v3589, %v2557
      %v3660 = vsel %vm3596, %v3591, %v2559
      %v3662 = vsel %vm3596, %v3593, %v2561
      %v3664 = vsel %vm3596, %v3595, %v2563
      %vm3665 = vcmask 244736
      %v3667 = vsel %vm3665, %v3598, %v2579
      %v3669 = vsel %vm3665, %v3600, %v2581
      %v3671 = vsel %vm3665, %v3602, %v2583
      %v3673 = vsel %vm3665, %v3604, %v2585
      %v3675 = vsel %vm3665, %v3606, %v2587
      %v3677 = vsel %vm3665, %v3608, %v2589
      %v3679 = vsel %vm3665, %v3610, %v2591
      %v3681 = vsel %vm3665, %v3612, %v2593
      %v3683 = vsel %vm3665, %v3614, %v2595
      %v3685 = vsel %vm3665, %v3616, %v2597
      %v3687 = vsel %vm3665, %v3618, %v2599
      %v3689 = vsel %vm3665, %v3620, %v2601
      %v3691 = vsel %vm3665, %v3622, %v2603
      %v3693 = vsel %vm3665, %v3624, %v2605
      %v3695 = vsel %vm3665, %v3626, %v2607
      %v3697 = vsel %vm3665, %v3628, %v2609
      %v3699 = vsel %vm3665, %v3630, %v2611
      %v3701 = vsel %vm3665, %v3632, %v2613
      %v3703 = vsel %vm3665, %v3634, %v2615
      %v3705 = vsel %vm3665, %v3636, %v2617
      %v3707 = vsel %vm3665, %v3638, %v2619
      %v3709 = vsel %vm3665, %v3640, %v2621
      %v3711 = vsel %vm3665, %v3642, %v2623
      %v3713 = vsel %vm3665, %v3644, %v2625
      %v3715 = vsel %vm3665, %v3646, %v2627
      %v3717 = vsel %vm3665, %v3648, %v2629
      %v3719 = vsel %vm3665, %v3650, %v2631
      %v3721 = vsel %vm3665, %v3652, %v2633
      %v3723 = vsel %vm3665, %v3654, %v2635
      %v3725 = vsel %vm3665, %v3656, %v2637
      %v3727 = vsel %vm3665, %v3658, %v2639
      %v3729 = vsel %vm3665, %v3660, %v2641
      %v3731 = vsel %vm3665, %v3662, %v2643
      %v3733 = vsel %vm3665, %v3664, %v2645
      %vm3734 = vcmask 269312
      %v3736 = vsel %vm3734, %v3667, %v2661
      %v3738 = vsel %vm3734, %v3669, %v2663
      %v3740 = vsel %vm3734, %v3671, %v2665
      %v3742 = vsel %vm3734, %v3673, %v2667
      %v3744 = vsel %vm3734, %v3675, %v2669
      %v3746 = vsel %vm3734, %v3677, %v2671
      %v3748 = vsel %vm3734, %v3679, %v2673
      %v3750 = vsel %vm3734, %v3681, %v2675
      %v3752 = vsel %vm3734, %v3683, %v2677
      %v3754 = vsel %vm3734, %v3685, %v2679
      %v3756 = vsel %vm3734, %v3687, %v2681
      %v3758 = vsel %vm3734, %v3689, %v2683
      %v3760 = vsel %vm3734, %v3691, %v2685
      %v3762 = vsel %vm3734, %v3693, %v2687
      %v3764 = vsel %vm3734, %v3695, %v2689
      %v3766 = vsel %vm3734, %v3697, %v2691
      %v3768 = vsel %vm3734, %v3699, %v2693
      %v3770 = vsel %vm3734, %v3701, %v2695
      %v3772 = vsel %vm3734, %v3703, %v2697
      %v3774 = vsel %vm3734, %v3705, %v2699
      %v3776 = vsel %vm3734, %v3707, %v2701
      %v3778 = vsel %vm3734, %v3709, %v2703
      %v3780 = vsel %vm3734, %v3711, %v2705
      %v3782 = vsel %vm3734, %v3713, %v2707
      %v3784 = vsel %vm3734, %v3715, %v2709
      %v3786 = vsel %vm3734, %v3717, %v2711
      %v3788 = vsel %vm3734, %v3719, %v2713
      %v3790 = vsel %vm3734, %v3721, %v2715
      %v3792 = vsel %vm3734, %v3723, %v2717
      %v3794 = vsel %vm3734, %v3725, %v2719
      %v3796 = vsel %vm3734, %v3727, %v2721
      %v3798 = vsel %vm3734, %v3729, %v2723
      %v3800 = vsel %vm3734, %v3731, %v2725
      %v3802 = vsel %vm3734, %v3733, %v2727
      %vm3803 = vcmask 293888
      %v3805 = vsel %vm3803, %v3736, %v2737
      %v3807 = vsel %vm3803, %v3738, %v2739
      %v3809 = vsel %vm3803, %v3740, %v2741
      %v3811 = vsel %vm3803, %v3742, %v2743
      %v3813 = vsel %vm3803, %v3744, %v2745
      %v3815 = vsel %vm3803, %v3746, %v2747
      %v3817 = vsel %vm3803, %v3748, %v2749
      %v3819 = vsel %vm3803, %v3750, %v2751
      %v3821 = vsel %vm3803, %v3752, %v2753
      %v3823 = vsel %vm3803, %v3754, %v2755
      %v3825 = vsel %vm3803, %v3756, %v2757
      %v3827 = vsel %vm3803, %v3758, %v2759
      %v3829 = vsel %vm3803, %v3760, %v2761
      %v3831 = vsel %vm3803, %v3762, %v2763
      %v3833 = vsel %vm3803, %v3764, %v2765
      %v3835 = vsel %vm3803, %v3766, %v2767
      %v3837 = vsel %vm3803, %v3768, %v2769
      %v3839 = vsel %vm3803, %v3770, %v2771
      %v3841 = vsel %vm3803, %v3772, %v2773
      %v3843 = vsel %vm3803, %v3774, %v2775
      %v3845 = vsel %vm3803, %v3776, %v2777
      %v3847 = vsel %vm3803, %v3778, %v2779
      %v3849 = vsel %vm3803, %v3780, %v2781
      %v3851 = vsel %vm3803, %v3782, %v2783
      %v3853 = vsel %vm3803, %v3784, %v2785
      %v3855 = vsel %vm3803, %v3786, %v2787
      %v3857 = vsel %vm3803, %v3788, %v2789
      %v3859 = vsel %vm3803, %v3790, %v2791
      %v3861 = vsel %vm3803, %v3792, %v2793
      %v3863 = vsel %vm3803, %v3794, %v2795
      %v3865 = vsel %vm3803, %v3796, %v2797
      %v3867 = vsel %vm3803, %v3798, %v2799
      %v3869 = vsel %vm3803, %v3800, %v2801
      %v3871 = vsel %vm3803, %v3802, %v2803
      %vm3872 = vcmask 318464
      %v3874 = vsel %vm3872, %v3805, %v2813
      %v3876 = vsel %vm3872, %v3807, %v2815
      %v3878 = vsel %vm3872, %v3809, %v2817
      %v3880 = vsel %vm3872, %v3811, %v2819
      %v3882 = vsel %vm3872, %v3813, %v2821
      %v3884 = vsel %vm3872, %v3815, %v2823
      %v3886 = vsel %vm3872, %v3817, %v2825
      %v3888 = vsel %vm3872, %v3819, %v2827
      %v3890 = vsel %vm3872, %v3821, %v2829
      %v3892 = vsel %vm3872, %v3823, %v2831
      %v3894 = vsel %vm3872, %v3825, %v2833
      %v3896 = vsel %vm3872, %v3827, %v2835
      %v3898 = vsel %vm3872, %v3829, %v2837
      %v3900 = vsel %vm3872, %v3831, %v2839
      %v3902 = vsel %vm3872, %v3833, %v2841
      %v3904 = vsel %vm3872, %v3835, %v2843
      %v3906 = vsel %vm3872, %v3837, %v2845
      %v3908 = vsel %vm3872, %v3839, %v2847
      %v3910 = vsel %vm3872, %v3841, %v2849
      %v3912 = vsel %vm3872, %v3843, %v2851
      %v3914 = vsel %vm3872, %v3845, %v2853
      %v3916 = vsel %vm3872, %v3847, %v2855
      %v3918 = vsel %vm3872, %v3849, %v2857
      %v3920 = vsel %vm3872, %v3851, %v2859
      %v3922 = vsel %vm3872, %v3853, %v2861
      %v3924 = vsel %vm3872, %v3855, %v2863
      %v3926 = vsel %vm3872, %v3857, %v2865
      %v3928 = vsel %vm3872, %v3859, %v2867
      %v3930 = vsel %vm3872, %v3861, %v2869
      %v3932 = vsel %vm3872, %v3863, %v2871
      %v3934 = vsel %vm3872, %v3865, %v2873
      %v3936 = vsel %vm3872, %v3867, %v2875
      %v3938 = vsel %vm3872, %v3869, %v2877
      %v3940 = vsel %vm3872, %v3871, %v2879
      %vm3941 = vcmask 343040
      %v3943 = vsel %vm3941, %v3874, %v2895
      %v3945 = vsel %vm3941, %v3876, %v2897
      %v3947 = vsel %vm3941, %v3878, %v2899
      %v3949 = vsel %vm3941, %v3880, %v2901
      %v3951 = vsel %vm3941, %v3882, %v2903
      %v3953 = vsel %vm3941, %v3884, %v2905
      %v3955 = vsel %vm3941, %v3886, %v2907
      %v3957 = vsel %vm3941, %v3888, %v2909
      %v3959 = vsel %vm3941, %v3890, %v2911
      %v3961 = vsel %vm3941, %v3892, %v2913
      %v3963 = vsel %vm3941, %v3894, %v2915
      %v3965 = vsel %vm3941, %v3896, %v2917
      %v3967 = vsel %vm3941, %v3898, %v2919
      %v3969 = vsel %vm3941, %v3900, %v2921
      %v3971 = vsel %vm3941, %v3902, %v2923
      %v3973 = vsel %vm3941, %v3904, %v2925
      %v3975 = vsel %vm3941, %v3906, %v2927
      %v3977 = vsel %vm3941, %v3908, %v2929
      %v3979 = vsel %vm3941, %v3910, %v2931
      %v3981 = vsel %vm3941, %v3912, %v2933
      %v3983 = vsel %vm3941, %v3914, %v2935
      %v3985 = vsel %vm3941, %v3916, %v2937
      %v3987 = vsel %vm3941, %v3918, %v2939
      %v3989 = vsel %vm3941, %v3920, %v2941
      %v3991 = vsel %vm3941, %v3922, %v2943
      %v3993 = vsel %vm3941, %v3924, %v2945
      %v3995 = vsel %vm3941, %v3926, %v2947
      %v3997 = vsel %vm3941, %v3928, %v2949
      %v3999 = vsel %vm3941, %v3930, %v2951
      %v4001 = vsel %vm3941, %v3932, %v2953
      %v4003 = vsel %vm3941, %v3934, %v2955
      %v4005 = vsel %vm3941, %v3936, %v2957
      %v4007 = vsel %vm3941, %v3938, %v2959
      %v4009 = vsel %vm3941, %v3940, %v2961
      %vm4010 = vcmask 367616
      %v4012 = vsel %vm4010, %v3943, %v2977
      %v4014 = vsel %vm4010, %v3945, %v2979
      %v4016 = vsel %vm4010, %v3947, %v2981
      %v4018 = vsel %vm4010, %v3949, %v2983
      %v4020 = vsel %vm4010, %v3951, %v2985
      %v4022 = vsel %vm4010, %v3953, %v2987
      %v4024 = vsel %vm4010, %v3955, %v2989
      %v4026 = vsel %vm4010, %v3957, %v2991
      %v4028 = vsel %vm4010, %v3959, %v2993
      %v4030 = vsel %vm4010, %v3961, %v2995
      %v4032 = vsel %vm4010, %v3963, %v2997
      %v4034 = vsel %vm4010, %v3965, %v2999
      %v4036 = vsel %vm4010, %v3967, %v3001
      %v4038 = vsel %vm4010, %v3969, %v3003
      %v4040 = vsel %vm4010, %v3971, %v3005
      %v4042 = vsel %vm4010, %v3973, %v3007
      %v4044 = vsel %vm4010, %v3975, %v3009
      %v4046 = vsel %vm4010, %v3977, %v3011
      %v4048 = vsel %vm4010, %v3979, %v3013
      %v4050 = vsel %vm4010, %v3981, %v3015
      %v4052 = vsel %vm4010, %v3983, %v3017
      %v4054 = vsel %vm4010, %v3985, %v3019
      %v4056 = vsel %vm4010, %v3987, %v3021
      %v4058 = vsel %vm4010, %v3989, %v3023
      %v4060 = vsel %vm4010, %v3991, %v3025
      %v4062 = vsel %vm4010, %v3993, %v3027
      %v4064 = vsel %vm4010, %v3995, %v3029
      %v4066 = vsel %vm4010, %v3997, %v3031
      %v4068 = vsel %vm4010, %v3999, %v3033
      %v4070 = vsel %vm4010, %v4001, %v3035
      %v4072 = vsel %vm4010, %v4003, %v3037
      %v4074 = vsel %vm4010, %v4005, %v3039
      %v4076 = vsel %vm4010, %v4007, %v3041
      %v4078 = vsel %vm4010, %v4009, %v3043
      %v4079 = vld [vmem:[%s210] sm:$0xf]
      %v4080 = vld [vmem:[%s210 + $0x4] sm:$0xf]
      %v4081 = vld [vmem:[%s210 + $0x8] sm:$0xf]
      %v4082 = vld [vmem:[%s210 + $0xc] sm:$0xf]
      %v4083 = vld [vmem:[%s210 + $0x10] sm:$0xf]
      %v4084 = vld [vmem:[%s210 + $0x14] sm:$0xf]
      %v4085 = vld [vmem:[%s213] sm:$0x1]
      %v4087 = vperm.slane %v4085, 0
      %v4122 = vrot.slane %v4012, 1
      %v4123 = vrot.slane %v4012, 2
      %v4124 = vrot.slane %v4012, 3
      %v4125 = vrot.slane %v4012, 4
      %v4126 = vrot.slane %v4012, 5
      %v4127 = vrot.slane %v4012, 6
      %v4128 = vrot.slane %v4012, 7
      %v4129 = vrot.slane %v4016, 1
      %v4130 = vrot.slane %v4016, 2
      %v4131 = vrot.slane %v4016, 3
      %v4132 = vrot.slane %v4016, 4
      %v4133 = vrot.slane %v4016, 5
      %v4134 = vrot.slane %v4016, 6
      %v4135 = vrot.slane %v4016, 7
      %v4136 = vrot.slane %v4020, 1
      %v4137 = vrot.slane %v4020, 2
      %v4138 = vrot.slane %v4020, 3
      %v4139 = vrot.slane %v4020, 4
      %v4140 = vrot.slane %v4020, 5
      %v4141 = vrot.slane %v4020, 6
      %v4142 = vrot.slane %v4020, 7
      %v4143 = vrot.slane %v4024, 1
      %v4144 = vrot.slane %v4024, 2
      %v4145 = vrot.slane %v4024, 3
      %v4146 = vrot.slane %v4024, 4
      %v4147 = vrot.slane %v4024, 5
      %v4148 = vrot.slane %v4024, 6
      %v4149 = vrot.slane %v4024, 7
      %v4150 = vrot.slane %v4028, 1
      %v4151 = vrot.slane %v4028, 2
      %v4152 = vrot.slane %v4028, 3
      %v4153 = vrot.slane %v4028, 4
      %v4154 = vrot.slane %v4028, 5
      %v4155 = vrot.slane %v4028, 6
      %v4156 = vrot.slane %v4028, 7
      %v4157 = vrot.slane %v4032, 1
      %v4158 = vrot.slane %v4032, 2
      %v4159 = vrot.slane %v4032, 3
      %v4160 = vrot.slane %v4032, 4
      %v4161 = vrot.slane %v4032, 5
      %v4162 = vrot.slane %v4032, 6
      %v4163 = vrot.slane %v4032, 7
      %v4164 = vrot.slane %v4036, 1
      %v4165 = vrot.slane %v4036, 2
      %v4166 = vrot.slane %v4036, 3
      %v4167 = vrot.slane %v4036, 4
      %v4168 = vrot.slane %v4036, 5
      %v4169 = vrot.slane %v4036, 6
      %v4170 = vrot.slane %v4036, 7
      %v4171 = vrot.slane %v4040, 1
      %v4172 = vrot.slane %v4040, 2
      %v4173 = vrot.slane %v4040, 3
      %v4174 = vrot.slane %v4040, 4
      %v4175 = vrot.slane %v4040, 5
      %v4176 = vrot.slane %v4040, 6
      %v4177 = vrot.slane %v4040, 7
      %v4178 = vrot.slane %v4044, 1
      %v4179 = vrot.slane %v4044, 2
      %v4180 = vrot.slane %v4044, 3
      %v4181 = vrot.slane %v4044, 4
      %v4182 = vrot.slane %v4044, 5
      %v4183 = vrot.slane %v4044, 6
      %v4184 = vrot.slane %v4044, 7
      %v4185 = vrot.slane %v4048, 1
      %v4186 = vrot.slane %v4048, 2
      %v4187 = vrot.slane %v4048, 3
      %v4188 = vrot.slane %v4048, 4
      %v4189 = vrot.slane %v4048, 5
      %v4190 = vrot.slane %v4048, 6
      %v4191 = vrot.slane %v4048, 7
      %v4192 = vrot.slane %v4052, 1
      %v4193 = vrot.slane %v4052, 2
      %v4194 = vrot.slane %v4052, 3
      %v4195 = vrot.slane %v4052, 4
      %v4196 = vrot.slane %v4052, 5
      %v4197 = vrot.slane %v4052, 6
      %v4198 = vrot.slane %v4052, 7
      %v4199 = vrot.slane %v4056, 1
      %v4200 = vrot.slane %v4056, 2
      %v4201 = vrot.slane %v4056, 3
      %v4202 = vrot.slane %v4056, 4
      %v4203 = vrot.slane %v4056, 5
      %v4204 = vrot.slane %v4056, 6
      %v4205 = vrot.slane %v4056, 7
      %v4206 = vrot.slane %v4060, 1
      %v4207 = vrot.slane %v4060, 2
      %v4208 = vrot.slane %v4060, 3
      %v4209 = vrot.slane %v4060, 4
      %v4210 = vrot.slane %v4060, 5
      %v4211 = vrot.slane %v4060, 6
      %v4212 = vrot.slane %v4060, 7
      %v4213 = vrot.slane %v4064, 1
      %v4214 = vrot.slane %v4064, 2
      %v4215 = vrot.slane %v4064, 3
      %v4216 = vrot.slane %v4064, 4
      %v4217 = vrot.slane %v4064, 5
      %v4218 = vrot.slane %v4064, 6
      %v4219 = vrot.slane %v4064, 7
      %v4220 = vrot.slane %v4068, 1
      %v4221 = vrot.slane %v4068, 2
      %v4222 = vrot.slane %v4068, 3
      %v4223 = vrot.slane %v4068, 4
      %v4224 = vrot.slane %v4068, 5
      %v4225 = vrot.slane %v4068, 6
      %v4226 = vrot.slane %v4068, 7
      %v4227 = vrot.slane %v4072, 1
      %v4228 = vrot.slane %v4072, 2
      %v4229 = vrot.slane %v4072, 3
      %v4230 = vrot.slane %v4072, 4
      %v4231 = vrot.slane %v4072, 5
      %v4232 = vrot.slane %v4072, 6
      %v4233 = vrot.slane %v4072, 7
      %v4234 = vrot.slane %v4076, 1
      %v4235 = vrot.slane %v4076, 2
      %v4236 = vrot.slane %v4076, 3
      %v4237 = vrot.slane %v4076, 4
      %v4238 = vrot.slane %v4076, 5
      %v4239 = vrot.slane %v4076, 6
      %v4240 = vrot.slane %v4076, 7
      %v4241 = vunpack.i.l.s16 %v4012
      %v4242 = vunpack.i.h.s16 %v4012
      %v4243 = vunpack.i.l.s16 %v4122
      %v4244 = vunpack.i.h.s16 %v4122
      %v4245 = vunpack.i.l.s16 %v4123
      %v4246 = vunpack.i.h.s16 %v4123
      %v4247 = vunpack.i.l.s16 %v4124
      %v4248 = vunpack.i.h.s16 %v4124
      %v4249 = vunpack.i.l.s16 %v4125
      %v4250 = vunpack.i.h.s16 %v4125
      %v4251 = vunpack.i.l.s16 %v4126
      %v4252 = vunpack.i.h.s16 %v4126
      %v4253 = vunpack.i.l.s16 %v4127
      %v4254 = vunpack.i.h.s16 %v4127
      %v4255 = vunpack.i.l.s16 %v4128
      %v4256 = vunpack.i.h.s16 %v4128
      %v4257 = vunpack.i.l.s16 %v4014
      %v4258 = vunpack.i.l.s16 %v4016
      %v4259 = vunpack.i.h.s16 %v4016
      %v4260 = vunpack.i.l.s16 %v4129
      %v4261 = vunpack.i.h.s16 %v4129
      %v4262 = vunpack.i.l.s16 %v4130
      %v4263 = vunpack.i.h.s16 %v4130
      %v4264 = vunpack.i.l.s16 %v4131
      %v4265 = vunpack.i.h.s16 %v4131
      %v4266 = vunpack.i.l.s16 %v4132
      %v4267 = vunpack.i.h.s16 %v4132
      %v4268 = vunpack.i.l.s16 %v4133
      %v4269 = vunpack.i.h.s16 %v4133
      %v4270 = vunpack.i.l.s16 %v4134
      %v4271 = vunpack.i.h.s16 %v4134
      %v4272 = vunpack.i.l.s16 %v4135
      %v4273 = vunpack.i.h.s16 %v4135
      %v4274 = vunpack.i.l.s16 %v4018
      %v4275 = vunpack.i.l.s16 %v4020
      %v4276 = vunpack.i.h.s16 %v4020
      %v4277 = vunpack.i.l.s16 %v4136
      %v4278 = vunpack.i.h.s16 %v4136
      %v4279 = vunpack.i.l.s16 %v4137
      %v4280 = vunpack.i.h.s16 %v4137
      %v4281 = vunpack.i.l.s16 %v4138
      %v4282 = vunpack.i.h.s16 %v4138
      %v4283 = vunpack.i.l.s16 %v4139
      %v4284 = vunpack.i.h.s16 %v4139
      %v4285 = vunpack.i.l.s16 %v4140
      %v4286 = vunpack.i.h.s16 %v4140
      %v4287 = vunpack.i.l.s16 %v4141
      %v4288 = vunpack.i.h.s16 %v4141
      %v4289 = vunpack.i.l.s16 %v4142
      %v4290 = vunpack.i.h.s16 %v4142
      %v4291 = vunpack.i.l.s16 %v4022
      %v4292 = vunpack.i.l.s16 %v4024
      %v4293 = vunpack.i.h.s16 %v4024
      %v4294 = vunpack.i.l.s16 %v4143
      %v4295 = vunpack.i.h.s16 %v4143
      %v4296 = vunpack.i.l.s16 %v4144
      %v4297 = vunpack.i.h.s16 %v4144
      %v4298 = vunpack.i.l.s16 %v4145
      %v4299 = vunpack.i.h.s16 %v4145
      %v4300 = vunpack.i.l.s16 %v4146
      %v4301 = vunpack.i.h.s16 %v4146
      %v4302 = vunpack.i.l.s16 %v4147
      %v4303 = vunpack.i.h.s16 %v4147
      %v4304 = vunpack.i.l.s16 %v4148
      %v4305 = vunpack.i.h.s16 %v4148
      %v4306 = vunpack.i.l.s16 %v4149
      %v4307 = vunpack.i.h.s16 %v4149
      %v4308 = vunpack.i.l.s16 %v4026
      %v4309 = vunpack.i.l.s16 %v4028
      %v4310 = vunpack.i.h.s16 %v4028
      %v4311 = vunpack.i.l.s16 %v4150
      %v4312 = vunpack.i.h.s16 %v4150
      %v4313 = vunpack.i.l.s16 %v4151
      %v4314 = vunpack.i.h.s16 %v4151
      %v4315 = vunpack.i.l.s16 %v4152
      %v4316 = vunpack.i.h.s16 %v4152
      %v4317 = vunpack.i.l.s16 %v4153
      %v4318 = vunpack.i.h.s16 %v4153
      %v4319 = vunpack.i.l.s16 %v4154
      %v4320 = vunpack.i.h.s16 %v4154
      %v4321 = vunpack.i.l.s16 %v4155
      %v4322 = vunpack.i.h.s16 %v4155
      %v4323 = vunpack.i.l.s16 %v4156
      %v4324 = vunpack.i.h.s16 %v4156
      %v4325 = vunpack.i.l.s16 %v4030
      %v4326 = vunpack.i.l.s16 %v4032
      %v4327 = vunpack.i.h.s16 %v4032
      %v4328 = vunpack.i.l.s16 %v4157
      %v4329 = vunpack.i.h.s16 %v4157
      %v4330 = vunpack.i.l.s16 %v4158
      %v4331 = vunpack.i.h.s16 %v4158
      %v4332 = vunpack.i.l.s16 %v4159
      %v4333 = vunpack.i.h.s16 %v4159
      %v4334 = vunpack.i.l.s16 %v4160
      %v4335 = vunpack.i.h.s16 %v4160
      %v4336 = vunpack.i.l.s16 %v4161
      %v4337 = vunpack.i.h.s16 %v4161
      %v4338 = vunpack.i.l.s16 %v4162
      %v4339 = vunpack.i.h.s16 %v4162
      %v4340 = vunpack.i.l.s16 %v4163
      %v4341 = vunpack.i.h.s16 %v4163
      %v4342 = vunpack.i.l.s16 %v4034
      %v4343 = vunpack.i.l.s16 %v4036
      %v4344 = vunpack.i.h.s16 %v4036
      %v4345 = vunpack.i.l.s16 %v4164
      %v4346 = vunpack.i.h.s16 %v4164
      %v4347 = vunpack.i.l.s16 %v4165
      %v4348 = vunpack.i.h.s16 %v4165
      %v4349 = vunpack.i.l.s16 %v4166
      %v4350 = vunpack.i.h.s16 %v4166
      %v4351 = vunpack.i.l.s16 %v4167
      %v4352 = vunpack.i.h.s16 %v4167
      %v4353 = vunpack.i.l.s16 %v4168
      %v4354 = vunpack.i.h.s16 %v4168
      %v4355 = vunpack.i.l.s16 %v4169
      %v4356 = vunpack.i.h.s16 %v4169
      %v4357 = vunpack.i.l.s16 %v4170
      %v4358 = vunpack.i.h.s16 %v4170
      %v4359 = vunpack.i.l.s16 %v4038
      %v4360 = vunpack.i.l.s16 %v4040
      %v4361 = vunpack.i.h.s16 %v4040
      %v4362 = vunpack.i.l.s16 %v4171
      %v4363 = vunpack.i.h.s16 %v4171
      %v4364 = vunpack.i.l.s16 %v4172
      %v4365 = vunpack.i.h.s16 %v4172
      %v4366 = vunpack.i.l.s16 %v4173
      %v4367 = vunpack.i.h.s16 %v4173
      %v4368 = vunpack.i.l.s16 %v4174
      %v4369 = vunpack.i.h.s16 %v4174
      %v4370 = vunpack.i.l.s16 %v4175
      %v4371 = vunpack.i.h.s16 %v4175
      %v4372 = vunpack.i.l.s16 %v4176
      %v4373 = vunpack.i.h.s16 %v4176
      %v4374 = vunpack.i.l.s16 %v4177
      %v4375 = vunpack.i.h.s16 %v4177
      %v4376 = vunpack.i.l.s16 %v4042
      %v4377 = vunpack.i.l.s16 %v4044
      %v4378 = vunpack.i.h.s16 %v4044
      %v4379 = vunpack.i.l.s16 %v4178
      %v4380 = vunpack.i.h.s16 %v4178
      %v4381 = vunpack.i.l.s16 %v4179
      %v4382 = vunpack.i.h.s16 %v4179
      %v4383 = vunpack.i.l.s16 %v4180
      %v4384 = vunpack.i.h.s16 %v4180
      %v4385 = vunpack.i.l.s16 %v4181
      %v4386 = vunpack.i.h.s16 %v4181
      %v4387 = vunpack.i.l.s16 %v4182
      %v4388 = vunpack.i.h.s16 %v4182
      %v4389 = vunpack.i.l.s16 %v4183
      %v4390 = vunpack.i.h.s16 %v4183
      %v4391 = vunpack.i.l.s16 %v4184
      %v4392 = vunpack.i.h.s16 %v4184
      %v4393 = vunpack.i.l.s16 %v4046
      %v4394 = vunpack.i.l.s16 %v4048
      %v4395 = vunpack.i.h.s16 %v4048
      %v4396 = vunpack.i.l.s16 %v4185
      %v4397 = vunpack.i.h.s16 %v4185
      %v4398 = vunpack.i.l.s16 %v4186
      %v4399 = vunpack.i.h.s16 %v4186
      %v4400 = vunpack.i.l.s16 %v4187
      %v4401 = vunpack.i.h.s16 %v4187
      %v4402 = vunpack.i.l.s16 %v4188
      %v4403 = vunpack.i.h.s16 %v4188
      %v4404 = vunpack.i.l.s16 %v4189
      %v4405 = vunpack.i.h.s16 %v4189
      %v4406 = vunpack.i.l.s16 %v4190
      %v4407 = vunpack.i.h.s16 %v4190
      %v4408 = vunpack.i.l.s16 %v4191
      %v4409 = vunpack.i.h.s16 %v4191
      %v4410 = vunpack.i.l.s16 %v4050
      %v4411 = vunpack.i.l.s16 %v4052
      %v4412 = vunpack.i.h.s16 %v4052
      %v4413 = vunpack.i.l.s16 %v4192
      %v4414 = vunpack.i.h.s16 %v4192
      %v4415 = vunpack.i.l.s16 %v4193
      %v4416 = vunpack.i.h.s16 %v4193
      %v4417 = vunpack.i.l.s16 %v4194
      %v4418 = vunpack.i.h.s16 %v4194
      %v4419 = vunpack.i.l.s16 %v4195
      %v4420 = vunpack.i.h.s16 %v4195
      %v4421 = vunpack.i.l.s16 %v4196
      %v4422 = vunpack.i.h.s16 %v4196
      %v4423 = vunpack.i.l.s16 %v4197
      %v4424 = vunpack.i.h.s16 %v4197
      %v4425 = vunpack.i.l.s16 %v4198
      %v4426 = vunpack.i.h.s16 %v4198
      %v4427 = vunpack.i.l.s16 %v4054
      %v4428 = vunpack.i.l.s16 %v4056
      %v4429 = vunpack.i.h.s16 %v4056
      %v4430 = vunpack.i.l.s16 %v4199
      %v4431 = vunpack.i.h.s16 %v4199
      %v4432 = vunpack.i.l.s16 %v4200
      %v4433 = vunpack.i.h.s16 %v4200
      %v4434 = vunpack.i.l.s16 %v4201
      %v4435 = vunpack.i.h.s16 %v4201
      %v4436 = vunpack.i.l.s16 %v4202
      %v4437 = vunpack.i.h.s16 %v4202
      %v4438 = vunpack.i.l.s16 %v4203
      %v4439 = vunpack.i.h.s16 %v4203
      %v4440 = vunpack.i.l.s16 %v4204
      %v4441 = vunpack.i.h.s16 %v4204
      %v4442 = vunpack.i.l.s16 %v4205
      %v4443 = vunpack.i.h.s16 %v4205
      %v4444 = vunpack.i.l.s16 %v4058
      %v4445 = vunpack.i.l.s16 %v4060
      %v4446 = vunpack.i.h.s16 %v4060
      %v4447 = vunpack.i.l.s16 %v4206
      %v4448 = vunpack.i.h.s16 %v4206
      %v4449 = vunpack.i.l.s16 %v4207
      %v4450 = vunpack.i.h.s16 %v4207
      %v4451 = vunpack.i.l.s16 %v4208
      %v4452 = vunpack.i.h.s16 %v4208
      %v4453 = vunpack.i.l.s16 %v4209
      %v4454 = vunpack.i.h.s16 %v4209
      %v4455 = vunpack.i.l.s16 %v4210
      %v4456 = vunpack.i.h.s16 %v4210
      %v4457 = vunpack.i.l.s16 %v4211
      %v4458 = vunpack.i.h.s16 %v4211
      %v4459 = vunpack.i.l.s16 %v4212
      %v4460 = vunpack.i.h.s16 %v4212
      %v4461 = vunpack.i.l.s16 %v4062
      %v4462 = vunpack.i.l.s16 %v4064
      %v4463 = vunpack.i.h.s16 %v4064
      %v4464 = vunpack.i.l.s16 %v4213
      %v4465 = vunpack.i.h.s16 %v4213
      %v4466 = vunpack.i.l.s16 %v4214
      %v4467 = vunpack.i.h.s16 %v4214
      %v4468 = vunpack.i.l.s16 %v4215
      %v4469 = vunpack.i.h.s16 %v4215
      %v4470 = vunpack.i.l.s16 %v4216
      %v4471 = vunpack.i.h.s16 %v4216
      %v4472 = vunpack.i.l.s16 %v4217
      %v4473 = vunpack.i.h.s16 %v4217
      %v4474 = vunpack.i.l.s16 %v4218
      %v4475 = vunpack.i.h.s16 %v4218
      %v4476 = vunpack.i.l.s16 %v4219
      %v4477 = vunpack.i.h.s16 %v4219
      %v4478 = vunpack.i.l.s16 %v4066
      %v4479 = vunpack.i.l.s16 %v4068
      %v4480 = vunpack.i.h.s16 %v4068
      %v4481 = vunpack.i.l.s16 %v4220
      %v4482 = vunpack.i.h.s16 %v4220
      %v4483 = vunpack.i.l.s16 %v4221
      %v4484 = vunpack.i.h.s16 %v4221
      %v4485 = vunpack.i.l.s16 %v4222
      %v4486 = vunpack.i.h.s16 %v4222
      %v4487 = vunpack.i.l.s16 %v4223
      %v4488 = vunpack.i.h.s16 %v4223
      %v4489 = vunpack.i.l.s16 %v4224
      %v4490 = vunpack.i.h.s16 %v4224
      %v4491 = vunpack.i.l.s16 %v4225
      %v4492 = vunpack.i.h.s16 %v4225
      %v4493 = vunpack.i.l.s16 %v4226
      %v4494 = vunpack.i.h.s16 %v4226
      %v4495 = vunpack.i.l.s16 %v4070
      %v4496 = vunpack.i.l.s16 %v4072
      %v4497 = vunpack.i.h.s16 %v4072
      %v4498 = vunpack.i.l.s16 %v4227
      %v4499 = vunpack.i.h.s16 %v4227
      %v4500 = vunpack.i.l.s16 %v4228
      %v4501 = vunpack.i.h.s16 %v4228
      %v4502 = vunpack.i.l.s16 %v4229
      %v4503 = vunpack.i.h.s16 %v4229
      %v4504 = vunpack.i.l.s16 %v4230
      %v4505 = vunpack.i.h.s16 %v4230
      %v4506 = vunpack.i.l.s16 %v4231
      %v4507 = vunpack.i.h.s16 %v4231
      %v4508 = vunpack.i.l.s16 %v4232
      %v4509 = vunpack.i.h.s16 %v4232
      %v4510 = vunpack.i.l.s16 %v4233
      %v4511 = vunpack.i.h.s16 %v4233
      %v4512 = vunpack.i.l.s16 %v4074
      %v4513 = vunpack.i.l.s16 %v4076
      %v4514 = vunpack.i.h.s16 %v4076
      %v4515 = vunpack.i.l.s16 %v4234
      %v4516 = vunpack.i.h.s16 %v4234
      %v4517 = vunpack.i.l.s16 %v4235
      %v4518 = vunpack.i.h.s16 %v4235
      %v4519 = vunpack.i.l.s16 %v4236
      %v4520 = vunpack.i.h.s16 %v4236
      %v4521 = vunpack.i.l.s16 %v4237
      %v4522 = vunpack.i.h.s16 %v4237
      %v4523 = vunpack.i.l.s16 %v4238
      %v4524 = vunpack.i.h.s16 %v4238
      %v4525 = vunpack.i.l.s16 %v4239
      %v4526 = vunpack.i.h.s16 %v4239
      %v4527 = vunpack.i.l.s16 %v4240
      %v4528 = vunpack.i.h.s16 %v4240
      %v4529 = vunpack.i.l.s16 %v4078
      %v4530 = vrot.slane %v4087, 1
      %v4531 = vrot.slane %v4087, 2
      %v4532 = vrot.slane %v4087, 3
      %v4533 = vrot.slane %v4087, 4
      %v4534 = vrot.slane %v4087, 5
      %v4535 = vrot.slane %v4087, 6
      %v4536 = vrot.slane %v4087, 7
      %v4537 = vpack.i.b16 %v4242, %v4241
      %v4538 = vpack.i.b16 %v4244, %v4243
      %v4539 = vpack.i.b16 %v4246, %v4245
      %v4540 = vpack.i.b16 %v4248, %v4247
      %v4541 = vpack.i.b16 %v4250, %v4249
      %v4542 = vpack.i.b16 %v4252, %v4251
      %v4543 = vpack.i.b16 %v4254, %v4253
      %v4544 = vpack.i.b16 %v4256, %v4255
      %v4545 = vpack.i.b16 %v4258, %v4257
      %v4546 = vpack.i.b16 %v4260, %v4259
      %v4547 = vpack.i.b16 %v4262, %v4261
      %v4548 = vpack.i.b16 %v4264, %v4263
      %v4549 = vpack.i.b16 %v4266, %v4265
      %v4550 = vpack.i.b16 %v4268, %v4267
      %v4551 = vpack.i.b16 %v4270, %v4269
      %v4552 = vpack.i.b16 %v4272, %v4271
      %v4553 = vpack.i.b16 %v4274, %v4273
      %v4554 = vpack.i.b16 %v4276, %v4275
      %v4555 = vpack.i.b16 %v4278, %v4277
      %v4556 = vpack.i.b16 %v4280, %v4279
      %v4557 = vpack.i.b16 %v4282, %v4281
      %v4558 = vpack.i.b16 %v4284, %v4283
      %v4559 = vpack.i.b16 %v4286, %v4285
      %v4560 = vpack.i.b16 %v4288, %v4287
      %v4561 = vpack.i.b16 %v4290, %v4289
      %v4562 = vpack.i.b16 %v4292, %v4291
      %v4563 = vpack.i.b16 %v4294, %v4293
      %v4564 = vpack.i.b16 %v4296, %v4295
      %v4565 = vpack.i.b16 %v4298, %v4297
      %v4566 = vpack.i.b16 %v4300, %v4299
      %v4567 = vpack.i.b16 %v4302, %v4301
      %v4568 = vpack.i.b16 %v4304, %v4303
      %v4569 = vpack.i.b16 %v4306, %v4305
      %v4570 = vpack.i.b16 %v4308, %v4307
      %v4571 = vpack.i.b16 %v4310, %v4309
      %v4572 = vpack.i.b16 %v4312, %v4311
      %v4573 = vpack.i.b16 %v4314, %v4313
      %v4574 = vpack.i.b16 %v4316, %v4315
      %v4575 = vpack.i.b16 %v4318, %v4317
      %v4576 = vpack.i.b16 %v4320, %v4319
      %v4577 = vpack.i.b16 %v4322, %v4321
      %v4578 = vpack.i.b16 %v4324, %v4323
      %v4579 = vpack.i.b16 %v4326, %v4325
      %v4580 = vpack.i.b16 %v4328, %v4327
      %v4581 = vpack.i.b16 %v4330, %v4329
      %v4582 = vpack.i.b16 %v4332, %v4331
      %v4583 = vpack.i.b16 %v4334, %v4333
      %v4584 = vpack.i.b16 %v4336, %v4335
      %v4585 = vpack.i.b16 %v4338, %v4337
      %v4586 = vpack.i.b16 %v4340, %v4339
      %v4587 = vpack.i.b16 %v4342, %v4341
      %v4588 = vpack.i.b16 %v4344, %v4343
      %v4589 = vpack.i.b16 %v4346, %v4345
      %v4590 = vpack.i.b16 %v4348, %v4347
      %v4591 = vpack.i.b16 %v4350, %v4349
      %v4592 = vpack.i.b16 %v4352, %v4351
      %v4593 = vpack.i.b16 %v4354, %v4353
      %v4594 = vpack.i.b16 %v4356, %v4355
      %v4595 = vpack.i.b16 %v4358, %v4357
      %v4596 = vpack.i.b16 %v4360, %v4359
      %v4597 = vpack.i.b16 %v4362, %v4361
      %v4598 = vpack.i.b16 %v4364, %v4363
      %v4599 = vpack.i.b16 %v4366, %v4365
      %v4600 = vpack.i.b16 %v4368, %v4367
      %v4601 = vpack.i.b16 %v4370, %v4369
      %v4602 = vpack.i.b16 %v4372, %v4371
      %v4603 = vpack.i.b16 %v4374, %v4373
      %v4604 = vpack.i.b16 %v4376, %v4375
      %v4605 = vpack.i.b16 %v4378, %v4377
      %v4606 = vpack.i.b16 %v4380, %v4379
      %v4607 = vpack.i.b16 %v4382, %v4381
      %v4608 = vpack.i.b16 %v4384, %v4383
      %v4609 = vpack.i.b16 %v4386, %v4385
      %v4610 = vpack.i.b16 %v4388, %v4387
      %v4611 = vpack.i.b16 %v4390, %v4389
      %v4612 = vpack.i.b16 %v4392, %v4391
      %v4613 = vpack.i.b16 %v4394, %v4393
      %v4614 = vpack.i.b16 %v4396, %v4395
      %v4615 = vpack.i.b16 %v4398, %v4397
      %v4616 = vpack.i.b16 %v4400, %v4399
      %v4617 = vpack.i.b16 %v4402, %v4401
      %v4618 = vpack.i.b16 %v4404, %v4403
      %v4619 = vpack.i.b16 %v4406, %v4405
      %v4620 = vpack.i.b16 %v4408, %v4407
      %v4621 = vpack.i.b16 %v4410, %v4409
      %v4622 = vpack.i.b16 %v4412, %v4411
      %v4623 = vpack.i.b16 %v4414, %v4413
      %v4624 = vpack.i.b16 %v4416, %v4415
      %v4625 = vpack.i.b16 %v4418, %v4417
      %v4626 = vpack.i.b16 %v4420, %v4419
      %v4627 = vpack.i.b16 %v4422, %v4421
      %v4628 = vpack.i.b16 %v4424, %v4423
      %v4629 = vpack.i.b16 %v4426, %v4425
      %v4630 = vpack.i.b16 %v4428, %v4427
      %v4631 = vpack.i.b16 %v4430, %v4429
      %v4632 = vpack.i.b16 %v4432, %v4431
      %v4633 = vpack.i.b16 %v4434, %v4433
      %v4634 = vpack.i.b16 %v4436, %v4435
      %v4635 = vpack.i.b16 %v4438, %v4437
      %v4636 = vpack.i.b16 %v4440, %v4439
      %v4637 = vpack.i.b16 %v4442, %v4441
      %v4638 = vpack.i.b16 %v4444, %v4443
      %v4639 = vpack.i.b16 %v4446, %v4445
      %v4640 = vpack.i.b16 %v4448, %v4447
      %v4641 = vpack.i.b16 %v4450, %v4449
      %v4642 = vpack.i.b16 %v4452, %v4451
      %v4643 = vpack.i.b16 %v4454, %v4453
      %v4644 = vpack.i.b16 %v4456, %v4455
      %v4645 = vpack.i.b16 %v4458, %v4457
      %v4646 = vpack.i.b16 %v4460, %v4459
      %v4647 = vpack.i.b16 %v4462, %v4461
      %v4648 = vpack.i.b16 %v4464, %v4463
      %v4649 = vpack.i.b16 %v4466, %v4465
      %v4650 = vpack.i.b16 %v4468, %v4467
      %v4651 = vpack.i.b16 %v4470, %v4469
      %v4652 = vpack.i.b16 %v4472, %v4471
      %v4653 = vpack.i.b16 %v4474, %v4473
      %v4654 = vpack.i.b16 %v4476, %v4475
      %v4655 = vpack.i.b16 %v4478, %v4477
      %v4656 = vpack.i.b16 %v4480, %v4479
      %v4657 = vpack.i.b16 %v4482, %v4481
      %v4658 = vpack.i.b16 %v4484, %v4483
      %v4659 = vpack.i.b16 %v4486, %v4485
      %v4660 = vpack.i.b16 %v4488, %v4487
      %v4661 = vpack.i.b16 %v4490, %v4489
      %v4662 = vpack.i.b16 %v4492, %v4491
      %v4663 = vpack.i.b16 %v4494, %v4493
      %v4664 = vpack.i.b16 %v4496, %v4495
      %v4665 = vpack.i.b16 %v4498, %v4497
      %v4666 = vpack.i.b16 %v4500, %v4499
      %v4667 = vpack.i.b16 %v4502, %v4501
      %v4668 = vpack.i.b16 %v4504, %v4503
      %v4669 = vpack.i.b16 %v4506, %v4505
      %v4670 = vpack.i.b16 %v4508, %v4507
      %v4671 = vpack.i.b16 %v4510, %v4509
      %v4672 = vpack.i.b16 %v4512, %v4511
      %v4673 = vpack.i.b16 %v4514, %v4513
      %v4674 = vpack.i.b16 %v4516, %v4515
      %v4675 = vpack.i.b16 %v4518, %v4517
      %v4676 = vpack.i.b16 %v4520, %v4519
      %v4677 = vpack.i.b16 %v4522, %v4521
      %v4678 = vpack.i.b16 %v4524, %v4523
      %v4679 = vpack.i.b16 %v4526, %v4525
      %v4680 = vpack.i.b16 %v4528, %v4527
      %4683 = vst [vmem:[#allocation1] ss:$9 sm:$0xff] %v4537
      %s4685 = scalar_lea.vmem [#allocation1], 1
      %4686 = vst [vmem:[%s4685] ss:$9 sm:$0xff] %v4538
      %s4688 = scalar_lea.vmem [#allocation1], 2
      %4689 = vst [vmem:[%s4688] ss:$9 sm:$0xff] %v4539
      %s4691 = scalar_lea.vmem [#allocation1], 3
      %4692 = vst [vmem:[%s4691] ss:$9 sm:$0xff] %v4540
      %s4694 = scalar_lea.vmem [#allocation1], 4
      %4695 = vst [vmem:[%s4694] ss:$9 sm:$0xff] %v4541
      %s4697 = scalar_lea.vmem [#allocation1], 5
      %4698 = vst [vmem:[%s4697] ss:$9 sm:$0xff] %v4542
      %s4700 = scalar_lea.vmem [#allocation1], 6
      %4701 = vst [vmem:[%s4700] ss:$9 sm:$0xff] %v4543
      %s4703 = scalar_lea.vmem [#allocation1], 7
      %4704 = vst [vmem:[%s4703] ss:$9 sm:$0xff] %v4544
      %v4705 = vld [vmem:[#allocation1] sm:$0xff]
      %4707 = vst [vmem:[#allocation1] ss:$9 sm:$0xff] %v4545
      %4709 = vst [vmem:[%s4685] ss:$9 sm:$0xff] %v4546
      %4711 = vst [vmem:[%s4688] ss:$9 sm:$0xff] %v4547
      %4713 = vst [vmem:[%s4691] ss:$9 sm:$0xff] %v4548
      %4715 = vst [vmem:[%s4694] ss:$9 sm:$0xff] %v4549
      %4717 = vst [vmem:[%s4697] ss:$9 sm:$0xff] %v4550
      %4719 = vst [vmem:[%s4700] ss:$9 sm:$0xff] %v4551
      %4721 = vst [vmem:[%s4703] ss:$9 sm:$0xff] %v4552
      %v4722 = vld [vmem:[#allocation1] sm:$0xff]
      %4724 = vst [vmem:[#allocation1] ss:$9 sm:$0xff] %v4553
      %4726 = vst [vmem:[%s4685] ss:$9 sm:$0xff] %v4554
      %4728 = vst [vmem:[%s4688] ss:$9 sm:$0xff] %v4555
      %4730 = vst [vmem:[%s4691] ss:$9 sm:$0xff] %v4556
      %4732 = vst [vmem:[%s4694] ss:$9 sm:$0xff] %v4557
      %4734 = vst [vmem:[%s4697] ss:$9 sm:$0xff] %v4558
      %4736 = vst [vmem:[%s4700] ss:$9 sm:$0xff] %v4559
      %4738 = vst [vmem:[%s4703] ss:$9 sm:$0xff] %v4560
      %v4739 = vld [vmem:[#allocation1] sm:$0xff]
      %4741 = vst [vmem:[#allocation1] ss:$9 sm:$0xff] %v4561
      %4743 = vst [vmem:[%s4685] ss:$9 sm:$0xff] %v4562
      %4745 = vst [vmem:[%s4688] ss:$9 sm:$0xff] %v4563
      %4747 = vst [vmem:[%s4691] ss:$9 sm:$0xff] %v4564
      %4749 = vst [vmem:[%s4694] ss:$9 sm:$0xff] %v4565
      %4751 = vst [vmem:[%s4697] ss:$9 sm:$0xff] %v4566
      %4753 = vst [vmem:[%s4700] ss:$9 sm:$0xff] %v4567
      %4755 = vst [vmem:[%s4703] ss:$9 sm:$0xff] %v4568
      %v4756 = vld [vmem:[#allocation1] sm:$0xff]
      %4758 = vst [vmem:[#allocation1] ss:$9 sm:$0xff] %v4569
      %4760 = vst [vmem:[%s4685] ss:$9 sm:$0xff] %v4570
      %4762 = vst [vmem:[%s4688] ss:$9 sm:$0xff] %v4571
      %4764 = vst [vmem:[%s4691] ss:$9 sm:$0xff] %v4572
      %4766 = vst [vmem:[%s4694] ss:$9 sm:$0xff] %v4573
      %4768 = vst [vmem:[%s4697] ss:$9 sm:$0xff] %v4574
      %4770 = vst [vmem:[%s4700] ss:$9 sm:$0xff] %v4575
      %4772 = vst [vmem:[%s4703] ss:$9 sm:$0xff] %v4576
      %v4773 = vld [vmem:[#allocation1] sm:$0xff]
      %4775 = vst [vmem:[#allocation1] ss:$9 sm:$0xff] %v4577
      %4777 = vst [vmem:[%s4685] ss:$9 sm:$0xff] %v4578
      %4779 = vst [vmem:[%s4688] ss:$9 sm:$0xff] %v4579
      %4781 = vst [vmem:[%s4691] ss:$9 sm:$0xff] %v4580
      %4783 = vst [vmem:[%s4694] ss:$9 sm:$0xff] %v4581
      %4785 = vst [vmem:[%s4697] ss:$9 sm:$0xff] %v4582
      %4787 = vst [vmem:[%s4700] ss:$9 sm:$0xff] %v4583
      %4789 = vst [vmem:[%s4703] ss:$9 sm:$0xff] %v4584
      %v4790 = vld [vmem:[#allocation1] sm:$0xff]
      %4792 = vst [vmem:[#allocation1] ss:$9 sm:$0xff] %v4585
      %4794 = vst [vmem:[%s4685] ss:$9 sm:$0xff] %v4586
      %4796 = vst [vmem:[%s4688] ss:$9 sm:$0xff] %v4587
      %4798 = vst [vmem:[%s4691] ss:$9 sm:$0xff] %v4588
      %4800 = vst [vmem:[%s4694] ss:$9 sm:$0xff] %v4589
      %4802 = vst [vmem:[%s4697] ss:$9 sm:$0xff] %v4590
      %4804 = vst [vmem:[%s4700] ss:$9 sm:$0xff] %v4591
      %4806 = vst [vmem:[%s4703] ss:$9 sm:$0xff] %v4592
      %v4807 = vld [vmem:[#allocation1] sm:$0xff]
      %4809 = vst [vmem:[#allocation1] ss:$9 sm:$0xff] %v4593
      %4811 = vst [vmem:[%s4685] ss:$9 sm:$0xff] %v4594
      %4813 = vst [vmem:[%s4688] ss:$9 sm:$0xff] %v4595
      %4815 = vst [vmem:[%s4691] ss:$9 sm:$0xff] %v4596
      %4817 = vst [vmem:[%s4694] ss:$9 sm:$0xff] %v4597
      %4819 = vst [vmem:[%s4697] ss:$9 sm:$0xff] %v4598
      %4821 = vst [vmem:[%s4700] ss:$9 sm:$0xff] %v4599
      %4823 = vst [vmem:[%s4703] ss:$9 sm:$0xff] %v4600
      %v4824 = vld [vmem:[#allocation1] sm:$0xff]
      %4826 = vst [vmem:[#allocation1] ss:$9 sm:$0xff] %v4601
      %4828 = vst [vmem:[%s4685] ss:$9 sm:$0xff] %v4602
      %4830 = vst [vmem:[%s4688] ss:$9 sm:$0xff] %v4603
      %4832 = vst [vmem:[%s4691] ss:$9 sm:$0xff] %v4604
      %4834 = vst [vmem:[%s4694] ss:$9 sm:$0xff] %v4605
      %4836 = vst [vmem:[%s4697] ss:$9 sm:$0xff] %v4606
      %4838 = vst [vmem:[%s4700] ss:$9 sm:$0xff] %v4607
      %4840 = vst [vmem:[%s4703] ss:$9 sm:$0xff] %v4608
      %v4841 = vld [vmem:[#allocation1] sm:$0xff]
      %4843 = vst [vmem:[#allocation1] ss:$9 sm:$0xff] %v4609
      %4845 = vst [vmem:[%s4685] ss:$9 sm:$0xff] %v4610
      %4847 = vst [vmem:[%s4688] ss:$9 sm:$0xff] %v4611
      %4849 = vst [vmem:[%s4691] ss:$9 sm:$0xff] %v4612
      %4851 = vst [vmem:[%s4694] ss:$9 sm:$0xff] %v4613
      %4853 = vst [vmem:[%s4697] ss:$9 sm:$0xff] %v4614
      %4855 = vst [vmem:[%s4700] ss:$9 sm:$0xff] %v4615
      %4857 = vst [vmem:[%s4703] ss:$9 sm:$0xff] %v4616
      %v4858 = vld [vmem:[#allocation1] sm:$0xff]
      %4860 = vst [vmem:[#allocation1] ss:$9 sm:$0xff] %v4617
      %4862 = vst [vmem:[%s4685] ss:$9 sm:$0xff] %v4618
      %4864 = vst [vmem:[%s4688] ss:$9 sm:$0xff] %v4619
      %4866 = vst [vmem:[%s4691] ss:$9 sm:$0xff] %v4620
      %4868 = vst [vmem:[%s4694] ss:$9 sm:$0xff] %v4621
      %4870 = vst [vmem:[%s4697] ss:$9 sm:$0xff] %v4622
      %4872 = vst [vmem:[%s4700] ss:$9 sm:$0xff] %v4623
      %4874 = vst [vmem:[%s4703] ss:$9 sm:$0xff] %v4624
      %v4875 = vld [vmem:[#allocation1] sm:$0xff]
      %4877 = vst [vmem:[#allocation1] ss:$9 sm:$0xff] %v4625
      %4879 = vst [vmem:[%s4685] ss:$9 sm:$0xff] %v4626
      %4881 = vst [vmem:[%s4688] ss:$9 sm:$0xff] %v4627
      %4883 = vst [vmem:[%s4691] ss:$9 sm:$0xff] %v4628
      %4885 = vst [vmem:[%s4694] ss:$9 sm:$0xff] %v4629
      %4887 = vst [vmem:[%s4697] ss:$9 sm:$0xff] %v4630
      %4889 = vst [vmem:[%s4700] ss:$9 sm:$0xff] %v4631
      %4891 = vst [vmem:[%s4703] ss:$9 sm:$0xff] %v4632
      %v4892 = vld [vmem:[#allocation1] sm:$0xff]
      %4894 = vst [vmem:[#allocation1] ss:$9 sm:$0xff] %v4633
      %4896 = vst [vmem:[%s4685] ss:$9 sm:$0xff] %v4634
      %4898 = vst [vmem:[%s4688] ss:$9 sm:$0xff] %v4635
      %4900 = vst [vmem:[%s4691] ss:$9 sm:$0xff] %v4636
      %4902 = vst [vmem:[%s4694] ss:$9 sm:$0xff] %v4637
      %4904 = vst [vmem:[%s4697] ss:$9 sm:$0xff] %v4638
      %4906 = vst [vmem:[%s4700] ss:$9 sm:$0xff] %v4639
      %4908 = vst [vmem:[%s4703] ss:$9 sm:$0xff] %v4640
      %v4909 = vld [vmem:[#allocation1] sm:$0xff]
      %4911 = vst [vmem:[#allocation1] ss:$9 sm:$0xff] %v4641
      %4913 = vst [vmem:[%s4685] ss:$9 sm:$0xff] %v4642
      %4915 = vst [vmem:[%s4688] ss:$9 sm:$0xff] %v4643
      %4917 = vst [vmem:[%s4691] ss:$9 sm:$0xff] %v4644
      %4919 = vst [vmem:[%s4694] ss:$9 sm:$0xff] %v4645
      %4921 = vst [vmem:[%s4697] ss:$9 sm:$0xff] %v4646
      %4923 = vst [vmem:[%s4700] ss:$9 sm:$0xff] %v4647
      %4925 = vst [vmem:[%s4703] ss:$9 sm:$0xff] %v4648
      %v4926 = vld [vmem:[#allocation1] sm:$0xff]
      %4928 = vst [vmem:[#allocation1] ss:$9 sm:$0xff] %v4649
      %4930 = vst [vmem:[%s4685] ss:$9 sm:$0xff] %v4650
      %4932 = vst [vmem:[%s4688] ss:$9 sm:$0xff] %v4651
      %4934 = vst [vmem:[%s4691] ss:$9 sm:$0xff] %v4652
      %4936 = vst [vmem:[%s4694] ss:$9 sm:$0xff] %v4653
      %4938 = vst [vmem:[%s4697] ss:$9 sm:$0xff] %v4654
      %4940 = vst [vmem:[%s4700] ss:$9 sm:$0xff] %v4655
      %4942 = vst [vmem:[%s4703] ss:$9 sm:$0xff] %v4656
      %v4943 = vld [vmem:[#allocation1] sm:$0xff]
      %4945 = vst [vmem:[#allocation1] ss:$9 sm:$0xff] %v4657
      %4947 = vst [vmem:[%s4685] ss:$9 sm:$0xff] %v4658
      %4949 = vst [vmem:[%s4688] ss:$9 sm:$0xff] %v4659
      %4951 = vst [vmem:[%s4691] ss:$9 sm:$0xff] %v4660
      %4953 = vst [vmem:[%s4694] ss:$9 sm:$0xff] %v4661
      %4955 = vst [vmem:[%s4697] ss:$9 sm:$0xff] %v4662
      %4957 = vst [vmem:[%s4700] ss:$9 sm:$0xff] %v4663
      %4959 = vst [vmem:[%s4703] ss:$9 sm:$0xff] %v4664
      %v4960 = vld [vmem:[#allocation1] sm:$0xff]
      %4962 = vst [vmem:[#allocation1] ss:$9 sm:$0xff] %v4665
      %4964 = vst [vmem:[%s4685] ss:$9 sm:$0xff] %v4666
      %4966 = vst [vmem:[%s4688] ss:$9 sm:$0xff] %v4667
      %4968 = vst [vmem:[%s4691] ss:$9 sm:$0xff] %v4668
      %4970 = vst [vmem:[%s4694] ss:$9 sm:$0xff] %v4669
      %4972 = vst [vmem:[%s4697] ss:$9 sm:$0xff] %v4670
      %4974 = vst [vmem:[%s4700] ss:$9 sm:$0xff] %v4671
      %4976 = vst [vmem:[%s4703] ss:$9 sm:$0xff] %v4672
      %v4977 = vld [vmem:[#allocation1] sm:$0xff]
      %4979 = vst [vmem:[#allocation1] ss:$9 sm:$0xff] %v4673
      %4981 = vst [vmem:[%s4685] ss:$9 sm:$0xff] %v4674
      %4983 = vst [vmem:[%s4688] ss:$9 sm:$0xff] %v4675
      %4985 = vst [vmem:[%s4691] ss:$9 sm:$0xff] %v4676
      %4987 = vst [vmem:[%s4694] ss:$9 sm:$0xff] %v4677
      %4989 = vst [vmem:[%s4697] ss:$9 sm:$0xff] %v4678
      %4991 = vst [vmem:[%s4700] ss:$9 sm:$0xff] %v4679
      %4993 = vst [vmem:[%s4703] ss:$9 sm:$0xff] %v4680
      %v4994 = vld [vmem:[#allocation1] sm:$0xff]
      %4996 = vst [vmem:[#allocation1] ss:$9 sm:$0xff] %v4529
      %v4997 = vld [vmem:[#allocation1] sm:$0xff]
      %v5004 = vunpack.c.l.b16 %v4079
      %v5005 = vunpack.c.l.b16 %v4080
      %v5006 = vunpack.c.l.b16 %v4081
      %v5007 = vunpack.c.l.b16 %v4082
      %v5008 = vunpack.c.l.b16 %v4083
      %v5009 = vunpack.c.l.b16 %v4084
      %v5010 = vpack.c.b16 %v5005, %v5004
      %v5011 = vpack.c.b16 %v5007, %v5006
      %v5012 = vpack.c.b16 %v5009, %v5008
      %5016 = vst [vmem:[#allocation1] ss:$9 sm:$0xff] %v4087
      %s5017 = scalar_lea.vmem [#allocation1], 1
      %5018 = vst [vmem:[%s5017] ss:$9 sm:$0xff] %v4530
      %s5019 = scalar_lea.vmem [#allocation1], 2
      %5020 = vst [vmem:[%s5019] ss:$9 sm:$0xff] %v4531
      %s5021 = scalar_lea.vmem [#allocation1], 3
      %5022 = vst [vmem:[%s5021] ss:$9 sm:$0xff] %v4532
      %s5023 = scalar_lea.vmem [#allocation1], 4
      %5024 = vst [vmem:[%s5023] ss:$9 sm:$0xff] %v4533
      %s5025 = scalar_lea.vmem [#allocation1], 5
      %5026 = vst [vmem:[%s5025] ss:$9 sm:$0xff] %v4534
      %s5027 = scalar_lea.vmem [#allocation1], 6
      %5028 = vst [vmem:[%s5027] ss:$9 sm:$0xff] %v4535
      %s5029 = scalar_lea.vmem [#allocation1], 7
      %5030 = vst [vmem:[%s5029] ss:$9 sm:$0xff] %v4536
      %v5031 = vld [vmem:[#allocation1] sm:$0xff]
      %5032 = vst [vmem:[#allocation1] ss:$9 sm:$0xff] %v4087
      %5033 = vst [vmem:[%s5017] ss:$9 sm:$0xff] %v4530
      %5034 = vst [vmem:[%s5019] ss:$9 sm:$0xff] %v4531
      %5035 = vst [vmem:[%s5021] ss:$9 sm:$0xff] %v4532
      %5036 = vst [vmem:[%s5023] ss:$9 sm:$0xff] %v4533
      %5037 = vst [vmem:[%s5025] ss:$9 sm:$0xff] %v4534
      %5038 = vst [vmem:[%s5027] ss:$9 sm:$0xff] %v4535
      %5039 = vst [vmem:[%s5029] ss:$9 sm:$0xff] %v4536
      %v5040 = vld [vmem:[#allocation1] sm:$0xff]
      %5041 = vst [vmem:[#allocation1] ss:$9 sm:$0xff] %v4087
      %5042 = vst [vmem:[%s5017] ss:$9 sm:$0xff] %v4087
      %5043 = vst [vmem:[%s5019] ss:$9 sm:$0xff] %v4530
      %5044 = vst [vmem:[%s5021] ss:$9 sm:$0xff] %v4531
      %5045 = vst [vmem:[%s5023] ss:$9 sm:$0xff] %v4532
      %5046 = vst [vmem:[%s5025] ss:$9 sm:$0xff] %v4533
      %5047 = vst [vmem:[%s5027] ss:$9 sm:$0xff] %v4534
      %5048 = vst [vmem:[%s5029] ss:$9 sm:$0xff] %v4535
      %v5049 = vld [vmem:[#allocation1] sm:$0xff]
      %5050 = vst [vmem:[#allocation1] ss:$9 sm:$0xff] %v4536
      %5051 = vst [vmem:[%s5017] ss:$9 sm:$0xff] %v4087
      %5052 = vst [vmem:[%s5019] ss:$9 sm:$0xff] %v4530
      %5053 = vst [vmem:[%s5021] ss:$9 sm:$0xff] %v4531
      %5054 = vst [vmem:[%s5023] ss:$9 sm:$0xff] %v4532
      %5055 = vst [vmem:[%s5025] ss:$9 sm:$0xff] %v4533
      %5056 = vst [vmem:[%s5027] ss:$9 sm:$0xff] %v4534
      %5057 = vst [vmem:[%s5029] ss:$9 sm:$0xff] %v4535
      %v5058 = vld [vmem:[#allocation1] sm:$0xff]
      %5059 = vst [vmem:[#allocation1] ss:$9 sm:$0xff] %v4536
      %5060 = vst [vmem:[%s5017] ss:$9 sm:$0xff] %v4087
      %5061 = vst [vmem:[%s5019] ss:$9 sm:$0xff] %v4087
      %5062 = vst [vmem:[%s5021] ss:$9 sm:$0xff] %v4530
      %5063 = vst [vmem:[%s5023] ss:$9 sm:$0xff] %v4531
      %5064 = vst [vmem:[%s5025] ss:$9 sm:$0xff] %v4532
      %5065 = vst [vmem:[%s5027] ss:$9 sm:$0xff] %v4533
      %5066 = vst [vmem:[%s5029] ss:$9 sm:$0xff] %v4534
      %v5067 = vld [vmem:[#allocation1] sm:$0xff]
      %5068 = vst [vmem:[#allocation1] ss:$9 sm:$0xff] %v4535
      %5069 = vst [vmem:[%s5017] ss:$9 sm:$0xff] %v4536
      %5070 = vst [vmem:[%s5019] ss:$9 sm:$0xff] %v4087
      %5071 = vst [vmem:[%s5021] ss:$9 sm:$0xff] %v4530
      %5072 = vst [vmem:[%s5023] ss:$9 sm:$0xff] %v4531
      %5073 = vst [vmem:[%s5025] ss:$9 sm:$0xff] %v4532
      %5074 = vst [vmem:[%s5027] ss:$9 sm:$0xff] %v4533
      %5075 = vst [vmem:[%s5029] ss:$9 sm:$0xff] %v4534
      %v5076 = vld [vmem:[#allocation1] sm:$0xff]
      %5077 = vst [vmem:[#allocation1] ss:$9 sm:$0xff] %v4535
      %5078 = vst [vmem:[%s5017] ss:$9 sm:$0xff] %v4536
      %5079 = vst [vmem:[%s5019] ss:$9 sm:$0xff] %v4087
      %5080 = vst [vmem:[%s5021] ss:$9 sm:$0xff] %v4087
      %5081 = vst [vmem:[%s5023] ss:$9 sm:$0xff] %v4530
      %5082 = vst [vmem:[%s5025] ss:$9 sm:$0xff] %v4531
      %5083 = vst [vmem:[%s5027] ss:$9 sm:$0xff] %v4532
      %5084 = vst [vmem:[%s5029] ss:$9 sm:$0xff] %v4533
      %v5085 = vld [vmem:[#allocation1] sm:$0xff]
      %5086 = vst [vmem:[#allocation1] ss:$9 sm:$0xff] %v4534
      %5087 = vst [vmem:[%s5017] ss:$9 sm:$0xff] %v4535
      %5088 = vst [vmem:[%s5019] ss:$9 sm:$0xff] %v4536
      %5089 = vst [vmem:[%s5021] ss:$9 sm:$0xff] %v4087
      %5090 = vst [vmem:[%s5023] ss:$9 sm:$0xff] %v4530
      %5091 = vst [vmem:[%s5025] ss:$9 sm:$0xff] %v4531
      %5092 = vst [vmem:[%s5027] ss:$9 sm:$0xff] %v4532
      %5093 = vst [vmem:[%s5029] ss:$9 sm:$0xff] %v4533
      %v5094 = vld [vmem:[#allocation1] sm:$0xff]
      %5095 = vst [vmem:[#allocation1] ss:$9 sm:$0xff] %v4534
      %5096 = vst [vmem:[%s5017] ss:$9 sm:$0xff] %v4535
      %5097 = vst [vmem:[%s5019] ss:$9 sm:$0xff] %v4536
      %5098 = vst [vmem:[%s5021] ss:$9 sm:$0xff] %v4087
      %5099 = vst [vmem:[%s5023] ss:$9 sm:$0xff] %v4087
      %5100 = vst [vmem:[%s5025] ss:$9 sm:$0xff] %v4530
      %5101 = vst [vmem:[%s5027] ss:$9 sm:$0xff] %v4531
      %5102 = vst [vmem:[%s5029] ss:$9 sm:$0xff] %v4532
      %v5103 = vld [vmem:[#allocation1] sm:$0xff]
      %5104 = vst [vmem:[#allocation1] ss:$9 sm:$0xff] %v4533
      %5105 = vst [vmem:[%s5017] ss:$9 sm:$0xff] %v4534
      %5106 = vst [vmem:[%s5019] ss:$9 sm:$0xff] %v4535
      %5107 = vst [vmem:[%s5021] ss:$9 sm:$0xff] %v4536
      %5108 = vst [vmem:[%s5023] ss:$9 sm:$0xff] %v4087
      %5109 = vst [vmem:[%s5025] ss:$9 sm:$0xff] %v4530
      %5110 = vst [vmem:[%s5027] ss:$9 sm:$0xff] %v4531
      %5111 = vst [vmem:[%s5029] ss:$9 sm:$0xff] %v4532
      %v5112 = vld [vmem:[#allocation1] sm:$0xff]
      %5113 = vst [vmem:[#allocation1] ss:$9 sm:$0xff] %v4533
      %5114 = vst [vmem:[%s5017] ss:$9 sm:$0xff] %v4534
      %5115 = vst [vmem:[%s5019] ss:$9 sm:$0xff] %v4535
      %5116 = vst [vmem:[%s5021] ss:$9 sm:$0xff] %v4536
      %5117 = vst [vmem:[%s5023] ss:$9 sm:$0xff] %v4087
      %5118 = vst [vmem:[%s5025] ss:$9 sm:$0xff] %v4087
      %5119 = vst [vmem:[%s5027] ss:$9 sm:$0xff] %v4530
      %5120 = vst [vmem:[%s5029] ss:$9 sm:$0xff] %v4531
      %v5121 = vld [vmem:[#allocation1] sm:$0xff]
      %5122 = vst [vmem:[#allocation1] ss:$9 sm:$0xff] %v4532
      %5123 = vst [vmem:[%s5017] ss:$9 sm:$0xff] %v4533
      %5124 = vst [vmem:[%s5019] ss:$9 sm:$0xff] %v4534
      %5125 = vst [vmem:[%s5021] ss:$9 sm:$0xff] %v4535
      %5126 = vst [vmem:[%s5023] ss:$9 sm:$0xff] %v4536
      %5127 = vst [vmem:[%s5025] ss:$9 sm:$0xff] %v4087
      %5128 = vst [vmem:[%s5027] ss:$9 sm:$0xff] %v4530
      %5129 = vst [vmem:[%s5029] ss:$9 sm:$0xff] %v4531
      %v5130 = vld [vmem:[#allocation1] sm:$0xff]
      %5131 = vst [vmem:[#allocation1] ss:$9 sm:$0xff] %v4532
      %5132 = vst [vmem:[%s5017] ss:$9 sm:$0xff] %v4533
      %5133 = vst [vmem:[%s5019] ss:$9 sm:$0xff] %v4534
      %5134 = vst [vmem:[%s5021] ss:$9 sm:$0xff] %v4535
      %5135 = vst [vmem:[%s5023] ss:$9 sm:$0xff] %v4536
      %5136 = vst [vmem:[%s5025] ss:$9 sm:$0xff] %v4087
      %5137 = vst [vmem:[%s5027] ss:$9 sm:$0xff] %v4087
      %5138 = vst [vmem:[%s5029] ss:$9 sm:$0xff] %v4530
      %v5139 = vld [vmem:[#allocation1] sm:$0xff]
      %5140 = vst [vmem:[#allocation1] ss:$9 sm:$0xff] %v4531
      %5141 = vst [vmem:[%s5017] ss:$9 sm:$0xff] %v4532
      %5142 = vst [vmem:[%s5019] ss:$9 sm:$0xff] %v4533
      %5143 = vst [vmem:[%s5021] ss:$9 sm:$0xff] %v4534
      %5144 = vst [vmem:[%s5023] ss:$9 sm:$0xff] %v4535
      %5145 = vst [vmem:[%s5025] ss:$9 sm:$0xff] %v4536
      %5146 = vst [vmem:[%s5027] ss:$9 sm:$0xff] %v4087
      %5147 = vst [vmem:[%s5029] ss:$9 sm:$0xff] %v4530
      %v5148 = vld [vmem:[#allocation1] sm:$0xff]
      %5149 = vst [vmem:[#allocation1] ss:$9 sm:$0xff] %v4531
      %5150 = vst [vmem:[%s5017] ss:$9 sm:$0xff] %v4532
      %5151 = vst [vmem:[%s5019] ss:$9 sm:$0xff] %v4533
      %5152 = vst [vmem:[%s5021] ss:$9 sm:$0xff] %v4534
      %5153 = vst [vmem:[%s5023] ss:$9 sm:$0xff] %v4535
      %5154 = vst [vmem:[%s5025] ss:$9 sm:$0xff] %v4536
      %5155 = vst [vmem:[%s5027] ss:$9 sm:$0xff] %v4087
      %5156 = vst [vmem:[%s5029] ss:$9 sm:$0xff] %v4087
      %v5157 = vld [vmem:[#allocation1] sm:$0xff]
      %5158 = vst [vmem:[#allocation1] ss:$9 sm:$0xff] %v4530
      %5159 = vst [vmem:[%s5017] ss:$9 sm:$0xff] %v4531
      %5160 = vst [vmem:[%s5019] ss:$9 sm:$0xff] %v4532
      %5161 = vst [vmem:[%s5021] ss:$9 sm:$0xff] %v4533
      %5162 = vst [vmem:[%s5023] ss:$9 sm:$0xff] %v4534
      %5163 = vst [vmem:[%s5025] ss:$9 sm:$0xff] %v4535
      %5164 = vst [vmem:[%s5027] ss:$9 sm:$0xff] %v4536
      %5165 = vst [vmem:[%s5029] ss:$9 sm:$0xff] %v4087
      %v5166 = vld [vmem:[#allocation1] sm:$0xff]
      %5167 = vst [vmem:[#allocation1] ss:$9 sm:$0xff] %v4530
      %5168 = vst [vmem:[%s5017] ss:$9 sm:$0xff] %v4531
      %5169 = vst [vmem:[%s5019] ss:$9 sm:$0xff] %v4532
      %5170 = vst [vmem:[%s5021] ss:$9 sm:$0xff] %v4533
      %5171 = vst [vmem:[%s5023] ss:$9 sm:$0xff] %v4534
      %5172 = vst [vmem:[%s5025] ss:$9 sm:$0xff] %v4535
      %5173 = vst [vmem:[%s5027] ss:$9 sm:$0xff] %v4536
      %5174 = vst [vmem:[%s5029] ss:$9 sm:$0xff] %v4087
      %v5175 = vld [vmem:[#allocation1] sm:$0xff]
      %5176 = vst [vmem:[#allocation1] ss:$9 sm:$0xff] %v4087
      %5177 = vst [vmem:[%s5017] ss:$9 sm:$0xff] %v4530
      %5178 = vst [vmem:[%s5019] ss:$9 sm:$0xff] %v4531
      %5179 = vst [vmem:[%s5021] ss:$9 sm:$0xff] %v4532
      %5180 = vst [vmem:[%s5023] ss:$9 sm:$0xff] %v4533
      %5181 = vst [vmem:[%s5025] ss:$9 sm:$0xff] %v4534
      %5182 = vst [vmem:[%s5027] ss:$9 sm:$0xff] %v4535
      %5183 = vst [vmem:[%s5029] ss:$9 sm:$0xff] %v4536
      %v5184 = vld [vmem:[#allocation1] sm:$0xff]
      %5185 = vst [vmem:[#allocation1] ss:$9 sm:$0xff] %v4087
      %5186 = vst [vmem:[%s5017] ss:$9 sm:$0xff] %v4530
      %5187 = vst [vmem:[%s5019] ss:$9 sm:$0xff] %v4531
      %5188 = vst [vmem:[%s5021] ss:$9 sm:$0xff] %v4532
      %5189 = vst [vmem:[%s5023] ss:$9 sm:$0xff] %v4533
      %5190 = vst [vmem:[%s5025] ss:$9 sm:$0xff] %v4534
      %5191 = vst [vmem:[%s5027] ss:$9 sm:$0xff] %v4535
      %5192 = vst [vmem:[%s5029] ss:$9 sm:$0xff] %v4536
      %v5193 = vld [vmem:[#allocation1] sm:$0xff]
      %5194 = vst [vmem:[#allocation1] ss:$9 sm:$0xff] %v4087
      %5195 = vst [vmem:[%s5017] ss:$9 sm:$0xff] %v4087
      %5196 = vst [vmem:[%s5019] ss:$9 sm:$0xff] %v4530
      %5197 = vst [vmem:[%s5021] ss:$9 sm:$0xff] %v4531
      %5198 = vst [vmem:[%s5023] ss:$9 sm:$0xff] %v4532
      %5199 = vst [vmem:[%s5025] ss:$9 sm:$0xff] %v4533
      %5200 = vst [vmem:[%s5027] ss:$9 sm:$0xff] %v4534
      %5201 = vst [vmem:[%s5029] ss:$9 sm:$0xff] %v4535
      %v5202 = vld [vmem:[#allocation1] sm:$0xff]
      %5203 = vst [vmem:[#allocation1] ss:$9 sm:$0xff] %v4536
      %5204 = vst [vmem:[%s5017] ss:$9 sm:$0xff] %v4087
      %5205 = vst [vmem:[%s5019] ss:$9 sm:$0xff] %v4530
      %5206 = vst [vmem:[%s5021] ss:$9 sm:$0xff] %v4531
      %5207 = vst [vmem:[%s5023] ss:$9 sm:$0xff] %v4532
      %5208 = vst [vmem:[%s5025] ss:$9 sm:$0xff] %v4533
      %5209 = vst [vmem:[%s5027] ss:$9 sm:$0xff] %v4534
      %5210 = vst [vmem:[%s5029] ss:$9 sm:$0xff] %v4535
      %v5211 = vld [vmem:[#allocation1] sm:$0xff]
      %5212 = vst [vmem:[#allocation1] ss:$9 sm:$0xff] %v4536
      %5213 = vst [vmem:[%s5017] ss:$9 sm:$0xff] %v4087
      %5214 = vst [vmem:[%s5019] ss:$9 sm:$0xff] %v4087
      %5215 = vst [vmem:[%s5021] ss:$9 sm:$0xff] %v4530
      %5216 = vst [vmem:[%s5023] ss:$9 sm:$0xff] %v4531
      %5217 = vst [vmem:[%s5025] ss:$9 sm:$0xff] %v4532
      %5218 = vst [vmem:[%s5027] ss:$9 sm:$0xff] %v4533
      %5219 = vst [vmem:[%s5029] ss:$9 sm:$0xff] %v4534
      %v5220 = vld [vmem:[#allocation1] sm:$0xff]
      %5221 = vst [vmem:[#allocation1] ss:$9 sm:$0xff] %v4535
      %5222 = vst [vmem:[%s5017] ss:$9 sm:$0xff] %v4536
      %5223 = vst [vmem:[%s5019] ss:$9 sm:$0xff] %v4087
      %5224 = vst [vmem:[%s5021] ss:$9 sm:$0xff] %v4530
      %5225 = vst [vmem:[%s5023] ss:$9 sm:$0xff] %v4531
      %5226 = vst [vmem:[%s5025] ss:$9 sm:$0xff] %v4532
      %5227 = vst [vmem:[%s5027] ss:$9 sm:$0xff] %v4533
      %5228 = vst [vmem:[%s5029] ss:$9 sm:$0xff] %v4534
      %v5229 = vld [vmem:[#allocation1] sm:$0xff]
      %5230 = vst [vmem:[#allocation1] ss:$9 sm:$0xff] %v4535
      %5231 = vst [vmem:[%s5017] ss:$9 sm:$0xff] %v4536
      %5232 = vst [vmem:[%s5019] ss:$9 sm:$0xff] %v4087
      %5233 = vst [vmem:[%s5021] ss:$9 sm:$0xff] %v4087
      %5234 = vst [vmem:[%s5023] ss:$9 sm:$0xff] %v4530
      %5235 = vst [vmem:[%s5025] ss:$9 sm:$0xff] %v4531
      %5236 = vst [vmem:[%s5027] ss:$9 sm:$0xff] %v4532
      %5237 = vst [vmem:[%s5029] ss:$9 sm:$0xff] %v4533
      %v5238 = vld [vmem:[#allocation1] sm:$0xff]
      %5239 = vst [vmem:[#allocation1] ss:$9 sm:$0xff] %v4534
      %5240 = vst [vmem:[%s5017] ss:$9 sm:$0xff] %v4535
      %5241 = vst [vmem:[%s5019] ss:$9 sm:$0xff] %v4536
      %5242 = vst [vmem:[%s5021] ss:$9 sm:$0xff] %v4087
      %5243 = vst [vmem:[%s5023] ss:$9 sm:$0xff] %v4530
      %5244 = vst [vmem:[%s5025] ss:$9 sm:$0xff] %v4531
      %5245 = vst [vmem:[%s5027] ss:$9 sm:$0xff] %v4532
      %5246 = vst [vmem:[%s5029] ss:$9 sm:$0xff] %v4533
      %v5247 = vld [vmem:[#allocation1] sm:$0xff]
      %5248 = vst [vmem:[#allocation1] ss:$9 sm:$0xff] %v4534
      %5249 = vst [vmem:[%s5017] ss:$9 sm:$0xff] %v4535
      %5250 = vst [vmem:[%s5019] ss:$9 sm:$0xff] %v4536
      %5251 = vst [vmem:[%s5021] ss:$9 sm:$0xff] %v4087
      %5252 = vst [vmem:[%s5023] ss:$9 sm:$0xff] %v4087
      %5253 = vst [vmem:[%s5025] ss:$9 sm:$0xff] %v4530
      %5254 = vst [vmem:[%s5027] ss:$9 sm:$0xff] %v4531
      %5255 = vst [vmem:[%s5029] ss:$9 sm:$0xff] %v4532
      %v5256 = vld [vmem:[#allocation1] sm:$0xff]
      %5257 = vst [vmem:[#allocation1] ss:$9 sm:$0xff] %v4533
      %5258 = vst [vmem:[%s5017] ss:$9 sm:$0xff] %v4534
      %5259 = vst [vmem:[%s5019] ss:$9 sm:$0xff] %v4535
      %5260 = vst [vmem:[%s5021] ss:$9 sm:$0xff] %v4536
      %5261 = vst [vmem:[%s5023] ss:$9 sm:$0xff] %v4087
      %5262 = vst [vmem:[%s5025] ss:$9 sm:$0xff] %v4530
      %5263 = vst [vmem:[%s5027] ss:$9 sm:$0xff] %v4531
      %5264 = vst [vmem:[%s5029] ss:$9 sm:$0xff] %v4532
      %v5265 = vld [vmem:[#allocation1] sm:$0xff]
      %5266 = vst [vmem:[#allocation1] ss:$9 sm:$0xff] %v4533
      %5267 = vst [vmem:[%s5017] ss:$9 sm:$0xff] %v4534
      %5268 = vst [vmem:[%s5019] ss:$9 sm:$0xff] %v4535
      %5269 = vst [vmem:[%s5021] ss:$9 sm:$0xff] %v4536
      %5270 = vst [vmem:[%s5023] ss:$9 sm:$0xff] %v4087
      %5271 = vst [vmem:[%s5025] ss:$9 sm:$0xff] %v4087
      %5272 = vst [vmem:[%s5027] ss:$9 sm:$0xff] %v4530
      %5273 = vst [vmem:[%s5029] ss:$9 sm:$0xff] %v4531
      %v5274 = vld [vmem:[#allocation1] sm:$0xff]
      %5275 = vst [vmem:[#allocation1] ss:$9 sm:$0xff] %v4532
      %5276 = vst [vmem:[%s5017] ss:$9 sm:$0xff] %v4533
      %5277 = vst [vmem:[%s5019] ss:$9 sm:$0xff] %v4534
      %5278 = vst [vmem:[%s5021] ss:$9 sm:$0xff] %v4535
      %5279 = vst [vmem:[%s5023] ss:$9 sm:$0xff] %v4536
      %5280 = vst [vmem:[%s5025] ss:$9 sm:$0xff] %v4087
      %5281 = vst [vmem:[%s5027] ss:$9 sm:$0xff] %v4530
      %5282 = vst [vmem:[%s5029] ss:$9 sm:$0xff] %v4531
      %v5283 = vld [vmem:[#allocation1] sm:$0xff]
      %5284 = vst [vmem:[#allocation1] ss:$9 sm:$0xff] %v4532
      %5285 = vst [vmem:[%s5017] ss:$9 sm:$0xff] %v4533
      %5286 = vst [vmem:[%s5019] ss:$9 sm:$0xff] %v4534
      %5287 = vst [vmem:[%s5021] ss:$9 sm:$0xff] %v4535
      %5288 = vst [vmem:[%s5023] ss:$9 sm:$0xff] %v4536
      %5289 = vst [vmem:[%s5025] ss:$9 sm:$0xff] %v4087
      %5290 = vst [vmem:[%s5027] ss:$9 sm:$0xff] %v4087
      %5291 = vst [vmem:[%s5029] ss:$9 sm:$0xff] %v4530
      %v5292 = vld [vmem:[#allocation1] sm:$0xff]
      %5293 = vst [vmem:[#allocation1] ss:$9 sm:$0xff] %v4531
      %5294 = vst [vmem:[%s5017] ss:$9 sm:$0xff] %v4532
      %5295 = vst [vmem:[%s5019] ss:$9 sm:$0xff] %v4533
      %5296 = vst [vmem:[%s5021] ss:$9 sm:$0xff] %v4534
      %5297 = vst [vmem:[%s5023] ss:$9 sm:$0xff] %v4535
      %5298 = vst [vmem:[%s5025] ss:$9 sm:$0xff] %v4536
      %5299 = vst [vmem:[%s5027] ss:$9 sm:$0xff] %v4087
      %5300 = vst [vmem:[%s5029] ss:$9 sm:$0xff] %v4530
      %v5301 = vld [vmem:[#allocation1] sm:$0xff]
      %5302 = vst [vmem:[#allocation1] ss:$9 sm:$0xff] %v4531
      %5303 = vst [vmem:[%s5017] ss:$9 sm:$0xff] %v4532
      %5304 = vst [vmem:[%s5019] ss:$9 sm:$0xff] %v4533
      %5305 = vst [vmem:[%s5021] ss:$9 sm:$0xff] %v4534
      %5306 = vst [vmem:[%s5023] ss:$9 sm:$0xff] %v4535
      %5307 = vst [vmem:[%s5025] ss:$9 sm:$0xff] %v4536
      %5308 = vst [vmem:[%s5027] ss:$9 sm:$0xff] %v4087
      %5309 = vst [vmem:[%s5029] ss:$9 sm:$0xff] %v4087
      %v5310 = vld [vmem:[#allocation1] sm:$0xff]
      %5311 = vst [vmem:[#allocation1] ss:$9 sm:$0xff] %v4530
      %5312 = vst [vmem:[%s5017] ss:$9 sm:$0xff] %v4531
      %5313 = vst [vmem:[%s5019] ss:$9 sm:$0xff] %v4532
      %5314 = vst [vmem:[%s5021] ss:$9 sm:$0xff] %v4533
      %5315 = vst [vmem:[%s5023] ss:$9 sm:$0xff] %v4534
      %5316 = vst [vmem:[%s5025] ss:$9 sm:$0xff] %v4535
      %5317 = vst [vmem:[%s5027] ss:$9 sm:$0xff] %v4536
      %5318 = vst [vmem:[%s5029] ss:$9 sm:$0xff] %v4087
      %v5319 = vld [vmem:[#allocation1] sm:$0xff]
      %5320 = vst [vmem:[#allocation1] ss:$9 sm:$0xff] %v4530
      %5321 = vst [vmem:[%s5017] ss:$9 sm:$0xff] %v4531
      %5322 = vst [vmem:[%s5019] ss:$9 sm:$0xff] %v4532
      %5323 = vst [vmem:[%s5021] ss:$9 sm:$0xff] %v4533
      %5324 = vst [vmem:[%s5023] ss:$9 sm:$0xff] %v4534
      %5325 = vst [vmem:[%s5025] ss:$9 sm:$0xff] %v4535
      %5326 = vst [vmem:[%s5027] ss:$9 sm:$0xff] %v4536
      %5327 = vst [vmem:[%s5029] ss:$9 sm:$0xff] %v4087
      %v5328 = vld [vmem:[#allocation1] sm:$0xff]
      %5329 = vst [vmem:[#allocation1] ss:$9 sm:$0xff] %v4087
      %5330 = vst [vmem:[%s5017] ss:$9 sm:$0xff] %v4530
      %5331 = vst [vmem:[%s5019] ss:$9 sm:$0xff] %v4531
      %5332 = vst [vmem:[%s5021] ss:$9 sm:$0xff] %v4532
      %5333 = vst [vmem:[%s5023] ss:$9 sm:$0xff] %v4533
      %5334 = vst [vmem:[%s5025] ss:$9 sm:$0xff] %v4534
      %5335 = vst [vmem:[%s5027] ss:$9 sm:$0xff] %v4535
      %5336 = vst [vmem:[%s5029] ss:$9 sm:$0xff] %v4536
      %v5337 = vld [vmem:[#allocation1] sm:$0xff]
      %5338 = vst [vmem:[#allocation1] ss:$9 sm:$0xff] %v4087
      %5339 = vst [vmem:[%s5017] ss:$9 sm:$0xff] %v4530
      %5340 = vst [vmem:[%s5019] ss:$9 sm:$0xff] %v4531
      %5341 = vst [vmem:[%s5021] ss:$9 sm:$0xff] %v4532
      %5342 = vst [vmem:[%s5023] ss:$9 sm:$0xff] %v4533
      %5343 = vst [vmem:[%s5025] ss:$9 sm:$0xff] %v4534
      %5344 = vst [vmem:[%s5027] ss:$9 sm:$0xff] %v4535
      %5345 = vst [vmem:[%s5029] ss:$9 sm:$0xff] %v4536
      %v5346 = vld [vmem:[#allocation1] sm:$0xff]
      %5347 = vst [vmem:[#allocation1] ss:$9 sm:$0xff] %v4087
      %v5348 = vld [vmem:[#allocation1] sm:$0xff]
      %vm5386 = vcmask 392192
      %v5387 = vsel %vm5386, %v4705, 0
      %v5389 = vsel %vm5386, %v4722, 0
      %v5391 = vsel %vm5386, %v4739, 0
      %v5393 = vsel %vm5386, %v4756, 0
      %v5395 = vsel %vm5386, %v4773, 0
      %v5397 = vsel %vm5386, %v4790, 0
      %v5399 = vsel %vm5386, %v4807, 0
      %v5401 = vsel %vm5386, %v4824, 0
      %v5403 = vsel %vm5386, %v4841, 0
      %v5405 = vsel %vm5386, %v4858, 0
      %v5407 = vsel %vm5386, %v4875, 0
      %v5409 = vsel %vm5386, %v4892, 0
      %v5411 = vsel %vm5386, %v4909, 0
      %v5413 = vsel %vm5386, %v4926, 0
      %v5415 = vsel %vm5386, %v4943, 0
      %v5417 = vsel %vm5386, %v4960, 0
      %v5419 = vsel %vm5386, %v4977, 0
      %v5421 = vsel %vm5386, %v4994, 0
      %v5423 = vsel %vm5386, %v4997, 0
      %5425 = vmatpush.bf16.msra.mxu0 0
      %5426 = vmatpush.bf16.msra.mxu0 0
      %5427 = vmatpush.bf16.msra.mxu0 0
      %5428 = vmatpush.bf16.msra.mxu0 0
      %5429 = vmatpush.bf16.msra.mxu0 0
      %5430 = vmatpush.bf16.msra.mxu0 %v5012
      %5431 = vmatpush.bf16.msra.mxu0 %v5011
      %5432 = vmatpush.bf16.msra.mxu0 %v5010
      %5433 = vmatmul.bf16.gmra.mxu0 %v5387
      %v5434 = vpop.f32.mrf.mxu0
      %v5435 = vadd.f32 %v5031, %v5434
      %v5436 = vpop.f32.mrf.mxu0
      %v5437 = vadd.f32 %v5040, %v5436
      %5438 = vmatmul.bf16.gmra.mxu0 %v5389
      %v5439 = vpop.f32.mrf.mxu0
      %v5440 = vadd.f32 %v5049, %v5439
      %v5441 = vpop.f32.mrf.mxu0
      %v5442 = vadd.f32 %v5058, %v5441
      %5443 = vmatmul.bf16.gmra.mxu0 %v5391
      %v5444 = vpop.f32.mrf.mxu0
      %v5445 = vadd.f32 %v5067, %v5444
      %v5446 = vpop.f32.mrf.mxu0
      %v5447 = vadd.f32 %v5076, %v5446
      %5448 = vmatmul.bf16.gmra.mxu0 %v5393
      %v5449 = vpop.f32.mrf.mxu0
      %v5450 = vadd.f32 %v5085, %v5449
      %v5451 = vpop.f32.mrf.mxu0
      %v5452 = vadd.f32 %v5094, %v5451
      %5453 = vmatmul.bf16.gmra.mxu0 %v5395
      %v5454 = vpop.f32.mrf.mxu0
      %v5455 = vadd.f32 %v5103, %v5454
      %v5456 = vpop.f32.mrf.mxu0
      %v5457 = vadd.f32 %v5112, %v5456
      %5458 = vmatmul.bf16.gmra.mxu0 %v5397
      %v5459 = vpop.f32.mrf.mxu0
      %v5460 = vadd.f32 %v5121, %v5459
      %v5461 = vpop.f32.mrf.mxu0
      %v5462 = vadd.f32 %v5130, %v5461
      %5463 = vmatmul.bf16.gmra.mxu0 %v5399
      %v5464 = vpop.f32.mrf.mxu0
      %v5465 = vadd.f32 %v5139, %v5464
      %v5466 = vpop.f32.mrf.mxu0
      %v5467 = vadd.f32 %v5148, %v5466
      %5468 = vmatmul.bf16.gmra.mxu0 %v5401
      %v5469 = vpop.f32.mrf.mxu0
      %v5470 = vadd.f32 %v5157, %v5469
      %v5471 = vpop.f32.mrf.mxu0
      %v5472 = vadd.f32 %v5166, %v5471
      %5473 = vmatmul.bf16.gmra.mxu0 %v5403
      %v5474 = vpop.f32.mrf.mxu0
      %v5475 = vadd.f32 %v5175, %v5474
      %v5476 = vpop.f32.mrf.mxu0
      %v5477 = vadd.f32 %v5184, %v5476
      %5478 = vmatmul.bf16.gmra.mxu0 %v5405
      %v5479 = vpop.f32.mrf.mxu0
      %v5480 = vadd.f32 %v5193, %v5479
      %v5481 = vpop.f32.mrf.mxu0
      %v5482 = vadd.f32 %v5202, %v5481
      %5483 = vmatmul.bf16.gmra.mxu0 %v5407
      %v5484 = vpop.f32.mrf.mxu0
      %v5485 = vadd.f32 %v5211, %v5484
      %v5486 = vpop.f32.mrf.mxu0
      %v5487 = vadd.f32 %v5220, %v5486
      %5488 = vmatmul.bf16.gmra.mxu0 %v5409
      %v5489 = vpop.f32.mrf.mxu0
      %v5490 = vadd.f32 %v5229, %v5489
      %v5491 = vpop.f32.mrf.mxu0
      %v5492 = vadd.f32 %v5238, %v5491
      %5493 = vmatmul.bf16.gmra.mxu0 %v5411
      %v5494 = vpop.f32.mrf.mxu0
      %v5495 = vadd.f32 %v5247, %v5494
      %v5496 = vpop.f32.mrf.mxu0
      %v5497 = vadd.f32 %v5256, %v5496
      %5498 = vmatmul.bf16.gmra.mxu0 %v5413
      %v5499 = vpop.f32.mrf.mxu0
      %v5500 = vadd.f32 %v5265, %v5499
      %v5501 = vpop.f32.mrf.mxu0
      %v5502 = vadd.f32 %v5274, %v5501
      %5503 = vmatmul.bf16.gmra.mxu0 %v5415
      %v5504 = vpop.f32.mrf.mxu0
      %v5505 = vadd.f32 %v5283, %v5504
      %v5506 = vpop.f32.mrf.mxu0
      %v5507 = vadd.f32 %v5292, %v5506
      %5508 = vmatmul.bf16.gmra.mxu0 %v5417
      %v5509 = vpop.f32.mrf.mxu0
      %v5510 = vadd.f32 %v5301, %v5509
      %v5511 = vpop.f32.mrf.mxu0
      %v5512 = vadd.f32 %v5310, %v5511
      %5513 = vmatmul.bf16.gmra.mxu0 %v5419
      %v5514 = vpop.f32.mrf.mxu0
      %v5515 = vadd.f32 %v5319, %v5514
      %v5516 = vpop.f32.mrf.mxu0
      %v5517 = vadd.f32 %v5328, %v5516
      %5518 = vmatmul.bf16.gmra.mxu0 %v5421
      %v5519 = vpop.f32.mrf.mxu0
      %v5520 = vadd.f32 %v5337, %v5519
      %v5521 = vpop.f32.mrf.mxu0
      %v5522 = vadd.f32 %v5346, %v5521
      %5523 = vmatmul.bf16.gmra.mxu0 %v5423
      %v5524 = vpop.f32.mrf.mxu0
      %v5525 = vadd.f32 %v5348, %v5524
      %v5526 = vpop.f32.mrf.mxu0
      %5527 = vdwg.mxu0
      %v5564 = vrot.slane %v5435, 1
      %v5565 = vrot.slane %v5435, 2
      %v5566 = vrot.slane %v5435, 3
      %v5567 = vrot.slane %v5435, 4
      %v5568 = vrot.slane %v5435, 5
      %v5569 = vrot.slane %v5435, 6
      %v5570 = vrot.slane %v5435, 7
      %v5571 = vrot.slane %v5437, 1
      %v5572 = vrot.slane %v5437, 2
      %v5573 = vrot.slane %v5437, 3
      %v5574 = vrot.slane %v5437, 4
      %v5575 = vrot.slane %v5437, 5
      %v5576 = vrot.slane %v5437, 6
      %v5577 = vrot.slane %v5437, 7
      %v5578 = vrot.slane %v5440, 1
      %v5579 = vrot.slane %v5440, 2
      %v5580 = vrot.slane %v5440, 3
      %v5581 = vrot.slane %v5440, 4
      %v5582 = vrot.slane %v5440, 5
      %v5583 = vrot.slane %v5440, 6
      %v5584 = vrot.slane %v5440, 7
      %v5585 = vrot.slane %v5442, 1
      %v5586 = vrot.slane %v5442, 2
      %v5587 = vrot.slane %v5442, 3
      %v5588 = vrot.slane %v5442, 4
      %v5589 = vrot.slane %v5442, 5
      %v5590 = vrot.slane %v5442, 6
      %v5591 = vrot.slane %v5442, 7
      %v5592 = vrot.slane %v5445, 1
      %v5593 = vrot.slane %v5445, 2
      %v5594 = vrot.slane %v5445, 3
      %v5595 = vrot.slane %v5445, 4
      %v5596 = vrot.slane %v5445, 5
      %v5597 = vrot.slane %v5445, 6
      %v5598 = vrot.slane %v5445, 7
      %v5599 = vrot.slane %v5447, 1
      %v5600 = vrot.slane %v5447, 2
      %v5601 = vrot.slane %v5447, 3
      %v5602 = vrot.slane %v5447, 4
      %v5603 = vrot.slane %v5447, 5
      %v5604 = vrot.slane %v5447, 6
      %v5605 = vrot.slane %v5447, 7
      %v5606 = vrot.slane %v5450, 1
      %v5607 = vrot.slane %v5450, 2
      %v5608 = vrot.slane %v5450, 3
      %v5609 = vrot.slane %v5450, 4
      %v5610 = vrot.slane %v5450, 5
      %v5611 = vrot.slane %v5450, 6
      %v5612 = vrot.slane %v5450, 7
      %v5613 = vrot.slane %v5452, 1
      %v5614 = vrot.slane %v5452, 2
      %v5615 = vrot.slane %v5452, 3
      %v5616 = vrot.slane %v5452, 4
      %v5617 = vrot.slane %v5452, 5
      %v5618 = vrot.slane %v5452, 6
      %v5619 = vrot.slane %v5452, 7
      %v5620 = vrot.slane %v5455, 1
      %v5621 = vrot.slane %v5455, 2
      %v5622 = vrot.slane %v5455, 3
      %v5623 = vrot.slane %v5455, 4
      %v5624 = vrot.slane %v5455, 5
      %v5625 = vrot.slane %v5455, 6
      %v5626 = vrot.slane %v5455, 7
      %v5627 = vrot.slane %v5457, 1
      %v5628 = vrot.slane %v5457, 2
      %v5629 = vrot.slane %v5457, 3
      %v5630 = vrot.slane %v5457, 4
      %v5631 = vrot.slane %v5457, 5
      %v5632 = vrot.slane %v5457, 6
      %v5633 = vrot.slane %v5457, 7
      %v5634 = vrot.slane %v5460, 1
      %v5635 = vrot.slane %v5460, 2
      %v5636 = vrot.slane %v5460, 3
      %v5637 = vrot.slane %v5460, 4
      %v5638 = vrot.slane %v5460, 5
      %v5639 = vrot.slane %v5460, 6
      %v5640 = vrot.slane %v5460, 7
      %v5641 = vrot.slane %v5462, 1
      %v5642 = vrot.slane %v5462, 2
      %v5643 = vrot.slane %v5462, 3
      %v5644 = vrot.slane %v5462, 4
      %v5645 = vrot.slane %v5462, 5
      %v5646 = vrot.slane %v5462, 6
      %v5647 = vrot.slane %v5462, 7
      %v5648 = vrot.slane %v5465, 1
      %v5649 = vrot.slane %v5465, 2
      %v5650 = vrot.slane %v5465, 3
      %v5651 = vrot.slane %v5465, 4
      %v5652 = vrot.slane %v5465, 5
      %v5653 = vrot.slane %v5465, 6
      %v5654 = vrot.slane %v5465, 7
      %v5655 = vrot.slane %v5467, 1
      %v5656 = vrot.slane %v5467, 2
      %v5657 = vrot.slane %v5467, 3
      %v5658 = vrot.slane %v5467, 4
      %v5659 = vrot.slane %v5467, 5
      %v5660 = vrot.slane %v5467, 6
      %v5661 = vrot.slane %v5467, 7
      %v5662 = vrot.slane %v5470, 1
      %v5663 = vrot.slane %v5470, 2
      %v5664 = vrot.slane %v5470, 3
      %v5665 = vrot.slane %v5470, 4
      %v5666 = vrot.slane %v5470, 5
      %v5667 = vrot.slane %v5470, 6
      %v5668 = vrot.slane %v5470, 7
      %v5669 = vrot.slane %v5472, 1
      %v5670 = vrot.slane %v5472, 2
      %v5671 = vrot.slane %v5472, 3
      %v5672 = vrot.slane %v5472, 4
      %v5673 = vrot.slane %v5472, 5
      %v5674 = vrot.slane %v5472, 6
      %v5675 = vrot.slane %v5472, 7
      %v5676 = vrot.slane %v5475, 1
      %v5677 = vrot.slane %v5475, 2
      %v5678 = vrot.slane %v5475, 3
      %v5679 = vrot.slane %v5475, 4
      %v5680 = vrot.slane %v5475, 5
      %v5681 = vrot.slane %v5475, 6
      %v5682 = vrot.slane %v5475, 7
      %v5683 = vrot.slane %v5477, 1
      %v5684 = vrot.slane %v5477, 2
      %v5685 = vrot.slane %v5477, 3
      %v5686 = vrot.slane %v5477, 4
      %v5687 = vrot.slane %v5477, 5
      %v5688 = vrot.slane %v5477, 6
      %v5689 = vrot.slane %v5477, 7
      %v5690 = vrot.slane %v5480, 1
      %v5691 = vrot.slane %v5480, 2
      %v5692 = vrot.slane %v5480, 3
      %v5693 = vrot.slane %v5480, 4
      %v5694 = vrot.slane %v5480, 5
      %v5695 = vrot.slane %v5480, 6
      %v5696 = vrot.slane %v5480, 7
      %v5697 = vrot.slane %v5482, 1
      %v5698 = vrot.slane %v5482, 2
      %v5699 = vrot.slane %v5482, 3
      %v5700 = vrot.slane %v5482, 4
      %v5701 = vrot.slane %v5482, 5
      %v5702 = vrot.slane %v5482, 6
      %v5703 = vrot.slane %v5482, 7
      %v5704 = vrot.slane %v5485, 1
      %v5705 = vrot.slane %v5485, 2
      %v5706 = vrot.slane %v5485, 3
      %v5707 = vrot.slane %v5485, 4
      %v5708 = vrot.slane %v5485, 5
      %v5709 = vrot.slane %v5485, 6
      %v5710 = vrot.slane %v5485, 7
      %v5711 = vrot.slane %v5487, 1
      %v5712 = vrot.slane %v5487, 2
      %v5713 = vrot.slane %v5487, 3
      %v5714 = vrot.slane %v5487, 4
      %v5715 = vrot.slane %v5487, 5
      %v5716 = vrot.slane %v5487, 6
      %v5717 = vrot.slane %v5487, 7
      %v5718 = vrot.slane %v5490, 1
      %v5719 = vrot.slane %v5490, 2
      %v5720 = vrot.slane %v5490, 3
      %v5721 = vrot.slane %v5490, 4
      %v5722 = vrot.slane %v5490, 5
      %v5723 = vrot.slane %v5490, 6
      %v5724 = vrot.slane %v5490, 7
      %v5725 = vrot.slane %v5492, 1
      %v5726 = vrot.slane %v5492, 2
      %v5727 = vrot.slane %v5492, 3
      %v5728 = vrot.slane %v5492, 4
      %v5729 = vrot.slane %v5492, 5
      %v5730 = vrot.slane %v5492, 6
      %v5731 = vrot.slane %v5492, 7
      %v5732 = vrot.slane %v5495, 1
      %v5733 = vrot.slane %v5495, 2
      %v5734 = vrot.slane %v5495, 3
      %v5735 = vrot.slane %v5495, 4
      %v5736 = vrot.slane %v5495, 5
      %v5737 = vrot.slane %v5495, 6
      %v5738 = vrot.slane %v5495, 7
      %v5739 = vrot.slane %v5497, 1
      %v5740 = vrot.slane %v5497, 2
      %v5741 = vrot.slane %v5497, 3
      %v5742 = vrot.slane %v5497, 4
      %v5743 = vrot.slane %v5497, 5
      %v5744 = vrot.slane %v5497, 6
      %v5745 = vrot.slane %v5497, 7
      %v5746 = vrot.slane %v5500, 1
      %v5747 = vrot.slane %v5500, 2
      %v5748 = vrot.slane %v5500, 3
      %v5749 = vrot.slane %v5500, 4
      %v5750 = vrot.slane %v5500, 5
      %v5751 = vrot.slane %v5500, 6
      %v5752 = vrot.slane %v5500, 7
      %v5753 = vrot.slane %v5502, 1
      %v5754 = vrot.slane %v5502, 2
      %v5755 = vrot.slane %v5502, 3
      %v5756 = vrot.slane %v5502, 4
      %v5757 = vrot.slane %v5502, 5
      %v5758 = vrot.slane %v5502, 6
      %v5759 = vrot.slane %v5502, 7
      %v5760 = vrot.slane %v5505, 1
      %v5761 = vrot.slane %v5505, 2
      %v5762 = vrot.slane %v5505, 3
      %v5763 = vrot.slane %v5505, 4
      %v5764 = vrot.slane %v5505, 5
      %v5765 = vrot.slane %v5505, 6
      %v5766 = vrot.slane %v5505, 7
      %v5767 = vrot.slane %v5507, 1
      %v5768 = vrot.slane %v5507, 2
      %v5769 = vrot.slane %v5507, 3
      %v5770 = vrot.slane %v5507, 4
      %v5771 = vrot.slane %v5507, 5
      %v5772 = vrot.slane %v5507, 6
      %v5773 = vrot.slane %v5507, 7
      %v5774 = vrot.slane %v5510, 1
      %v5775 = vrot.slane %v5510, 2
      %v5776 = vrot.slane %v5510, 3
      %v5777 = vrot.slane %v5510, 4
      %v5778 = vrot.slane %v5510, 5
      %v5779 = vrot.slane %v5510, 6
      %v5780 = vrot.slane %v5510, 7
      %v5781 = vrot.slane %v5512, 1
      %v5782 = vrot.slane %v5512, 2
      %v5783 = vrot.slane %v5512, 3
      %v5784 = vrot.slane %v5512, 4
      %v5785 = vrot.slane %v5512, 5
      %v5786 = vrot.slane %v5512, 6
      %v5787 = vrot.slane %v5512, 7
      %v5788 = vrot.slane %v5515, 1
      %v5789 = vrot.slane %v5515, 2
      %v5790 = vrot.slane %v5515, 3
      %v5791 = vrot.slane %v5515, 4
      %v5792 = vrot.slane %v5515, 5
      %v5793 = vrot.slane %v5515, 6
      %v5794 = vrot.slane %v5515, 7
      %v5795 = vrot.slane %v5517, 1
      %v5796 = vrot.slane %v5517, 2
      %v5797 = vrot.slane %v5517, 3
      %v5798 = vrot.slane %v5517, 4
      %v5799 = vrot.slane %v5517, 5
      %v5800 = vrot.slane %v5517, 6
      %v5801 = vrot.slane %v5517, 7
      %v5802 = vrot.slane %v5520, 1
      %v5803 = vrot.slane %v5520, 2
      %v5804 = vrot.slane %v5520, 3
      %v5805 = vrot.slane %v5520, 4
      %v5806 = vrot.slane %v5520, 5
      %v5807 = vrot.slane %v5520, 6
      %v5808 = vrot.slane %v5520, 7
      %v5809 = vrot.slane %v5522, 1
      %v5810 = vrot.slane %v5522, 2
      %v5811 = vrot.slane %v5522, 3
      %v5812 = vrot.slane %v5522, 4
      %v5813 = vrot.slane %v5522, 5
      %v5814 = vrot.slane %v5522, 6
      %v5815 = vrot.slane %v5522, 7
      %vm6068 = vcmp.ge.f32.partialorder %v5435, 0.0
      %vm6069 = vcmp.ge.f32.partialorder %v5564, 0.0
      %vm6070 = vcmp.ge.f32.partialorder %v5565, 0.0
      %vm6071 = vcmp.ge.f32.partialorder %v5566, 0.0
      %vm6072 = vcmp.ge.f32.partialorder %v5567, 0.0
      %vm6073 = vcmp.ge.f32.partialorder %v5568, 0.0
      %vm6074 = vcmp.ge.f32.partialorder %v5569, 0.0
      %vm6075 = vcmp.ge.f32.partialorder %v5570, 0.0
      %vm6076 = vcmp.ge.f32.partialorder %v5437, 0.0
      %vm6077 = vcmp.ge.f32.partialorder %v5571, 0.0
      %vm6078 = vcmp.ge.f32.partialorder %v5572, 0.0
      %vm6079 = vcmp.ge.f32.partialorder %v5573, 0.0
      %vm6080 = vcmp.ge.f32.partialorder %v5574, 0.0
      %vm6081 = vcmp.ge.f32.partialorder %v5575, 0.0
      %vm6082 = vcmp.ge.f32.partialorder %v5576, 0.0
      %vm6083 = vcmp.ge.f32.partialorder %v5577, 0.0
      %vm6084 = vcmp.ge.f32.partialorder %v5440, 0.0
      %vm6085 = vcmp.ge.f32.partialorder %v5578, 0.0
      %vm6086 = vcmp.ge.f32.partialorder %v5579, 0.0
      %vm6087 = vcmp.ge.f32.partialorder %v5580, 0.0
      %vm6088 = vcmp.ge.f32.partialorder %v5581, 0.0
      %vm6089 = vcmp.ge.f32.partialorder %v5582, 0.0
      %vm6090 = vcmp.ge.f32.partialorder %v5583, 0.0
      %vm6091 = vcmp.ge.f32.partialorder %v5584, 0.0
      %vm6092 = vcmp.ge.f32.partialorder %v5442, 0.0
      %vm6093 = vcmp.ge.f32.partialorder %v5585, 0.0
      %vm6094 = vcmp.ge.f32.partialorder %v5586, 0.0
      %vm6095 = vcmp.ge.f32.partialorder %v5587, 0.0
      %vm6096 = vcmp.ge.f32.partialorder %v5588, 0.0
      %vm6097 = vcmp.ge.f32.partialorder %v5589, 0.0
      %vm6098 = vcmp.ge.f32.partialorder %v5590, 0.0
      %vm6099 = vcmp.ge.f32.partialorder %v5591, 0.0
      %vm6100 = vcmp.ge.f32.partialorder %v5445, 0.0
      %vm6101 = vcmp.ge.f32.partialorder %v5592, 0.0
      %vm6102 = vcmp.ge.f32.partialorder %v5593, 0.0
      %vm6103 = vcmp.ge.f32.partialorder %v5594, 0.0
      %vm6104 = vcmp.ge.f32.partialorder %v5595, 0.0
      %vm6105 = vcmp.ge.f32.partialorder %v5596, 0.0
      %vm6106 = vcmp.ge.f32.partialorder %v5597, 0.0
      %vm6107 = vcmp.ge.f32.partialorder %v5598, 0.0
      %vm6108 = vcmp.ge.f32.partialorder %v5447, 0.0
      %vm6109 = vcmp.ge.f32.partialorder %v5599, 0.0
      %vm6110 = vcmp.ge.f32.partialorder %v5600, 0.0
      %vm6111 = vcmp.ge.f32.partialorder %v5601, 0.0
      %vm6112 = vcmp.ge.f32.partialorder %v5602, 0.0
      %vm6113 = vcmp.ge.f32.partialorder %v5603, 0.0
      %vm6114 = vcmp.ge.f32.partialorder %v5604, 0.0
      %vm6115 = vcmp.ge.f32.partialorder %v5605, 0.0
      %vm6116 = vcmp.ge.f32.partialorder %v5450, 0.0
      %vm6117 = vcmp.ge.f32.partialorder %v5606, 0.0
      %vm6118 = vcmp.ge.f32.partialorder %v5607, 0.0
      %vm6119 = vcmp.ge.f32.partialorder %v5608, 0.0
      %vm6120 = vcmp.ge.f32.partialorder %v5609, 0.0
      %vm6121 = vcmp.ge.f32.partialorder %v5610, 0.0
      %vm6122 = vcmp.ge.f32.partialorder %v5611, 0.0
      %vm6123 = vcmp.ge.f32.partialorder %v5612, 0.0
      %vm6124 = vcmp.ge.f32.partialorder %v5452, 0.0
      %vm6125 = vcmp.ge.f32.partialorder %v5613, 0.0
      %vm6126 = vcmp.ge.f32.partialorder %v5614, 0.0
      %vm6127 = vcmp.ge.f32.partialorder %v5615, 0.0
      %vm6128 = vcmp.ge.f32.partialorder %v5616, 0.0
      %vm6129 = vcmp.ge.f32.partialorder %v5617, 0.0
      %vm6130 = vcmp.ge.f32.partialorder %v5618, 0.0
      %vm6131 = vcmp.ge.f32.partialorder %v5619, 0.0
      %vm6132 = vcmp.ge.f32.partialorder %v5455, 0.0
      %vm6133 = vcmp.ge.f32.partialorder %v5620, 0.0
      %vm6134 = vcmp.ge.f32.partialorder %v5621, 0.0
      %vm6135 = vcmp.ge.f32.partialorder %v5622, 0.0
      %vm6136 = vcmp.ge.f32.partialorder %v5623, 0.0
      %vm6137 = vcmp.ge.f32.partialorder %v5624, 0.0
      %vm6138 = vcmp.ge.f32.partialorder %v5625, 0.0
      %vm6139 = vcmp.ge.f32.partialorder %v5626, 0.0
      %vm6140 = vcmp.ge.f32.partialorder %v5457, 0.0
      %vm6141 = vcmp.ge.f32.partialorder %v5627, 0.0
      %vm6142 = vcmp.ge.f32.partialorder %v5628, 0.0
      %vm6143 = vcmp.ge.f32.partialorder %v5629, 0.0
      %vm6144 = vcmp.ge.f32.partialorder %v5630, 0.0
      %vm6145 = vcmp.ge.f32.partialorder %v5631, 0.0
      %vm6146 = vcmp.ge.f32.partialorder %v5632, 0.0
      %vm6147 = vcmp.ge.f32.partialorder %v5633, 0.0
      %vm6148 = vcmp.ge.f32.partialorder %v5460, 0.0
      %vm6149 = vcmp.ge.f32.partialorder %v5634, 0.0
      %vm6150 = vcmp.ge.f32.partialorder %v5635, 0.0
      %vm6151 = vcmp.ge.f32.partialorder %v5636, 0.0
      %vm6152 = vcmp.ge.f32.partialorder %v5637, 0.0
      %vm6153 = vcmp.ge.f32.partialorder %v5638, 0.0
      %vm6154 = vcmp.ge.f32.partialorder %v5639, 0.0
      %vm6155 = vcmp.ge.f32.partialorder %v5640, 0.0
      %vm6156 = vcmp.ge.f32.partialorder %v5462, 0.0
      %vm6157 = vcmp.ge.f32.partialorder %v5641, 0.0
      %vm6158 = vcmp.ge.f32.partialorder %v5642, 0.0
      %vm6159 = vcmp.ge.f32.partialorder %v5643, 0.0
      %vm6160 = vcmp.ge.f32.partialorder %v5644, 0.0
      %vm6161 = vcmp.ge.f32.partialorder %v5645, 0.0
      %vm6162 = vcmp.ge.f32.partialorder %v5646, 0.0
      %vm6163 = vcmp.ge.f32.partialorder %v5647, 0.0
      %vm6164 = vcmp.ge.f32.partialorder %v5465, 0.0
      %vm6165 = vcmp.ge.f32.partialorder %v5648, 0.0
      %vm6166 = vcmp.ge.f32.partialorder %v5649, 0.0
      %vm6167 = vcmp.ge.f32.partialorder %v5650, 0.0
      %vm6168 = vcmp.ge.f32.partialorder %v5651, 0.0
      %vm6169 = vcmp.ge.f32.partialorder %v5652, 0.0
      %vm6170 = vcmp.ge.f32.partialorder %v5653, 0.0
      %vm6171 = vcmp.ge.f32.partialorder %v5654, 0.0
      %vm6172 = vcmp.ge.f32.partialorder %v5467, 0.0
      %vm6173 = vcmp.ge.f32.partialorder %v5655, 0.0
      %vm6174 = vcmp.ge.f32.partialorder %v5656, 0.0
      %vm6175 = vcmp.ge.f32.partialorder %v5657, 0.0
      %vm6176 = vcmp.ge.f32.partialorder %v5658, 0.0
      %vm6177 = vcmp.ge.f32.partialorder %v5659, 0.0
      %vm6178 = vcmp.ge.f32.partialorder %v5660, 0.0
      %vm6179 = vcmp.ge.f32.partialorder %v5661, 0.0
      %vm6180 = vcmp.ge.f32.partialorder %v5470, 0.0
      %vm6181 = vcmp.ge.f32.partialorder %v5662, 0.0
      %vm6182 = vcmp.ge.f32.partialorder %v5663, 0.0
      %vm6183 = vcmp.ge.f32.partialorder %v5664, 0.0
      %vm6184 = vcmp.ge.f32.partialorder %v5665, 0.0
      %vm6185 = vcmp.ge.f32.partialorder %v5666, 0.0
      %vm6186 = vcmp.ge.f32.partialorder %v5667, 0.0
      %vm6187 = vcmp.ge.f32.partialorder %v5668, 0.0
      %vm6188 = vcmp.ge.f32.partialorder %v5472, 0.0
      %vm6189 = vcmp.ge.f32.partialorder %v5669, 0.0
      %vm6190 = vcmp.ge.f32.partialorder %v5670, 0.0
      %vm6191 = vcmp.ge.f32.partialorder %v5671, 0.0
      %vm6192 = vcmp.ge.f32.partialorder %v5672, 0.0
      %vm6193 = vcmp.ge.f32.partialorder %v5673, 0.0
      %vm6194 = vcmp.ge.f32.partialorder %v5674, 0.0
      %vm6195 = vcmp.ge.f32.partialorder %v5675, 0.0
      %vm6196 = vcmp.ge.f32.partialorder %v5475, 0.0
      %vm6197 = vcmp.ge.f32.partialorder %v5676, 0.0
      %vm6198 = vcmp.ge.f32.partialorder %v5677, 0.0
      %vm6199 = vcmp.ge.f32.partialorder %v5678, 0.0
      %vm6200 = vcmp.ge.f32.partialorder %v5679, 0.0
      %vm6201 = vcmp.ge.f32.partialorder %v5680, 0.0
      %vm6202 = vcmp.ge.f32.partialorder %v5681, 0.0
      %vm6203 = vcmp.ge.f32.partialorder %v5682, 0.0
      %vm6204 = vcmp.ge.f32.partialorder %v5477, 0.0
      %vm6205 = vcmp.ge.f32.partialorder %v5683, 0.0
      %vm6206 = vcmp.ge.f32.partialorder %v5684, 0.0
      %vm6207 = vcmp.ge.f32.partialorder %v5685, 0.0
      %vm6208 = vcmp.ge.f32.partialorder %v5686, 0.0
      %vm6209 = vcmp.ge.f32.partialorder %v5687, 0.0
      %vm6210 = vcmp.ge.f32.partialorder %v5688, 0.0
      %vm6211 = vcmp.ge.f32.partialorder %v5689, 0.0
      %vm6212 = vcmp.ge.f32.partialorder %v5480, 0.0
      %vm6213 = vcmp.ge.f32.partialorder %v5690, 0.0
      %vm6214 = vcmp.ge.f32.partialorder %v5691, 0.0
      %vm6215 = vcmp.ge.f32.partialorder %v5692, 0.0
      %vm6216 = vcmp.ge.f32.partialorder %v5693, 0.0
      %vm6217 = vcmp.ge.f32.partialorder %v5694, 0.0
      %vm6218 = vcmp.ge.f32.partialorder %v5695, 0.0
      %vm6219 = vcmp.ge.f32.partialorder %v5696, 0.0
      %vm6220 = vcmp.ge.f32.partialorder %v5482, 0.0
      %vm6221 = vcmp.ge.f32.partialorder %v5697, 0.0
      %vm6222 = vcmp.ge.f32.partialorder %v5698, 0.0
      %vm6223 = vcmp.ge.f32.partialorder %v5699, 0.0
      %vm6224 = vcmp.ge.f32.partialorder %v5700, 0.0
      %vm6225 = vcmp.ge.f32.partialorder %v5701, 0.0
      %vm6226 = vcmp.ge.f32.partialorder %v5702, 0.0
      %vm6227 = vcmp.ge.f32.partialorder %v5703, 0.0
      %vm6228 = vcmp.ge.f32.partialorder %v5485, 0.0
      %vm6229 = vcmp.ge.f32.partialorder %v5704, 0.0
      %vm6230 = vcmp.ge.f32.partialorder %v5705, 0.0
      %vm6231 = vcmp.ge.f32.partialorder %v5706, 0.0
      %vm6232 = vcmp.ge.f32.partialorder %v5707, 0.0
      %vm6233 = vcmp.ge.f32.partialorder %v5708, 0.0
      %vm6234 = vcmp.ge.f32.partialorder %v5709, 0.0
      %vm6235 = vcmp.ge.f32.partialorder %v5710, 0.0
      %vm6236 = vcmp.ge.f32.partialorder %v5487, 0.0
      %vm6237 = vcmp.ge.f32.partialorder %v5711, 0.0
      %vm6238 = vcmp.ge.f32.partialorder %v5712, 0.0
      %vm6239 = vcmp.ge.f32.partialorder %v5713, 0.0
      %vm6240 = vcmp.ge.f32.partialorder %v5714, 0.0
      %vm6241 = vcmp.ge.f32.partialorder %v5715, 0.0
      %vm6242 = vcmp.ge.f32.partialorder %v5716, 0.0
      %vm6243 = vcmp.ge.f32.partialorder %v5717, 0.0
      %vm6244 = vcmp.ge.f32.partialorder %v5490, 0.0
      %vm6245 = vcmp.ge.f32.partialorder %v5718, 0.0
      %vm6246 = vcmp.ge.f32.partialorder %v5719, 0.0
      %vm6247 = vcmp.ge.f32.partialorder %v5720, 0.0
      %vm6248 = vcmp.ge.f32.partialorder %v5721, 0.0
      %vm6249 = vcmp.ge.f32.partialorder %v5722, 0.0
      %vm6250 = vcmp.ge.f32.partialorder %v5723, 0.0
      %vm6251 = vcmp.ge.f32.partialorder %v5724, 0.0
      %vm6252 = vcmp.ge.f32.partialorder %v5492, 0.0
      %vm6253 = vcmp.ge.f32.partialorder %v5725, 0.0
      %vm6254 = vcmp.ge.f32.partialorder %v5726, 0.0
      %vm6255 = vcmp.ge.f32.partialorder %v5727, 0.0
      %vm6256 = vcmp.ge.f32.partialorder %v5728, 0.0
      %vm6257 = vcmp.ge.f32.partialorder %v5729, 0.0
      %vm6258 = vcmp.ge.f32.partialorder %v5730, 0.0
      %vm6259 = vcmp.ge.f32.partialorder %v5731, 0.0
      %vm6260 = vcmp.ge.f32.partialorder %v5495, 0.0
      %vm6261 = vcmp.ge.f32.partialorder %v5732, 0.0
      %vm6262 = vcmp.ge.f32.partialorder %v5733, 0.0
      %vm6263 = vcmp.ge.f32.partialorder %v5734, 0.0
      %vm6264 = vcmp.ge.f32.partialorder %v5735, 0.0
      %vm6265 = vcmp.ge.f32.partialorder %v5736, 0.0
      %vm6266 = vcmp.ge.f32.partialorder %v5737, 0.0
      %vm6267 = vcmp.ge.f32.partialorder %v5738, 0.0
      %vm6268 = vcmp.ge.f32.partialorder %v5497, 0.0
      %vm6269 = vcmp.ge.f32.partialorder %v5739, 0.0
      %vm6270 = vcmp.ge.f32.partialorder %v5740, 0.0
      %vm6271 = vcmp.ge.f32.partialorder %v5741, 0.0
      %vm6272 = vcmp.ge.f32.partialorder %v5742, 0.0
      %vm6273 = vcmp.ge.f32.partialorder %v5743, 0.0
      %vm6274 = vcmp.ge.f32.partialorder %v5744, 0.0
      %vm6275 = vcmp.ge.f32.partialorder %v5745, 0.0
      %vm6276 = vcmp.ge.f32.partialorder %v5500, 0.0
      %vm6277 = vcmp.ge.f32.partialorder %v5746, 0.0
      %vm6278 = vcmp.ge.f32.partialorder %v5747, 0.0
      %vm6279 = vcmp.ge.f32.partialorder %v5748, 0.0
      %vm6280 = vcmp.ge.f32.partialorder %v5749, 0.0
      %vm6281 = vcmp.ge.f32.partialorder %v5750, 0.0
      %vm6282 = vcmp.ge.f32.partialorder %v5751, 0.0
      %vm6283 = vcmp.ge.f32.partialorder %v5752, 0.0
      %vm6284 = vcmp.ge.f32.partialorder %v5502, 0.0
      %vm6285 = vcmp.ge.f32.partialorder %v5753, 0.0
      %vm6286 = vcmp.ge.f32.partialorder %v5754, 0.0
      %vm6287 = vcmp.ge.f32.partialorder %v5755, 0.0
      %vm6288 = vcmp.ge.f32.partialorder %v5756, 0.0
      %vm6289 = vcmp.ge.f32.partialorder %v5757, 0.0
      %vm6290 = vcmp.ge.f32.partialorder %v5758, 0.0
      %vm6291 = vcmp.ge.f32.partialorder %v5759, 0.0
      %vm6292 = vcmp.ge.f32.partialorder %v5505, 0.0
      %vm6293 = vcmp.ge.f32.partialorder %v5760, 0.0
      %vm6294 = vcmp.ge.f32.partialorder %v5761, 0.0
      %vm6295 = vcmp.ge.f32.partialorder %v5762, 0.0
      %vm6296 = vcmp.ge.f32.partialorder %v5763, 0.0
      %vm6297 = vcmp.ge.f32.partialorder %v5764, 0.0
      %vm6298 = vcmp.ge.f32.partialorder %v5765, 0.0
      %vm6299 = vcmp.ge.f32.partialorder %v5766, 0.0
      %vm6300 = vcmp.ge.f32.partialorder %v5507, 0.0
      %vm6301 = vcmp.ge.f32.partialorder %v5767, 0.0
      %vm6302 = vcmp.ge.f32.partialorder %v5768, 0.0
      %vm6303 = vcmp.ge.f32.partialorder %v5769, 0.0
      %vm6304 = vcmp.ge.f32.partialorder %v5770, 0.0
      %vm6305 = vcmp.ge.f32.partialorder %v5771, 0.0
      %vm6306 = vcmp.ge.f32.partialorder %v5772, 0.0
      %vm6307 = vcmp.ge.f32.partialorder %v5773, 0.0
      %vm6308 = vcmp.ge.f32.partialorder %v5510, 0.0
      %vm6309 = vcmp.ge.f32.partialorder %v5774, 0.0
      %vm6310 = vcmp.ge.f32.partialorder %v5775, 0.0
      %vm6311 = vcmp.ge.f32.partialorder %v5776, 0.0
      %vm6312 = vcmp.ge.f32.partialorder %v5777, 0.0
      %vm6313 = vcmp.ge.f32.partialorder %v5778, 0.0
      %vm6314 = vcmp.ge.f32.partialorder %v5779, 0.0
      %vm6315 = vcmp.ge.f32.partialorder %v5780, 0.0
      %vm6316 = vcmp.ge.f32.partialorder %v5512, 0.0
      %vm6317 = vcmp.ge.f32.partialorder %v5781, 0.0
      %vm6318 = vcmp.ge.f32.partialorder %v5782, 0.0
      %vm6319 = vcmp.ge.f32.partialorder %v5783, 0.0
      %vm6320 = vcmp.ge.f32.partialorder %v5784, 0.0
      %vm6321 = vcmp.ge.f32.partialorder %v5785, 0.0
      %vm6322 = vcmp.ge.f32.partialorder %v5786, 0.0
      %vm6323 = vcmp.ge.f32.partialorder %v5787, 0.0
      %vm6324 = vcmp.ge.f32.partialorder %v5515, 0.0
      %vm6325 = vcmp.ge.f32.partialorder %v5788, 0.0
      %vm6326 = vcmp.ge.f32.partialorder %v5789, 0.0
      %vm6327 = vcmp.ge.f32.partialorder %v5790, 0.0
      %vm6328 = vcmp.ge.f32.partialorder %v5791, 0.0
      %vm6329 = vcmp.ge.f32.partialorder %v5792, 0.0
      %vm6330 = vcmp.ge.f32.partialorder %v5793, 0.0
      %vm6331 = vcmp.ge.f32.partialorder %v5794, 0.0
      %vm6332 = vcmp.ge.f32.partialorder %v5517, 0.0
      %vm6333 = vcmp.ge.f32.partialorder %v5795, 0.0
      %vm6334 = vcmp.ge.f32.partialorder %v5796, 0.0
      %vm6335 = vcmp.ge.f32.partialorder %v5797, 0.0
      %vm6336 = vcmp.ge.f32.partialorder %v5798, 0.0
      %vm6337 = vcmp.ge.f32.partialorder %v5799, 0.0
      %vm6338 = vcmp.ge.f32.partialorder %v5800, 0.0
      %vm6339 = vcmp.ge.f32.partialorder %v5801, 0.0
      %vm6340 = vcmp.ge.f32.partialorder %v5520, 0.0
      %vm6341 = vcmp.ge.f32.partialorder %v5802, 0.0
      %vm6342 = vcmp.ge.f32.partialorder %v5803, 0.0
      %vm6343 = vcmp.ge.f32.partialorder %v5804, 0.0
      %vm6344 = vcmp.ge.f32.partialorder %v5805, 0.0
      %vm6345 = vcmp.ge.f32.partialorder %v5806, 0.0
      %vm6346 = vcmp.ge.f32.partialorder %v5807, 0.0
      %vm6347 = vcmp.ge.f32.partialorder %v5808, 0.0
      %vm6348 = vcmp.ge.f32.partialorder %v5522, 0.0
      %vm6349 = vcmp.ge.f32.partialorder %v5809, 0.0
      %vm6350 = vcmp.ge.f32.partialorder %v5810, 0.0
      %vm6351 = vcmp.ge.f32.partialorder %v5811, 0.0
      %vm6352 = vcmp.ge.f32.partialorder %v5812, 0.0
      %vm6353 = vcmp.ge.f32.partialorder %v5813, 0.0
      %vm6354 = vcmp.ge.f32.partialorder %v5814, 0.0
      %vm6355 = vcmp.ge.f32.partialorder %v5815, 0.0
      %vm6356 = vcmp.ge.f32.partialorder %v5525, 0.0
      %v6357 = vmul.f32 %v5435, 0.2
      %v6358 = vmul.f32 %v5564, 0.2
      %v6359 = vmul.f32 %v5565, 0.2
      %v6360 = vmul.f32 %v5566, 0.2
      %v6361 = vmul.f32 %v5567, 0.2
      %v6362 = vmul.f32 %v5568, 0.2
      %v6363 = vmul.f32 %v5569, 0.2
      %v6364 = vmul.f32 %v5570, 0.2
      %v6365 = vmul.f32 %v5437, 0.2
      %v6366 = vmul.f32 %v5571, 0.2
      %v6367 = vmul.f32 %v5572, 0.2
      %v6368 = vmul.f32 %v5573, 0.2
      %v6369 = vmul.f32 %v5574, 0.2
      %v6370 = vmul.f32 %v5575, 0.2
      %v6371 = vmul.f32 %v5576, 0.2
      %v6372 = vmul.f32 %v5577, 0.2
      %v6373 = vmul.f32 %v5440, 0.2
      %v6374 = vmul.f32 %v5578, 0.2
      %v6375 = vmul.f32 %v5579, 0.2
      %v6376 = vmul.f32 %v5580, 0.2
      %v6377 = vmul.f32 %v5581, 0.2
      %v6378 = vmul.f32 %v5582, 0.2
      %v6379 = vmul.f32 %v5583, 0.2
      %v6380 = vmul.f32 %v5584, 0.2
      %v6381 = vmul.f32 %v5442, 0.2
      %v6382 = vmul.f32 %v5585, 0.2
      %v6383 = vmul.f32 %v5586, 0.2
      %v6384 = vmul.f32 %v5587, 0.2
      %v6385 = vmul.f32 %v5588, 0.2
      %v6386 = vmul.f32 %v5589, 0.2
      %v6387 = vmul.f32 %v5590, 0.2
      %v6388 = vmul.f32 %v5591, 0.2
      %v6389 = vmul.f32 %v5445, 0.2
      %v6390 = vmul.f32 %v5592, 0.2
      %v6391 = vmul.f32 %v5593, 0.2
      %v6392 = vmul.f32 %v5594, 0.2
      %v6393 = vmul.f32 %v5595, 0.2
      %v6394 = vmul.f32 %v5596, 0.2
      %v6395 = vmul.f32 %v5597, 0.2
      %v6396 = vmul.f32 %v5598, 0.2
      %v6397 = vmul.f32 %v5447, 0.2
      %v6398 = vmul.f32 %v5599, 0.2
      %v6399 = vmul.f32 %v5600, 0.2
      %v6400 = vmul.f32 %v5601, 0.2
      %v6401 = vmul.f32 %v5602, 0.2
      %v6402 = vmul.f32 %v5603, 0.2
      %v6403 = vmul.f32 %v5604, 0.2
      %v6404 = vmul.f32 %v5605, 0.2
      %v6405 = vmul.f32 %v5450, 0.2
      %v6406 = vmul.f32 %v5606, 0.2
      %v6407 = vmul.f32 %v5607, 0.2
      %v6408 = vmul.f32 %v5608, 0.2
      %v6409 = vmul.f32 %v5609, 0.2
      %v6410 = vmul.f32 %v5610, 0.2
      %v6411 = vmul.f32 %v5611, 0.2
      %v6412 = vmul.f32 %v5612, 0.2
      %v6413 = vmul.f32 %v5452, 0.2
      %v6414 = vmul.f32 %v5613, 0.2
      %v6415 = vmul.f32 %v5614, 0.2
      %v6416 = vmul.f32 %v5615, 0.2
      %v6417 = vmul.f32 %v5616, 0.2
      %v6418 = vmul.f32 %v5617, 0.2
      %v6419 = vmul.f32 %v5618, 0.2
      %v6420 = vmul.f32 %v5619, 0.2
      %v6421 = vmul.f32 %v5455, 0.2
      %v6422 = vmul.f32 %v5620, 0.2
      %v6423 = vmul.f32 %v5621, 0.2
      %v6424 = vmul.f32 %v5622, 0.2
      %v6425 = vmul.f32 %v5623, 0.2
      %v6426 = vmul.f32 %v5624, 0.2
      %v6427 = vmul.f32 %v5625, 0.2
      %v6428 = vmul.f32 %v5626, 0.2
      %v6429 = vmul.f32 %v5457, 0.2
      %v6430 = vmul.f32 %v5627, 0.2
      %v6431 = vmul.f32 %v5628, 0.2
      %v6432 = vmul.f32 %v5629, 0.2
      %v6433 = vmul.f32 %v5630, 0.2
      %v6434 = vmul.f32 %v5631, 0.2
      %v6435 = vmul.f32 %v5632, 0.2
      %v6436 = vmul.f32 %v5633, 0.2
      %v6437 = vmul.f32 %v5460, 0.2
      %v6438 = vmul.f32 %v5634, 0.2
      %v6439 = vmul.f32 %v5635, 0.2
      %v6440 = vmul.f32 %v5636, 0.2
      %v6441 = vmul.f32 %v5637, 0.2
      %v6442 = vmul.f32 %v5638, 0.2
      %v6443 = vmul.f32 %v5639, 0.2
      %v6444 = vmul.f32 %v5640, 0.2
      %v6445 = vmul.f32 %v5462, 0.2
      %v6446 = vmul.f32 %v5641, 0.2
      %v6447 = vmul.f32 %v5642, 0.2
      %v6448 = vmul.f32 %v5643, 0.2
      %v6449 = vmul.f32 %v5644, 0.2
      %v6450 = vmul.f32 %v5645, 0.2
      %v6451 = vmul.f32 %v5646, 0.2
      %v6452 = vmul.f32 %v5647, 0.2
      %v6453 = vmul.f32 %v5465, 0.2
      %v6454 = vmul.f32 %v5648, 0.2
      %v6455 = vmul.f32 %v5649, 0.2
      %v6456 = vmul.f32 %v5650, 0.2
      %v6457 = vmul.f32 %v5651, 0.2
      %v6458 = vmul.f32 %v5652, 0.2
      %v6459 = vmul.f32 %v5653, 0.2
      %v6460 = vmul.f32 %v5654, 0.2
      %v6461 = vmul.f32 %v5467, 0.2
      %v6462 = vmul.f32 %v5655, 0.2
      %v6463 = vmul.f32 %v5656, 0.2
      %v6464 = vmul.f32 %v5657, 0.2
      %v6465 = vmul.f32 %v5658, 0.2
      %v6466 = vmul.f32 %v5659, 0.2
      %v6467 = vmul.f32 %v5660, 0.2
      %v6468 = vmul.f32 %v5661, 0.2
      %v6469 = vmul.f32 %v5470, 0.2
      %v6470 = vmul.f32 %v5662, 0.2
      %v6471 = vmul.f32 %v5663, 0.2
      %v6472 = vmul.f32 %v5664, 0.2
      %v6473 = vmul.f32 %v5665, 0.2
      %v6474 = vmul.f32 %v5666, 0.2
      %v6475 = vmul.f32 %v5667, 0.2
      %v6476 = vmul.f32 %v5668, 0.2
      %v6477 = vmul.f32 %v5472, 0.2
      %v6478 = vmul.f32 %v5669, 0.2
      %v6479 = vmul.f32 %v5670, 0.2
      %v6480 = vmul.f32 %v5671, 0.2
      %v6481 = vmul.f32 %v5672, 0.2
      %v6482 = vmul.f32 %v5673, 0.2
      %v6483 = vmul.f32 %v5674, 0.2
      %v6484 = vmul.f32 %v5675, 0.2
      %v6485 = vmul.f32 %v5475, 0.2
      %v6486 = vmul.f32 %v5676, 0.2
      %v6487 = vmul.f32 %v5677, 0.2
      %v6488 = vmul.f32 %v5678, 0.2
      %v6489 = vmul.f32 %v5679, 0.2
      %v6490 = vmul.f32 %v5680, 0.2
      %v6491 = vmul.f32 %v5681, 0.2
      %v6492 = vmul.f32 %v5682, 0.2
      %v6493 = vmul.f32 %v5477, 0.2
      %v6494 = vmul.f32 %v5683, 0.2
      %v6495 = vmul.f32 %v5684, 0.2
      %v6496 = vmul.f32 %v5685, 0.2
      %v6497 = vmul.f32 %v5686, 0.2
      %v6498 = vmul.f32 %v5687, 0.2
      %v6499 = vmul.f32 %v5688, 0.2
      %v6500 = vmul.f32 %v5689, 0.2
      %v6501 = vmul.f32 %v5480, 0.2
      %v6502 = vmul.f32 %v5690, 0.2
      %v6503 = vmul.f32 %v5691, 0.2
      %v6504 = vmul.f32 %v5692, 0.2
      %v6505 = vmul.f32 %v5693, 0.2
      %v6506 = vmul.f32 %v5694, 0.2
      %v6507 = vmul.f32 %v5695, 0.2
      %v6508 = vmul.f32 %v5696, 0.2
      %v6509 = vmul.f32 %v5482, 0.2
      %v6510 = vmul.f32 %v5697, 0.2
      %v6511 = vmul.f32 %v5698, 0.2
      %v6512 = vmul.f32 %v5699, 0.2
      %v6513 = vmul.f32 %v5700, 0.2
      %v6514 = vmul.f32 %v5701, 0.2
      %v6515 = vmul.f32 %v5702, 0.2
      %v6516 = vmul.f32 %v5703, 0.2
      %v6517 = vmul.f32 %v5485, 0.2
      %v6518 = vmul.f32 %v5704, 0.2
      %v6519 = vmul.f32 %v5705, 0.2
      %v6520 = vmul.f32 %v5706, 0.2
      %v6521 = vmul.f32 %v5707, 0.2
      %v6522 = vmul.f32 %v5708, 0.2
      %v6523 = vmul.f32 %v5709, 0.2
      %v6524 = vmul.f32 %v5710, 0.2
      %v6525 = vmul.f32 %v5487, 0.2
      %v6526 = vmul.f32 %v5711, 0.2
      %v6527 = vmul.f32 %v5712, 0.2
      %v6528 = vmul.f32 %v5713, 0.2
      %v6529 = vmul.f32 %v5714, 0.2
      %v6530 = vmul.f32 %v5715, 0.2
      %v6531 = vmul.f32 %v5716, 0.2
      %v6532 = vmul.f32 %v5717, 0.2
      %v6533 = vmul.f32 %v5490, 0.2
      %v6534 = vmul.f32 %v5718, 0.2
      %v6535 = vmul.f32 %v5719, 0.2
      %v6536 = vmul.f32 %v5720, 0.2
      %v6537 = vmul.f32 %v5721, 0.2
      %v6538 = vmul.f32 %v5722, 0.2
      %v6539 = vmul.f32 %v5723, 0.2
      %v6540 = vmul.f32 %v5724, 0.2
      %v6541 = vmul.f32 %v5492, 0.2
      %v6542 = vmul.f32 %v5725, 0.2
      %v6543 = vmul.f32 %v5726, 0.2
      %v6544 = vmul.f32 %v5727, 0.2
      %v6545 = vmul.f32 %v5728, 0.2
      %v6546 = vmul.f32 %v5729, 0.2
      %v6547 = vmul.f32 %v5730, 0.2
      %v6548 = vmul.f32 %v5731, 0.2
      %v6549 = vmul.f32 %v5495, 0.2
      %v6550 = vmul.f32 %v5732, 0.2
      %v6551 = vmul.f32 %v5733, 0.2
      %v6552 = vmul.f32 %v5734, 0.2
      %v6553 = vmul.f32 %v5735, 0.2
      %v6554 = vmul.f32 %v5736, 0.2
      %v6555 = vmul.f32 %v5737, 0.2
      %v6556 = vmul.f32 %v5738, 0.2
      %v6557 = vmul.f32 %v5497, 0.2
      %v6558 = vmul.f32 %v5739, 0.2
      %v6559 = vmul.f32 %v5740, 0.2
      %v6560 = vmul.f32 %v5741, 0.2
      %v6561 = vmul.f32 %v5742, 0.2
      %v6562 = vmul.f32 %v5743, 0.2
      %v6563 = vmul.f32 %v5744, 0.2
      %v6564 = vmul.f32 %v5745, 0.2
      %v6565 = vmul.f32 %v5500, 0.2
      %v6566 = vmul.f32 %v5746, 0.2
      %v6567 = vmul.f32 %v5747, 0.2
      %v6568 = vmul.f32 %v5748, 0.2
      %v6569 = vmul.f32 %v5749, 0.2
      %v6570 = vmul.f32 %v5750, 0.2
      %v6571 = vmul.f32 %v5751, 0.2
      %v6572 = vmul.f32 %v5752, 0.2
      %v6573 = vmul.f32 %v5502, 0.2
      %v6574 = vmul.f32 %v5753, 0.2
      %v6575 = vmul.f32 %v5754, 0.2
      %v6576 = vmul.f32 %v5755, 0.2
      %v6577 = vmul.f32 %v5756, 0.2
      %v6578 = vmul.f32 %v5757, 0.2
      %v6579 = vmul.f32 %v5758, 0.2
      %v6580 = vmul.f32 %v5759, 0.2
      %v6581 = vmul.f32 %v5505, 0.2
      %v6582 = vmul.f32 %v5760, 0.2
      %v6583 = vmul.f32 %v5761, 0.2
      %v6584 = vmul.f32 %v5762, 0.2
      %v6585 = vmul.f32 %v5763, 0.2
      %v6586 = vmul.f32 %v5764, 0.2
      %v6587 = vmul.f32 %v5765, 0.2
      %v6588 = vmul.f32 %v5766, 0.2
      %v6589 = vmul.f32 %v5507, 0.2
      %v6590 = vmul.f32 %v5767, 0.2
      %v6591 = vmul.f32 %v5768, 0.2
      %v6592 = vmul.f32 %v5769, 0.2
      %v6593 = vmul.f32 %v5770, 0.2
      %v6594 = vmul.f32 %v5771, 0.2
      %v6595 = vmul.f32 %v5772, 0.2
      %v6596 = vmul.f32 %v5773, 0.2
      %v6597 = vmul.f32 %v5510, 0.2
      %v6598 = vmul.f32 %v5774, 0.2
      %v6599 = vmul.f32 %v5775, 0.2
      %v6600 = vmul.f32 %v5776, 0.2
      %v6601 = vmul.f32 %v5777, 0.2
      %v6602 = vmul.f32 %v5778, 0.2
      %v6603 = vmul.f32 %v5779, 0.2
      %v6604 = vmul.f32 %v5780, 0.2
      %v6605 = vmul.f32 %v5512, 0.2
      %v6606 = vmul.f32 %v5781, 0.2
      %v6607 = vmul.f32 %v5782, 0.2
      %v6608 = vmul.f32 %v5783, 0.2
      %v6609 = vmul.f32 %v5784, 0.2
      %v6610 = vmul.f32 %v5785, 0.2
      %v6611 = vmul.f32 %v5786, 0.2
      %v6612 = vmul.f32 %v5787, 0.2
      %v6613 = vmul.f32 %v5515, 0.2
      %v6614 = vmul.f32 %v5788, 0.2
      %v6615 = vmul.f32 %v5789, 0.2
      %v6616 = vmul.f32 %v5790, 0.2
      %v6617 = vmul.f32 %v5791, 0.2
      %v6618 = vmul.f32 %v5792, 0.2
      %v6619 = vmul.f32 %v5793, 0.2
      %v6620 = vmul.f32 %v5794, 0.2
      %v6621 = vmul.f32 %v5517, 0.2
      %v6622 = vmul.f32 %v5795, 0.2
      %v6623 = vmul.f32 %v5796, 0.2
      %v6624 = vmul.f32 %v5797, 0.2
      %v6625 = vmul.f32 %v5798, 0.2
      %v6626 = vmul.f32 %v5799, 0.2
      %v6627 = vmul.f32 %v5800, 0.2
      %v6628 = vmul.f32 %v5801, 0.2
      %v6629 = vmul.f32 %v5520, 0.2
      %v6630 = vmul.f32 %v5802, 0.2
      %v6631 = vmul.f32 %v5803, 0.2
      %v6632 = vmul.f32 %v5804, 0.2
      %v6633 = vmul.f32 %v5805, 0.2
      %v6634 = vmul.f32 %v5806, 0.2
      %v6635 = vmul.f32 %v5807, 0.2
      %v6636 = vmul.f32 %v5808, 0.2
      %v6637 = vmul.f32 %v5522, 0.2
      %v6638 = vmul.f32 %v5809, 0.2
      %v6639 = vmul.f32 %v5810, 0.2
      %v6640 = vmul.f32 %v5811, 0.2
      %v6641 = vmul.f32 %v5812, 0.2
      %v6642 = vmul.f32 %v5813, 0.2
      %v6643 = vmul.f32 %v5814, 0.2
      %v6644 = vmul.f32 %v5815, 0.2
      %v6645 = vmul.f32 %v5525, 0.2
      %v6646 = vsel %vm6068, %v5435, %v6357
      %v6647 = vsel %vm6069, %v5564, %v6358
      %v6648 = vsel %vm6070, %v5565, %v6359
      %v6649 = vsel %vm6071, %v5566, %v6360
      %v6650 = vsel %vm6072, %v5567, %v6361
      %v6651 = vsel %vm6073, %v5568, %v6362
      %v6652 = vsel %vm6074, %v5569, %v6363
      %v6653 = vsel %vm6075, %v5570, %v6364
      %v6654 = vsel %vm6076, %v5437, %v6365
      %v6655 = vsel %vm6077, %v5571, %v6366
      %v6656 = vsel %vm6078, %v5572, %v6367
      %v6657 = vsel %vm6079, %v5573, %v6368
      %v6658 = vsel %vm6080, %v5574, %v6369
      %v6659 = vsel %vm6081, %v5575, %v6370
      %v6660 = vsel %vm6082, %v5576, %v6371
      %v6661 = vsel %vm6083, %v5577, %v6372
      %v6662 = vsel %vm6084, %v5440, %v6373
      %v6663 = vsel %vm6085, %v5578, %v6374
      %v6664 = vsel %vm6086, %v5579, %v6375
      %v6665 = vsel %vm6087, %v5580, %v6376
      %v6666 = vsel %vm6088, %v5581, %v6377
      %v6667 = vsel %vm6089, %v5582, %v6378
      %v6668 = vsel %vm6090, %v5583, %v6379
      %v6669 = vsel %vm6091, %v5584, %v6380
      %v6670 = vsel %vm6092, %v5442, %v6381
      %v6671 = vsel %vm6093, %v5585, %v6382
      %v6672 = vsel %vm6094, %v5586, %v6383
      %v6673 = vsel %vm6095, %v5587, %v6384
      %v6674 = vsel %vm6096, %v5588, %v6385
      %v6675 = vsel %vm6097, %v5589, %v6386
      %v6676 = vsel %vm6098, %v5590, %v6387
      %v6677 = vsel %vm6099, %v5591, %v6388
      %v6678 = vsel %vm6100, %v5445, %v6389
      %v6679 = vsel %vm6101, %v5592, %v6390
      %v6680 = vsel %vm6102, %v5593, %v6391
      %v6681 = vsel %vm6103, %v5594, %v6392
      %v6682 = vsel %vm6104, %v5595, %v6393
      %v6683 = vsel %vm6105, %v5596, %v6394
      %v6684 = vsel %vm6106, %v5597, %v6395
      %v6685 = vsel %vm6107, %v5598, %v6396
      %v6686 = vsel %vm6108, %v5447, %v6397
      %v6687 = vsel %vm6109, %v5599, %v6398
      %v6688 = vsel %vm6110, %v5600, %v6399
      %v6689 = vsel %vm6111, %v5601, %v6400
      %v6690 = vsel %vm6112, %v5602, %v6401
      %v6691 = vsel %vm6113, %v5603, %v6402
      %v6692 = vsel %vm6114, %v5604, %v6403
      %v6693 = vsel %vm6115, %v5605, %v6404
      %v6694 = vsel %vm6116, %v5450, %v6405
      %v6695 = vsel %vm6117, %v5606, %v6406
      %v6696 = vsel %vm6118, %v5607, %v6407
      %v6697 = vsel %vm6119, %v5608, %v6408
      %v6698 = vsel %vm6120, %v5609, %v6409
      %v6699 = vsel %vm6121, %v5610, %v6410
      %v6700 = vsel %vm6122, %v5611, %v6411
      %v6701 = vsel %vm6123, %v5612, %v6412
      %v6702 = vsel %vm6124, %v5452, %v6413
      %v6703 = vsel %vm6125, %v5613, %v6414
      %v6704 = vsel %vm6126, %v5614, %v6415
      %v6705 = vsel %vm6127, %v5615, %v6416
      %v6706 = vsel %vm6128, %v5616, %v6417
      %v6707 = vsel %vm6129, %v5617, %v6418
      %v6708 = vsel %vm6130, %v5618, %v6419
      %v6709 = vsel %vm6131, %v5619, %v6420
      %v6710 = vsel %vm6132, %v5455, %v6421
      %v6711 = vsel %vm6133, %v5620, %v6422
      %v6712 = vsel %vm6134, %v5621, %v6423
      %v6713 = vsel %vm6135, %v5622, %v6424
      %v6714 = vsel %vm6136, %v5623, %v6425
      %v6715 = vsel %vm6137, %v5624, %v6426
      %v6716 = vsel %vm6138, %v5625, %v6427
      %v6717 = vsel %vm6139, %v5626, %v6428
      %v6718 = vsel %vm6140, %v5457, %v6429
      %v6719 = vsel %vm6141, %v5627, %v6430
      %v6720 = vsel %vm6142, %v5628, %v6431
      %v6721 = vsel %vm6143, %v5629, %v6432
      %v6722 = vsel %vm6144, %v5630, %v6433
      %v6723 = vsel %vm6145, %v5631, %v6434
      %v6724 = vsel %vm6146, %v5632, %v6435
      %v6725 = vsel %vm6147, %v5633, %v6436
      %v6726 = vsel %vm6148, %v5460, %v6437
      %v6727 = vsel %vm6149, %v5634, %v6438
      %v6728 = vsel %vm6150, %v5635, %v6439
      %v6729 = vsel %vm6151, %v5636, %v6440
      %v6730 = vsel %vm6152, %v5637, %v6441
      %v6731 = vsel %vm6153, %v5638, %v6442
      %v6732 = vsel %vm6154, %v5639, %v6443
      %v6733 = vsel %vm6155, %v5640, %v6444
      %v6734 = vsel %vm6156, %v5462, %v6445
      %v6735 = vsel %vm6157, %v5641, %v6446
      %v6736 = vsel %vm6158, %v5642, %v6447
      %v6737 = vsel %vm6159, %v5643, %v6448
      %v6738 = vsel %vm6160, %v5644, %v6449
      %v6739 = vsel %vm6161, %v5645, %v6450
      %v6740 = vsel %vm6162, %v5646, %v6451
      %v6741 = vsel %vm6163, %v5647, %v6452
      %v6742 = vsel %vm6164, %v5465, %v6453
      %v6743 = vsel %vm6165, %v5648, %v6454
      %v6744 = vsel %vm6166, %v5649, %v6455
      %v6745 = vsel %vm6167, %v5650, %v6456
      %v6746 = vsel %vm6168, %v5651, %v6457
      %v6747 = vsel %vm6169, %v5652, %v6458
      %v6748 = vsel %vm6170, %v5653, %v6459
      %v6749 = vsel %vm6171, %v5654, %v6460
      %v6750 = vsel %vm6172, %v5467, %v6461
      %v6751 = vsel %vm6173, %v5655, %v6462
      %v6752 = vsel %vm6174, %v5656, %v6463
      %v6753 = vsel %vm6175, %v5657, %v6464
      %v6754 = vsel %vm6176, %v5658, %v6465
      %v6755 = vsel %vm6177, %v5659, %v6466
      %v6756 = vsel %vm6178, %v5660, %v6467
      %v6757 = vsel %vm6179, %v5661, %v6468
      %v6758 = vsel %vm6180, %v5470, %v6469
      %v6759 = vsel %vm6181, %v5662, %v6470
      %v6760 = vsel %vm6182, %v5663, %v6471
      %v6761 = vsel %vm6183, %v5664, %v6472
      %v6762 = vsel %vm6184, %v5665, %v6473
      %v6763 = vsel %vm6185, %v5666, %v6474
      %v6764 = vsel %vm6186, %v5667, %v6475
      %v6765 = vsel %vm6187, %v5668, %v6476
      %v6766 = vsel %vm6188, %v5472, %v6477
      %v6767 = vsel %vm6189, %v5669, %v6478
      %v6768 = vsel %vm6190, %v5670, %v6479
      %v6769 = vsel %vm6191, %v5671, %v6480
      %v6770 = vsel %vm6192, %v5672, %v6481
      %v6771 = vsel %vm6193, %v5673, %v6482
      %v6772 = vsel %vm6194, %v5674, %v6483
      %v6773 = vsel %vm6195, %v5675, %v6484
      %v6774 = vsel %vm6196, %v5475, %v6485
      %v6775 = vsel %vm6197, %v5676, %v6486
      %v6776 = vsel %vm6198, %v5677, %v6487
      %v6777 = vsel %vm6199, %v5678, %v6488
      %v6778 = vsel %vm6200, %v5679, %v6489
      %v6779 = vsel %vm6201, %v5680, %v6490
      %v6780 = vsel %vm6202, %v5681, %v6491
      %v6781 = vsel %vm6203, %v5682, %v6492
      %v6782 = vsel %vm6204, %v5477, %v6493
      %v6783 = vsel %vm6205, %v5683, %v6494
      %v6784 = vsel %vm6206, %v5684, %v6495
      %v6785 = vsel %vm6207, %v5685, %v6496
      %v6786 = vsel %vm6208, %v5686, %v6497
      %v6787 = vsel %vm6209, %v5687, %v6498
      %v6788 = vsel %vm6210, %v5688, %v6499
      %v6789 = vsel %vm6211, %v5689, %v6500
      %v6790 = vsel %vm6212, %v5480, %v6501
      %v6791 = vsel %vm6213, %v5690, %v6502
      %v6792 = vsel %vm6214, %v5691, %v6503
      %v6793 = vsel %vm6215, %v5692, %v6504
      %v6794 = vsel %vm6216, %v5693, %v6505
      %v6795 = vsel %vm6217, %v5694, %v6506
      %v6796 = vsel %vm6218, %v5695, %v6507
      %v6797 = vsel %vm6219, %v5696, %v6508
      %v6798 = vsel %vm6220, %v5482, %v6509
      %v6799 = vsel %vm6221, %v5697, %v6510
      %v6800 = vsel %vm6222, %v5698, %v6511
      %v6801 = vsel %vm6223, %v5699, %v6512
      %v6802 = vsel %vm6224, %v5700, %v6513
      %v6803 = vsel %vm6225, %v5701, %v6514
      %v6804 = vsel %vm6226, %v5702, %v6515
      %v6805 = vsel %vm6227, %v5703, %v6516
      %v6806 = vsel %vm6228, %v5485, %v6517
      %v6807 = vsel %vm6229, %v5704, %v6518
      %v6808 = vsel %vm6230, %v5705, %v6519
      %v6809 = vsel %vm6231, %v5706, %v6520
      %v6810 = vsel %vm6232, %v5707, %v6521
      %v6811 = vsel %vm6233, %v5708, %v6522
      %v6812 = vsel %vm6234, %v5709, %v6523
      %v6813 = vsel %vm6235, %v5710, %v6524
      %v6814 = vsel %vm6236, %v5487, %v6525
      %v6815 = vsel %vm6237, %v5711, %v6526
      %v6816 = vsel %vm6238, %v5712, %v6527
      %v6817 = vsel %vm6239, %v5713, %v6528
      %v6818 = vsel %vm6240, %v5714, %v6529
      %v6819 = vsel %vm6241, %v5715, %v6530
      %v6820 = vsel %vm6242, %v5716, %v6531
      %v6821 = vsel %vm6243, %v5717, %v6532
      %v6822 = vsel %vm6244, %v5490, %v6533
      %v6823 = vsel %vm6245, %v5718, %v6534
      %v6824 = vsel %vm6246, %v5719, %v6535
      %v6825 = vsel %vm6247, %v5720, %v6536
      %v6826 = vsel %vm6248, %v5721, %v6537
      %v6827 = vsel %vm6249, %v5722, %v6538
      %v6828 = vsel %vm6250, %v5723, %v6539
      %v6829 = vsel %vm6251, %v5724, %v6540
      %v6830 = vsel %vm6252, %v5492, %v6541
      %v6831 = vsel %vm6253, %v5725, %v6542
      %v6832 = vsel %vm6254, %v5726, %v6543
      %v6833 = vsel %vm6255, %v5727, %v6544
      %v6834 = vsel %vm6256, %v5728, %v6545
      %v6835 = vsel %vm6257, %v5729, %v6546
      %v6836 = vsel %vm6258, %v5730, %v6547
      %v6837 = vsel %vm6259, %v5731, %v6548
      %v6838 = vsel %vm6260, %v5495, %v6549
      %v6839 = vsel %vm6261, %v5732, %v6550
      %v6840 = vsel %vm6262, %v5733, %v6551
      %v6841 = vsel %vm6263, %v5734, %v6552
      %v6842 = vsel %vm6264, %v5735, %v6553
      %v6843 = vsel %vm6265, %v5736, %v6554
      %v6844 = vsel %vm6266, %v5737, %v6555
      %v6845 = vsel %vm6267, %v5738, %v6556
      %v6846 = vsel %vm6268, %v5497, %v6557
      %v6847 = vsel %vm6269, %v5739, %v6558
      %v6848 = vsel %vm6270, %v5740, %v6559
      %v6849 = vsel %vm6271, %v5741, %v6560
      %v6850 = vsel %vm6272, %v5742, %v6561
      %v6851 = vsel %vm6273, %v5743, %v6562
      %v6852 = vsel %vm6274, %v5744, %v6563
      %v6853 = vsel %vm6275, %v5745, %v6564
      %v6854 = vsel %vm6276, %v5500, %v6565
      %v6855 = vsel %vm6277, %v5746, %v6566
      %v6856 = vsel %vm6278, %v5747, %v6567
      %v6857 = vsel %vm6279, %v5748, %v6568
      %v6858 = vsel %vm6280, %v5749, %v6569
      %v6859 = vsel %vm6281, %v5750, %v6570
      %v6860 = vsel %vm6282, %v5751, %v6571
      %v6861 = vsel %vm6283, %v5752, %v6572
      %v6862 = vsel %vm6284, %v5502, %v6573
      %v6863 = vsel %vm6285, %v5753, %v6574
      %v6864 = vsel %vm6286, %v5754, %v6575
      %v6865 = vsel %vm6287, %v5755, %v6576
      %v6866 = vsel %vm6288, %v5756, %v6577
      %v6867 = vsel %vm6289, %v5757, %v6578
      %v6868 = vsel %vm6290, %v5758, %v6579
      %v6869 = vsel %vm6291, %v5759, %v6580
      %v6870 = vsel %vm6292, %v5505, %v6581
      %v6871 = vsel %vm6293, %v5760, %v6582
      %v6872 = vsel %vm6294, %v5761, %v6583
      %v6873 = vsel %vm6295, %v5762, %v6584
      %v6874 = vsel %vm6296, %v5763, %v6585
      %v6875 = vsel %vm6297, %v5764, %v6586
      %v6876 = vsel %vm6298, %v5765, %v6587
      %v6877 = vsel %vm6299, %v5766, %v6588
      %v6878 = vsel %vm6300, %v5507, %v6589
      %v6879 = vsel %vm6301, %v5767, %v6590
      %v6880 = vsel %vm6302, %v5768, %v6591
      %v6881 = vsel %vm6303, %v5769, %v6592
      %v6882 = vsel %vm6304, %v5770, %v6593
      %v6883 = vsel %vm6305, %v5771, %v6594
      %v6884 = vsel %vm6306, %v5772, %v6595
      %v6885 = vsel %vm6307, %v5773, %v6596
      %v6886 = vsel %vm6308, %v5510, %v6597
      %v6887 = vsel %vm6309, %v5774, %v6598
      %v6888 = vsel %vm6310, %v5775, %v6599
      %v6889 = vsel %vm6311, %v5776, %v6600
      %v6890 = vsel %vm6312, %v5777, %v6601
      %v6891 = vsel %vm6313, %v5778, %v6602
      %v6892 = vsel %vm6314, %v5779, %v6603
      %v6893 = vsel %vm6315, %v5780, %v6604
      %v6894 = vsel %vm6316, %v5512, %v6605
      %v6895 = vsel %vm6317, %v5781, %v6606
      %v6896 = vsel %vm6318, %v5782, %v6607
      %v6897 = vsel %vm6319, %v5783, %v6608
      %v6898 = vsel %vm6320, %v5784, %v6609
      %v6899 = vsel %vm6321, %v5785, %v6610
      %v6900 = vsel %vm6322, %v5786, %v6611
      %v6901 = vsel %vm6323, %v5787, %v6612
      %v6902 = vsel %vm6324, %v5515, %v6613
      %v6903 = vsel %vm6325, %v5788, %v6614
      %v6904 = vsel %vm6326, %v5789, %v6615
      %v6905 = vsel %vm6327, %v5790, %v6616
      %v6906 = vsel %vm6328, %v5791, %v6617
      %v6907 = vsel %vm6329, %v5792, %v6618
      %v6908 = vsel %vm6330, %v5793, %v6619
      %v6909 = vsel %vm6331, %v5794, %v6620
      %v6910 = vsel %vm6332, %v5517, %v6621
      %v6911 = vsel %vm6333, %v5795, %v6622
      %v6912 = vsel %vm6334, %v5796, %v6623
      %v6913 = vsel %vm6335, %v5797, %v6624
      %v6914 = vsel %vm6336, %v5798, %v6625
      %v6915 = vsel %vm6337, %v5799, %v6626
      %v6916 = vsel %vm6338, %v5800, %v6627
      %v6917 = vsel %vm6339, %v5801, %v6628
      %v6918 = vsel %vm6340, %v5520, %v6629
      %v6919 = vsel %vm6341, %v5802, %v6630
      %v6920 = vsel %vm6342, %v5803, %v6631
      %v6921 = vsel %vm6343, %v5804, %v6632
      %v6922 = vsel %vm6344, %v5805, %v6633
      %v6923 = vsel %vm6345, %v5806, %v6634
      %v6924 = vsel %vm6346, %v5807, %v6635
      %v6925 = vsel %vm6347, %v5808, %v6636
      %v6926 = vsel %vm6348, %v5522, %v6637
      %v6927 = vsel %vm6349, %v5809, %v6638
      %v6928 = vsel %vm6350, %v5810, %v6639
      %v6929 = vsel %vm6351, %v5811, %v6640
      %v6930 = vsel %vm6352, %v5812, %v6641
      %v6931 = vsel %vm6353, %v5813, %v6642
      %v6932 = vsel %vm6354, %v5814, %v6643
      %v6933 = vsel %vm6355, %v5815, %v6644
      %v6934 = vsel %vm6356, %v5525, %v6645
      %7224 = vst [vmem:[#allocation1] ss:$9 sm:$0xff] %v6646
      %s7225 = scalar_lea.vmem [#allocation1], 1
      %7226 = vst [vmem:[%s7225] ss:$9 sm:$0xff] %v6647
      %s7227 = scalar_lea.vmem [#allocation1], 2
      %7228 = vst [vmem:[%s7227] ss:$9 sm:$0xff] %v6648
      %s7229 = scalar_lea.vmem [#allocation1], 3
      %7230 = vst [vmem:[%s7229] ss:$9 sm:$0xff] %v6649
      %s7231 = scalar_lea.vmem [#allocation1], 4
      %7232 = vst [vmem:[%s7231] ss:$9 sm:$0xff] %v6650
      %s7233 = scalar_lea.vmem [#allocation1], 5
      %7234 = vst [vmem:[%s7233] ss:$9 sm:$0xff] %v6651
      %s7235 = scalar_lea.vmem [#allocation1], 6
      %7236 = vst [vmem:[%s7235] ss:$9 sm:$0xff] %v6652
      %s7237 = scalar_lea.vmem [#allocation1], 7
      %7238 = vst [vmem:[%s7237] ss:$9 sm:$0xff] %v6653
      %v7239 = vld [vmem:[#allocation1] sm:$0xff]
      %7240 = vst [vmem:[#allocation1] ss:$9 sm:$0xff] %v6654
      %7241 = vst [vmem:[%s7225] ss:$9 sm:$0xff] %v6655
      %7242 = vst [vmem:[%s7227] ss:$9 sm:$0xff] %v6656
      %7243 = vst [vmem:[%s7229] ss:$9 sm:$0xff] %v6657
      %7244 = vst [vmem:[%s7231] ss:$9 sm:$0xff] %v6658
      %7245 = vst [vmem:[%s7233] ss:$9 sm:$0xff] %v6659
      %7246 = vst [vmem:[%s7235] ss:$9 sm:$0xff] %v6660
      %7247 = vst [vmem:[%s7237] ss:$9 sm:$0xff] %v6661
      %v7248 = vld [vmem:[#allocation1] sm:$0xff]
      %7249 = vst [vmem:[#allocation1] ss:$9 sm:$0xff] %v6662
      %v7250 = vld [vmem:[#allocation1] sm:$0xff]
      %7251 = vst [vmem:[#allocation1] ss:$9 sm:$0xff] %v6663
      %7252 = vst [vmem:[%s7225] ss:$9 sm:$0xff] %v6664
      %7253 = vst [vmem:[%s7227] ss:$9 sm:$0xff] %v6665
      %7254 = vst [vmem:[%s7229] ss:$9 sm:$0xff] %v6666
      %7255 = vst [vmem:[%s7231] ss:$9 sm:$0xff] %v6667
      %7256 = vst [vmem:[%s7233] ss:$9 sm:$0xff] %v6668
      %7257 = vst [vmem:[%s7235] ss:$9 sm:$0xff] %v6669
      %7258 = vst [vmem:[%s7237] ss:$9 sm:$0xff] %v6670
      %v7259 = vld [vmem:[#allocation1] sm:$0xff]
      %7260 = vst [vmem:[#allocation1] ss:$9 sm:$0xff] %v6671
      %7261 = vst [vmem:[%s7225] ss:$9 sm:$0xff] %v6672
      %7262 = vst [vmem:[%s7227] ss:$9 sm:$0xff] %v6673
      %7263 = vst [vmem:[%s7229] ss:$9 sm:$0xff] %v6674
      %7264 = vst [vmem:[%s7231] ss:$9 sm:$0xff] %v6675
      %7265 = vst [vmem:[%s7233] ss:$9 sm:$0xff] %v6676
      %7266 = vst [vmem:[%s7235] ss:$9 sm:$0xff] %v6677
      %7267 = vst [vmem:[%s7237] ss:$9 sm:$0xff] %v6678
      %v7268 = vld [vmem:[#allocation1] sm:$0xff]
      %7269 = vst [vmem:[#allocation1] ss:$9 sm:$0xff] %v6679
      %v7270 = vld [vmem:[#allocation1] sm:$0xff]
      %7271 = vst [vmem:[#allocation1] ss:$9 sm:$0xff] %v6680
      %7272 = vst [vmem:[%s7225] ss:$9 sm:$0xff] %v6681
      %7273 = vst [vmem:[%s7227] ss:$9 sm:$0xff] %v6682
      %7274 = vst [vmem:[%s7229] ss:$9 sm:$0xff] %v6683
      %7275 = vst [vmem:[%s7231] ss:$9 sm:$0xff] %v6684
      %7276 = vst [vmem:[%s7233] ss:$9 sm:$0xff] %v6685
      %7277 = vst [vmem:[%s7235] ss:$9 sm:$0xff] %v6686
      %7278 = vst [vmem:[%s7237] ss:$9 sm:$0xff] %v6687
      %v7279 = vld [vmem:[#allocation1] sm:$0xff]
      %7280 = vst [vmem:[#allocation1] ss:$9 sm:$0xff] %v6688
      %7281 = vst [vmem:[%s7225] ss:$9 sm:$0xff] %v6689
      %7282 = vst [vmem:[%s7227] ss:$9 sm:$0xff] %v6690
      %7283 = vst [vmem:[%s7229] ss:$9 sm:$0xff] %v6691
      %7284 = vst [vmem:[%s7231] ss:$9 sm:$0xff] %v6692
      %7285 = vst [vmem:[%s7233] ss:$9 sm:$0xff] %v6693
      %7286 = vst [vmem:[%s7235] ss:$9 sm:$0xff] %v6694
      %7287 = vst [vmem:[%s7237] ss:$9 sm:$0xff] %v6695
      %v7288 = vld [vmem:[#allocation1] sm:$0xff]
      %7289 = vst [vmem:[#allocation1] ss:$9 sm:$0xff] %v6696
      %v7290 = vld [vmem:[#allocation1] sm:$0xff]
      %7291 = vst [vmem:[#allocation1] ss:$9 sm:$0xff] %v6697
      %7292 = vst [vmem:[%s7225] ss:$9 sm:$0xff] %v6698
      %7293 = vst [vmem:[%s7227] ss:$9 sm:$0xff] %v6699
      %7294 = vst [vmem:[%s7229] ss:$9 sm:$0xff] %v6700
      %7295 = vst [vmem:[%s7231] ss:$9 sm:$0xff] %v6701
      %7296 = vst [vmem:[%s7233] ss:$9 sm:$0xff] %v6702
      %7297 = vst [vmem:[%s7235] ss:$9 sm:$0xff] %v6703
      %7298 = vst [vmem:[%s7237] ss:$9 sm:$0xff] %v6704
      %v7299 = vld [vmem:[#allocation1] sm:$0xff]
      %7300 = vst [vmem:[#allocation1] ss:$9 sm:$0xff] %v6705
      %7301 = vst [vmem:[%s7225] ss:$9 sm:$0xff] %v6706
      %7302 = vst [vmem:[%s7227] ss:$9 sm:$0xff] %v6707
      %7303 = vst [vmem:[%s7229] ss:$9 sm:$0xff] %v6708
      %7304 = vst [vmem:[%s7231] ss:$9 sm:$0xff] %v6709
      %7305 = vst [vmem:[%s7233] ss:$9 sm:$0xff] %v6710
      %7306 = vst [vmem:[%s7235] ss:$9 sm:$0xff] %v6711
      %7307 = vst [vmem:[%s7237] ss:$9 sm:$0xff] %v6712
      %v7308 = vld [vmem:[#allocation1] sm:$0xff]
      %7309 = vst [vmem:[#allocation1] ss:$9 sm:$0xff] %v6713
      %v7310 = vld [vmem:[#allocation1] sm:$0xff]
      %7311 = vst [vmem:[#allocation1] ss:$9 sm:$0xff] %v6714
      %7312 = vst [vmem:[%s7225] ss:$9 sm:$0xff] %v6715
      %7313 = vst [vmem:[%s7227] ss:$9 sm:$0xff] %v6716
      %7314 = vst [vmem:[%s7229] ss:$9 sm:$0xff] %v6717
      %7315 = vst [vmem:[%s7231] ss:$9 sm:$0xff] %v6718
      %7316 = vst [vmem:[%s7233] ss:$9 sm:$0xff] %v6719
      %7317 = vst [vmem:[%s7235] ss:$9 sm:$0xff] %v6720
      %7318 = vst [vmem:[%s7237] ss:$9 sm:$0xff] %v6721
      %v7319 = vld [vmem:[#allocation1] sm:$0xff]
      %7320 = vst [vmem:[#allocation1] ss:$9 sm:$0xff] %v6722
      %7321 = vst [vmem:[%s7225] ss:$9 sm:$0xff] %v6723
      %7322 = vst [vmem:[%s7227] ss:$9 sm:$0xff] %v6724
      %7323 = vst [vmem:[%s7229] ss:$9 sm:$0xff] %v6725
      %7324 = vst [vmem:[%s7231] ss:$9 sm:$0xff] %v6726
      %7325 = vst [vmem:[%s7233] ss:$9 sm:$0xff] %v6727
      %7326 = vst [vmem:[%s7235] ss:$9 sm:$0xff] %v6728
      %7327 = vst [vmem:[%s7237] ss:$9 sm:$0xff] %v6729
      %v7328 = vld [vmem:[#allocation1] sm:$0xff]
      %7329 = vst [vmem:[#allocation1] ss:$9 sm:$0xff] %v6730
      %v7330 = vld [vmem:[#allocation1] sm:$0xff]
      %7331 = vst [vmem:[#allocation1] ss:$9 sm:$0xff] %v6731
      %7332 = vst [vmem:[%s7225] ss:$9 sm:$0xff] %v6732
      %7333 = vst [vmem:[%s7227] ss:$9 sm:$0xff] %v6733
      %7334 = vst [vmem:[%s7229] ss:$9 sm:$0xff] %v6734
      %7335 = vst [vmem:[%s7231] ss:$9 sm:$0xff] %v6735
      %7336 = vst [vmem:[%s7233] ss:$9 sm:$0xff] %v6736
      %7337 = vst [vmem:[%s7235] ss:$9 sm:$0xff] %v6737
      %7338 = vst [vmem:[%s7237] ss:$9 sm:$0xff] %v6738
      %v7339 = vld [vmem:[#allocation1] sm:$0xff]
      %7340 = vst [vmem:[#allocation1] ss:$9 sm:$0xff] %v6739
      %7341 = vst [vmem:[%s7225] ss:$9 sm:$0xff] %v6740
      %7342 = vst [vmem:[%s7227] ss:$9 sm:$0xff] %v6741
      %7343 = vst [vmem:[%s7229] ss:$9 sm:$0xff] %v6742
      %7344 = vst [vmem:[%s7231] ss:$9 sm:$0xff] %v6743
      %7345 = vst [vmem:[%s7233] ss:$9 sm:$0xff] %v6744
      %7346 = vst [vmem:[%s7235] ss:$9 sm:$0xff] %v6745
      %7347 = vst [vmem:[%s7237] ss:$9 sm:$0xff] %v6746
      %v7348 = vld [vmem:[#allocation1] sm:$0xff]
      %7349 = vst [vmem:[#allocation1] ss:$9 sm:$0xff] %v6747
      %v7350 = vld [vmem:[#allocation1] sm:$0xff]
      %7351 = vst [vmem:[#allocation1] ss:$9 sm:$0xff] %v6748
      %7352 = vst [vmem:[%s7225] ss:$9 sm:$0xff] %v6749
      %7353 = vst [vmem:[%s7227] ss:$9 sm:$0xff] %v6750
      %7354 = vst [vmem:[%s7229] ss:$9 sm:$0xff] %v6751
      %7355 = vst [vmem:[%s7231] ss:$9 sm:$0xff] %v6752
      %7356 = vst [vmem:[%s7233] ss:$9 sm:$0xff] %v6753
      %7357 = vst [vmem:[%s7235] ss:$9 sm:$0xff] %v6754
      %7358 = vst [vmem:[%s7237] ss:$9 sm:$0xff] %v6755
      %v7359 = vld [vmem:[#allocation1] sm:$0xff]
      %7360 = vst [vmem:[#allocation1] ss:$9 sm:$0xff] %v6756
      %7361 = vst [vmem:[%s7225] ss:$9 sm:$0xff] %v6757
      %7362 = vst [vmem:[%s7227] ss:$9 sm:$0xff] %v6758
      %7363 = vst [vmem:[%s7229] ss:$9 sm:$0xff] %v6759
      %7364 = vst [vmem:[%s7231] ss:$9 sm:$0xff] %v6760
      %7365 = vst [vmem:[%s7233] ss:$9 sm:$0xff] %v6761
      %7366 = vst [vmem:[%s7235] ss:$9 sm:$0xff] %v6762
      %7367 = vst [vmem:[%s7237] ss:$9 sm:$0xff] %v6763
      %v7368 = vld [vmem:[#allocation1] sm:$0xff]
      %7369 = vst [vmem:[#allocation1] ss:$9 sm:$0xff] %v6764
      %v7370 = vld [vmem:[#allocation1] sm:$0xff]
      %7371 = vst [vmem:[#allocation1] ss:$9 sm:$0xff] %v6765
      %7372 = vst [vmem:[%s7225] ss:$9 sm:$0xff] %v6766
      %7373 = vst [vmem:[%s7227] ss:$9 sm:$0xff] %v6767
      %7374 = vst [vmem:[%s7229] ss:$9 sm:$0xff] %v6768
      %7375 = vst [vmem:[%s7231] ss:$9 sm:$0xff] %v6769
      %7376 = vst [vmem:[%s7233] ss:$9 sm:$0xff] %v6770
      %7377 = vst [vmem:[%s7235] ss:$9 sm:$0xff] %v6771
      %7378 = vst [vmem:[%s7237] ss:$9 sm:$0xff] %v6772
      %v7379 = vld [vmem:[#allocation1] sm:$0xff]
      %7380 = vst [vmem:[#allocation1] ss:$9 sm:$0xff] %v6773
      %7381 = vst [vmem:[%s7225] ss:$9 sm:$0xff] %v6774
      %7382 = vst [vmem:[%s7227] ss:$9 sm:$0xff] %v6775
      %7383 = vst [vmem:[%s7229] ss:$9 sm:$0xff] %v6776
      %7384 = vst [vmem:[%s7231] ss:$9 sm:$0xff] %v6777
      %7385 = vst [vmem:[%s7233] ss:$9 sm:$0xff] %v6778
      %7386 = vst [vmem:[%s7235] ss:$9 sm:$0xff] %v6779
      %7387 = vst [vmem:[%s7237] ss:$9 sm:$0xff] %v6780
      %v7388 = vld [vmem:[#allocation1] sm:$0xff]
      %7389 = vst [vmem:[#allocation1] ss:$9 sm:$0xff] %v6781
      %v7390 = vld [vmem:[#allocation1] sm:$0xff]
      %7391 = vst [vmem:[#allocation1] ss:$9 sm:$0xff] %v6782
      %7392 = vst [vmem:[%s7225] ss:$9 sm:$0xff] %v6783
      %7393 = vst [vmem:[%s7227] ss:$9 sm:$0xff] %v6784
      %7394 = vst [vmem:[%s7229] ss:$9 sm:$0xff] %v6785
      %7395 = vst [vmem:[%s7231] ss:$9 sm:$0xff] %v6786
      %7396 = vst [vmem:[%s7233] ss:$9 sm:$0xff] %v6787
      %7397 = vst [vmem:[%s7235] ss:$9 sm:$0xff] %v6788
      %7398 = vst [vmem:[%s7237] ss:$9 sm:$0xff] %v6789
      %v7399 = vld [vmem:[#allocation1] sm:$0xff]
      %7400 = vst [vmem:[#allocation1] ss:$9 sm:$0xff] %v6790
      %7401 = vst [vmem:[%s7225] ss:$9 sm:$0xff] %v6791
      %7402 = vst [vmem:[%s7227] ss:$9 sm:$0xff] %v6792
      %7403 = vst [vmem:[%s7229] ss:$9 sm:$0xff] %v6793
      %7404 = vst [vmem:[%s7231] ss:$9 sm:$0xff] %v6794
      %7405 = vst [vmem:[%s7233] ss:$9 sm:$0xff] %v6795
      %7406 = vst [vmem:[%s7235] ss:$9 sm:$0xff] %v6796
      %7407 = vst [vmem:[%s7237] ss:$9 sm:$0xff] %v6797
      %v7408 = vld [vmem:[#allocation1] sm:$0xff]
      %7409 = vst [vmem:[#allocation1] ss:$9 sm:$0xff] %v6798
      %v7410 = vld [vmem:[#allocation1] sm:$0xff]
      %7411 = vst [vmem:[#allocation1] ss:$9 sm:$0xff] %v6799
      %7412 = vst [vmem:[%s7225] ss:$9 sm:$0xff] %v6800
      %7413 = vst [vmem:[%s7227] ss:$9 sm:$0xff] %v6801
      %7414 = vst [vmem:[%s7229] ss:$9 sm:$0xff] %v6802
      %7415 = vst [vmem:[%s7231] ss:$9 sm:$0xff] %v6803
      %7416 = vst [vmem:[%s7233] ss:$9 sm:$0xff] %v6804
      %7417 = vst [vmem:[%s7235] ss:$9 sm:$0xff] %v6805
      %7418 = vst [vmem:[%s7237] ss:$9 sm:$0xff] %v6806
      %v7419 = vld [vmem:[#allocation1] sm:$0xff]
      %7420 = vst [vmem:[#allocation1] ss:$9 sm:$0xff] %v6807
      %7421 = vst [vmem:[%s7225] ss:$9 sm:$0xff] %v6808
      %7422 = vst [vmem:[%s7227] ss:$9 sm:$0xff] %v6809
      %7423 = vst [vmem:[%s7229] ss:$9 sm:$0xff] %v6810
      %7424 = vst [vmem:[%s7231] ss:$9 sm:$0xff] %v6811
      %7425 = vst [vmem:[%s7233] ss:$9 sm:$0xff] %v6812
      %7426 = vst [vmem:[%s7235] ss:$9 sm:$0xff] %v6813
      %7427 = vst [vmem:[%s7237] ss:$9 sm:$0xff] %v6814
      %v7428 = vld [vmem:[#allocation1] sm:$0xff]
      %7429 = vst [vmem:[#allocation1] ss:$9 sm:$0xff] %v6815
      %v7430 = vld [vmem:[#allocation1] sm:$0xff]
      %7431 = vst [vmem:[#allocation1] ss:$9 sm:$0xff] %v6816
      %7432 = vst [vmem:[%s7225] ss:$9 sm:$0xff] %v6817
      %7433 = vst [vmem:[%s7227] ss:$9 sm:$0xff] %v6818
      %7434 = vst [vmem:[%s7229] ss:$9 sm:$0xff] %v6819
      %7435 = vst [vmem:[%s7231] ss:$9 sm:$0xff] %v6820
      %7436 = vst [vmem:[%s7233] ss:$9 sm:$0xff] %v6821
      %7437 = vst [vmem:[%s7235] ss:$9 sm:$0xff] %v6822
      %7438 = vst [vmem:[%s7237] ss:$9 sm:$0xff] %v6823
      %v7439 = vld [vmem:[#allocation1] sm:$0xff]
      %7440 = vst [vmem:[#allocation1] ss:$9 sm:$0xff] %v6824
      %7441 = vst [vmem:[%s7225] ss:$9 sm:$0xff] %v6825
      %7442 = vst [vmem:[%s7227] ss:$9 sm:$0xff] %v6826
      %7443 = vst [vmem:[%s7229] ss:$9 sm:$0xff] %v6827
      %7444 = vst [vmem:[%s7231] ss:$9 sm:$0xff] %v6828
      %7445 = vst [vmem:[%s7233] ss:$9 sm:$0xff] %v6829
      %7446 = vst [vmem:[%s7235] ss:$9 sm:$0xff] %v6830
      %7447 = vst [vmem:[%s7237] ss:$9 sm:$0xff] %v6831
      %v7448 = vld [vmem:[#allocation1] sm:$0xff]
      %7449 = vst [vmem:[#allocation1] ss:$9 sm:$0xff] %v6832
      %v7450 = vld [vmem:[#allocation1] sm:$0xff]
      %7451 = vst [vmem:[#allocation1] ss:$9 sm:$0xff] %v6833
      %7452 = vst [vmem:[%s7225] ss:$9 sm:$0xff] %v6834
      %7453 = vst [vmem:[%s7227] ss:$9 sm:$0xff] %v6835
      %7454 = vst [vmem:[%s7229] ss:$9 sm:$0xff] %v6836
      %7455 = vst [vmem:[%s7231] ss:$9 sm:$0xff] %v6837
      %7456 = vst [vmem:[%s7233] ss:$9 sm:$0xff] %v6838
      %7457 = vst [vmem:[%s7235] ss:$9 sm:$0xff] %v6839
      %7458 = vst [vmem:[%s7237] ss:$9 sm:$0xff] %v6840
      %v7459 = vld [vmem:[#allocation1] sm:$0xff]
      %7460 = vst [vmem:[#allocation1] ss:$9 sm:$0xff] %v6841
      %7461 = vst [vmem:[%s7225] ss:$9 sm:$0xff] %v6842
      %7462 = vst [vmem:[%s7227] ss:$9 sm:$0xff] %v6843
      %7463 = vst [vmem:[%s7229] ss:$9 sm:$0xff] %v6844
      %7464 = vst [vmem:[%s7231] ss:$9 sm:$0xff] %v6845
      %7465 = vst [vmem:[%s7233] ss:$9 sm:$0xff] %v6846
      %7466 = vst [vmem:[%s7235] ss:$9 sm:$0xff] %v6847
      %7467 = vst [vmem:[%s7237] ss:$9 sm:$0xff] %v6848
      %v7468 = vld [vmem:[#allocation1] sm:$0xff]
      %7469 = vst [vmem:[#allocation1] ss:$9 sm:$0xff] %v6849
      %v7470 = vld [vmem:[#allocation1] sm:$0xff]
      %7471 = vst [vmem:[#allocation1] ss:$9 sm:$0xff] %v6850
      %7472 = vst [vmem:[%s7225] ss:$9 sm:$0xff] %v6851
      %7473 = vst [vmem:[%s7227] ss:$9 sm:$0xff] %v6852
      %7474 = vst [vmem:[%s7229] ss:$9 sm:$0xff] %v6853
      %7475 = vst [vmem:[%s7231] ss:$9 sm:$0xff] %v6854
      %7476 = vst [vmem:[%s7233] ss:$9 sm:$0xff] %v6855
      %7477 = vst [vmem:[%s7235] ss:$9 sm:$0xff] %v6856
      %7478 = vst [vmem:[%s7237] ss:$9 sm:$0xff] %v6857
      %v7479 = vld [vmem:[#allocation1] sm:$0xff]
      %7480 = vst [vmem:[#allocation1] ss:$9 sm:$0xff] %v6858
      %7481 = vst [vmem:[%s7225] ss:$9 sm:$0xff] %v6859
      %7482 = vst [vmem:[%s7227] ss:$9 sm:$0xff] %v6860
      %7483 = vst [vmem:[%s7229] ss:$9 sm:$0xff] %v6861
      %7484 = vst [vmem:[%s7231] ss:$9 sm:$0xff] %v6862
      %7485 = vst [vmem:[%s7233] ss:$9 sm:$0xff] %v6863
      %7486 = vst [vmem:[%s7235] ss:$9 sm:$0xff] %v6864
      %7487 = vst [vmem:[%s7237] ss:$9 sm:$0xff] %v6865
      %v7488 = vld [vmem:[#allocation1] sm:$0xff]
      %7489 = vst [vmem:[#allocation1] ss:$9 sm:$0xff] %v6866
      %v7490 = vld [vmem:[#allocation1] sm:$0xff]
      %7491 = vst [vmem:[#allocation1] ss:$9 sm:$0xff] %v6867
      %7492 = vst [vmem:[%s7225] ss:$9 sm:$0xff] %v6868
      %7493 = vst [vmem:[%s7227] ss:$9 sm:$0xff] %v6869
      %7494 = vst [vmem:[%s7229] ss:$9 sm:$0xff] %v6870
      %7495 = vst [vmem:[%s7231] ss:$9 sm:$0xff] %v6871
      %7496 = vst [vmem:[%s7233] ss:$9 sm:$0xff] %v6872
      %7497 = vst [vmem:[%s7235] ss:$9 sm:$0xff] %v6873
      %7498 = vst [vmem:[%s7237] ss:$9 sm:$0xff] %v6874
      %v7499 = vld [vmem:[#allocation1] sm:$0xff]
      %7500 = vst [vmem:[#allocation1] ss:$9 sm:$0xff] %v6875
      %7501 = vst [vmem:[%s7225] ss:$9 sm:$0xff] %v6876
      %7502 = vst [vmem:[%s7227] ss:$9 sm:$0xff] %v6877
      %7503 = vst [vmem:[%s7229] ss:$9 sm:$0xff] %v6878
      %7504 = vst [vmem:[%s7231] ss:$9 sm:$0xff] %v6879
      %7505 = vst [vmem:[%s7233] ss:$9 sm:$0xff] %v6880
      %7506 = vst [vmem:[%s7235] ss:$9 sm:$0xff] %v6881
      %7507 = vst [vmem:[%s7237] ss:$9 sm:$0xff] %v6882
      %v7508 = vld [vmem:[#allocation1] sm:$0xff]
      %7509 = vst [vmem:[#allocation1] ss:$9 sm:$0xff] %v6883
      %v7510 = vld [vmem:[#allocation1] sm:$0xff]
      %7511 = vst [vmem:[#allocation1] ss:$9 sm:$0xff] %v6884
      %7512 = vst [vmem:[%s7225] ss:$9 sm:$0xff] %v6885
      %7513 = vst [vmem:[%s7227] ss:$9 sm:$0xff] %v6886
      %7514 = vst [vmem:[%s7229] ss:$9 sm:$0xff] %v6887
      %7515 = vst [vmem:[%s7231] ss:$9 sm:$0xff] %v6888
      %7516 = vst [vmem:[%s7233] ss:$9 sm:$0xff] %v6889
      %7517 = vst [vmem:[%s7235] ss:$9 sm:$0xff] %v6890
      %7518 = vst [vmem:[%s7237] ss:$9 sm:$0xff] %v6891
      %v7519 = vld [vmem:[#allocation1] sm:$0xff]
      %7520 = vst [vmem:[#allocation1] ss:$9 sm:$0xff] %v6892
      %7521 = vst [vmem:[%s7225] ss:$9 sm:$0xff] %v6893
      %7522 = vst [vmem:[%s7227] ss:$9 sm:$0xff] %v6894
      %7523 = vst [vmem:[%s7229] ss:$9 sm:$0xff] %v6895
      %7524 = vst [vmem:[%s7231] ss:$9 sm:$0xff] %v6896
      %7525 = vst [vmem:[%s7233] ss:$9 sm:$0xff] %v6897
      %7526 = vst [vmem:[%s7235] ss:$9 sm:$0xff] %v6898
      %7527 = vst [vmem:[%s7237] ss:$9 sm:$0xff] %v6899
      %v7528 = vld [vmem:[#allocation1] sm:$0xff]
      %7529 = vst [vmem:[#allocation1] ss:$9 sm:$0xff] %v6900
      %v7530 = vld [vmem:[#allocation1] sm:$0xff]
      %7531 = vst [vmem:[#allocation1] ss:$9 sm:$0xff] %v6901
      %7532 = vst [vmem:[%s7225] ss:$9 sm:$0xff] %v6902
      %7533 = vst [vmem:[%s7227] ss:$9 sm:$0xff] %v6903
      %7534 = vst [vmem:[%s7229] ss:$9 sm:$0xff] %v6904
      %7535 = vst [vmem:[%s7231] ss:$9 sm:$0xff] %v6905
      %7536 = vst [vmem:[%s7233] ss:$9 sm:$0xff] %v6906
      %7537 = vst [vmem:[%s7235] ss:$9 sm:$0xff] %v6907
      %7538 = vst [vmem:[%s7237] ss:$9 sm:$0xff] %v6908
      %v7539 = vld [vmem:[#allocation1] sm:$0xff]
      %7540 = vst [vmem:[#allocation1] ss:$9 sm:$0xff] %v6909
      %7541 = vst [vmem:[%s7225] ss:$9 sm:$0xff] %v6910
      %7542 = vst [vmem:[%s7227] ss:$9 sm:$0xff] %v6911
      %7543 = vst [vmem:[%s7229] ss:$9 sm:$0xff] %v6912
      %7544 = vst [vmem:[%s7231] ss:$9 sm:$0xff] %v6913
      %7545 = vst [vmem:[%s7233] ss:$9 sm:$0xff] %v6914
      %7546 = vst [vmem:[%s7235] ss:$9 sm:$0xff] %v6915
      %7547 = vst [vmem:[%s7237] ss:$9 sm:$0xff] %v6916
      %v7548 = vld [vmem:[#allocation1] sm:$0xff]
      %7549 = vst [vmem:[#allocation1] ss:$9 sm:$0xff] %v6917
      %v7550 = vld [vmem:[#allocation1] sm:$0xff]
      %7551 = vst [vmem:[#allocation1] ss:$9 sm:$0xff] %v6918
      %7552 = vst [vmem:[%s7225] ss:$9 sm:$0xff] %v6919
      %7553 = vst [vmem:[%s7227] ss:$9 sm:$0xff] %v6920
      %7554 = vst [vmem:[%s7229] ss:$9 sm:$0xff] %v6921
      %7555 = vst [vmem:[%s7231] ss:$9 sm:$0xff] %v6922
      %7556 = vst [vmem:[%s7233] ss:$9 sm:$0xff] %v6923
      %7557 = vst [vmem:[%s7235] ss:$9 sm:$0xff] %v6924
      %7558 = vst [vmem:[%s7237] ss:$9 sm:$0xff] %v6925
      %v7559 = vld [vmem:[#allocation1] sm:$0xff]
      %7560 = vst [vmem:[#allocation1] ss:$9 sm:$0xff] %v6926
      %7561 = vst [vmem:[%s7225] ss:$9 sm:$0xff] %v6927
      %7562 = vst [vmem:[%s7227] ss:$9 sm:$0xff] %v6928
      %7563 = vst [vmem:[%s7229] ss:$9 sm:$0xff] %v6929
      %7564 = vst [vmem:[%s7231] ss:$9 sm:$0xff] %v6930
      %7565 = vst [vmem:[%s7233] ss:$9 sm:$0xff] %v6931
      %7566 = vst [vmem:[%s7235] ss:$9 sm:$0xff] %v6932
      %7567 = vst [vmem:[%s7237] ss:$9 sm:$0xff] %v6933
      %v7568 = vld [vmem:[#allocation1] sm:$0xff]
      %7569 = vst [vmem:[#allocation1] ss:$9 sm:$0xff] %v6934
      %v7570 = vld [vmem:[#allocation1] sm:$0xff]
      %v7622 = vpack.c.bf16 %v7239, %v7239
      %v7623 = vpack.c.bf16 %v7248, %v7248
      %v7624 = vpack.c.bf16 %v7250, %v7250
      %v7625 = vpack.c.bf16 %v7259, %v7259
      %v7626 = vpack.c.bf16 %v7268, %v7268
      %v7627 = vpack.c.bf16 %v7270, %v7270
      %v7628 = vpack.c.bf16 %v7279, %v7279
      %v7629 = vpack.c.bf16 %v7288, %v7288
      %v7630 = vpack.c.bf16 %v7290, %v7290
      %v7631 = vpack.c.bf16 %v7299, %v7299
      %v7632 = vpack.c.bf16 %v7308, %v7308
      %v7633 = vpack.c.bf16 %v7310, %v7310
      %v7634 = vpack.c.bf16 %v7319, %v7319
      %v7635 = vpack.c.bf16 %v7328, %v7328
      %v7636 = vpack.c.bf16 %v7330, %v7330
      %v7637 = vpack.c.bf16 %v7339, %v7339
      %v7638 = vpack.c.bf16 %v7348, %v7348
      %v7639 = vpack.c.bf16 %v7350, %v7350
      %v7640 = vpack.c.bf16 %v7359, %v7359
      %v7641 = vpack.c.bf16 %v7368, %v7368
      %v7642 = vpack.c.bf16 %v7370, %v7370
      %v7643 = vpack.c.bf16 %v7379, %v7379
      %v7644 = vpack.c.bf16 %v7388, %v7388
      %v7645 = vpack.c.bf16 %v7390, %v7390
      %v7646 = vpack.c.bf16 %v7399, %v7399
      %v7647 = vpack.c.bf16 %v7408, %v7408
      %v7648 = vpack.c.bf16 %v7410, %v7410
      %v7649 = vpack.c.bf16 %v7419, %v7419
      %v7650 = vpack.c.bf16 %v7428, %v7428
      %v7651 = vpack.c.bf16 %v7430, %v7430
      %v7652 = vpack.c.bf16 %v7439, %v7439
      %v7653 = vpack.c.bf16 %v7448, %v7448
      %v7654 = vpack.c.bf16 %v7450, %v7450
      %v7655 = vpack.c.bf16 %v7459, %v7459
      %v7656 = vpack.c.bf16 %v7468, %v7468
      %v7657 = vpack.c.bf16 %v7470, %v7470
      %v7658 = vpack.c.bf16 %v7479, %v7479
      %v7659 = vpack.c.bf16 %v7488, %v7488
      %v7660 = vpack.c.bf16 %v7490, %v7490
      %v7661 = vpack.c.bf16 %v7499, %v7499
      %v7662 = vpack.c.bf16 %v7508, %v7508
      %v7663 = vpack.c.bf16 %v7510, %v7510
      %v7664 = vpack.c.bf16 %v7519, %v7519
      %v7665 = vpack.c.bf16 %v7528, %v7528
      %v7666 = vpack.c.bf16 %v7530, %v7530
      %v7667 = vpack.c.bf16 %v7539, %v7539
      %v7668 = vpack.c.bf16 %v7548, %v7548
      %v7669 = vpack.c.bf16 %v7550, %v7550
      %v7670 = vpack.c.bf16 %v7559, %v7559
      %v7671 = vpack.c.bf16 %v7568, %v7568
      %v7672 = vpack.c.bf16 %v7570, %v7570
      %vm7673 = vcmask 125952
      %7674 = vst.msk [vmem:[%s221] sm:$0xf] %vm7673, %v7622
      %7675 = vst.msk [vmem:[%s221 + $0x4] sm:$0xf] %vm7673, %v7623
      %vm7676 = vcmask 122880
      %vm7677 = vsmask.f32 256
      %vm7678 = vmand %vm7676, %vm7677
      %v7679 = vld [vmem:[%s221 + $0x8] sm:$0x1]
      %v7680 = vsel %vm7678, %v7624, %v7679
      %7681 = vst [vmem:[%s221 + $0x8] sm:$0x1] %v7680
      %7682 = vst.msk [vmem:[%s221 + $0xc] sm:$0xf] %vm7673, %v7625
      %7683 = vst.msk [vmem:[%s221 + $0x10] sm:$0xf] %vm7673, %v7626
      %v7684 = vld [vmem:[%s221 + $0x14] sm:$0x1]
      %v7685 = vsel %vm7678, %v7627, %v7684
      %7686 = vst [vmem:[%s221 + $0x14] sm:$0x1] %v7685
      %7687 = vst.msk [vmem:[%s221 + $0x18] sm:$0xf] %vm7673, %v7628
      %7688 = vst.msk [vmem:[%s221 + $0x1c] sm:$0xf] %vm7673, %v7629
      %v7689 = vld [vmem:[%s221 + $0x20] sm:$0x1]
      %v7690 = vsel %vm7678, %v7630, %v7689
      %7691 = vst [vmem:[%s221 + $0x20] sm:$0x1] %v7690
      %7692 = vst.msk [vmem:[%s221 + $0x24] sm:$0xf] %vm7673, %v7631
      %7693 = vst.msk [vmem:[%s221 + $0x28] sm:$0xf] %vm7673, %v7632
      %v7694 = vld [vmem:[%s221 + $0x2c] sm:$0x1]
      %v7695 = vsel %vm7678, %v7633, %v7694
      %7696 = vst [vmem:[%s221 + $0x2c] sm:$0x1] %v7695
      %7697 = vst.msk [vmem:[%s221 + $0x30] sm:$0xf] %vm7673, %v7634
      %7698 = vst.msk [vmem:[%s221 + $0x34] sm:$0xf] %vm7673, %v7635
      %v7699 = vld [vmem:[%s221 + $0x38] sm:$0x1]
      %v7700 = vsel %vm7678, %v7636, %v7699
      %7701 = vst [vmem:[%s221 + $0x38] sm:$0x1] %v7700
      %7702 = vst.msk [vmem:[%s221 + $0x3c] sm:$0xf] %vm7673, %v7637
      %7703 = vst.msk [vmem:[%s221 + $0x40] sm:$0xf] %vm7673, %v7638
      %v7704 = vld [vmem:[%s221 + $0x44] sm:$0x1]
      %v7705 = vsel %vm7678, %v7639, %v7704
      %7706 = vst [vmem:[%s221 + $0x44] sm:$0x1] %v7705
      %7707 = vst.msk [vmem:[%s221 + $0x48] sm:$0xf] %vm7673, %v7640
      %7708 = vst.msk [vmem:[%s221 + $0x4c] sm:$0xf] %vm7673, %v7641
      %v7709 = vld [vmem:[%s221 + $0x50] sm:$0x1]
      %v7710 = vsel %vm7678, %v7642, %v7709
      %7711 = vst [vmem:[%s221 + $0x50] sm:$0x1] %v7710
      %7712 = vst.msk [vmem:[%s221 + $0x54] sm:$0xf] %vm7673, %v7643
      %7713 = vst.msk [vmem:[%s221 + $0x58] sm:$0xf] %vm7673, %v7644
      %v7714 = vld [vmem:[%s221 + $0x5c] sm:$0x1]
      %v7715 = vsel %vm7678, %v7645, %v7714
      %7716 = vst [vmem:[%s221 + $0x5c] sm:$0x1] %v7715
      %7717 = vst.msk [vmem:[%s221 + $0x60] sm:$0xf] %vm7673, %v7646
      %7718 = vst.msk [vmem:[%s221 + $0x64] sm:$0xf] %vm7673, %v7647
      %v7719 = vld [vmem:[%s221 + $0x68] sm:$0x1]
      %v7720 = vsel %vm7678, %v7648, %v7719
      %7721 = vst [vmem:[%s221 + $0x68] sm:$0x1] %v7720
      %7722 = vst.msk [vmem:[%s221 + $0x6c] sm:$0xf] %vm7673, %v7649
      %7723 = vst.msk [vmem:[%s221 + $0x70] sm:$0xf] %vm7673, %v7650
      %v7724 = vld [vmem:[%s221 + $0x74] sm:$0x1]
      %v7725 = vsel %vm7678, %v7651, %v7724
      %7726 = vst [vmem:[%s221 + $0x74] sm:$0x1] %v7725
      %7727 = vst.msk [vmem:[%s221 + $0x78] sm:$0xf] %vm7673, %v7652
      %7728 = vst.msk [vmem:[%s221 + $0x7c] sm:$0xf] %vm7673, %v7653
      %v7729 = vld [vmem:[%s221 + $0x80] sm:$0x1]
      %v7730 = vsel %vm7678, %v7654, %v7729
      %7731 = vst [vmem:[%s221 + $0x80] sm:$0x1] %v7730
      %7732 = vst.msk [vmem:[%s221 + $0x84] sm:$0xf] %vm7673, %v7655
      %7733 = vst.msk [vmem:[%s221 + $0x88] sm:$0xf] %vm7673, %v7656
      %v7734 = vld [vmem:[%s221 + $0x8c] sm:$0x1]
      %v7735 = vsel %vm7678, %v7657, %v7734
      %7736 = vst [vmem:[%s221 + $0x8c] sm:$0x1] %v7735
      %7737 = vst.msk [vmem:[%s221 + $0x90] sm:$0xf] %vm7673, %v7658
      %7738 = vst.msk [vmem:[%s221 + $0x94] sm:$0xf] %vm7673, %v7659
      %v7739 = vld [vmem:[%s221 + $0x98] sm:$0x1]
      %v7740 = vsel %vm7678, %v7660, %v7739
      %7741 = vst [vmem:[%s221 + $0x98] sm:$0x1] %v7740
      %7742 = vst.msk [vmem:[%s221 + $0x9c] sm:$0xf] %vm7673, %v7661
      %7743 = vst.msk [vmem:[%s221 + $0xa0] sm:$0xf] %vm7673, %v7662
      %v7744 = vld [vmem:[%s221 + $0xa4] sm:$0x1]
      %v7745 = vsel %vm7678, %v7663, %v7744
      %7746 = vst [vmem:[%s221 + $0xa4] sm:$0x1] %v7745
      %7747 = vst.msk [vmem:[%s221 + $0xa8] sm:$0xf] %vm7673, %v7664
      %7748 = vst.msk [vmem:[%s221 + $0xac] sm:$0xf] %vm7673, %v7665
      %v7749 = vld [vmem:[%s221 + $0xb0] sm:$0x1]
      %v7750 = vsel %vm7678, %v7666, %v7749
      %7751 = vst [vmem:[%s221 + $0xb0] sm:$0x1] %v7750
      %7752 = vst.msk [vmem:[%s221 + $0xb4] sm:$0xf] %vm7673, %v7667
      %7753 = vst.msk [vmem:[%s221 + $0xb8] sm:$0xf] %vm7673, %v7668
      %v7754 = vld [vmem:[%s221 + $0xbc] sm:$0x1]
      %v7755 = vsel %vm7678, %v7669, %v7754
      %7756 = vst [vmem:[%s221 + $0xbc] sm:$0x1] %v7755
      %7757 = vst.msk [vmem:[%s221 + $0xc0] sm:$0xf] %vm7673, %v7670
      %7758 = vst.msk [vmem:[%s221 + $0xc4] sm:$0xf] %vm7673, %v7671
      %v7759 = vld [vmem:[%s221 + $0xc8] sm:$0x1]
      %v7760 = vsel %vm7678, %v7672, %v7759
      %7761 = vst [vmem:[%s221 + $0xc8] sm:$0x1] %v7760
      %p7762 = scmp.lt.s32.totalorder %s18, 1
      %s7763 = scalar_select %p7762, %s18, 1
      %p7764 = scmp.lt.s32.totalorder %s19, 0
      %s7765 = scalar_select %p7764, %s19, 0
      %s7766 = smul.addr %s7763, 51
      %s7767 = sadd.s32 %s7765, %s7766
      %s7768 = smul.addr %s7767, 4
      %s7769 = scalar_lea.vmem %s3, %s7768
      // Predicated region
      $region33: #{tpu_custom_call.1} parent=31 // pred_check
        %p7770 = pneg %p124
      $region34: #{tpu_custom_call.1} parent=31 // pred_check_branch
        %7772 = sbr.rel (%p7770) target = $region36
      $region35: #{tpu_custom_call.1} parent=31 // pred_region
        _
      $region36: #{tpu_custom_call.1} parent=31 // pred_fallthru
        _
    $region32: #{tpu_custom_call.1} parent=5 // pred_fallthru
      _
    %p7773 = scmp.le.s32.totalorder 2, %s9
    // Predicated region
    $region37: #{tpu_custom_call.1} parent=5 // pred_check
      %p7774 = pneg %p7773
    $region38: #{tpu_custom_call.1} parent=5 // pred_check_branch
      %7776 = sbr.rel (%p7774) target = $region40
    $region39: #{tpu_custom_call.1} parent=5 // pred_region
      %s7777 = ssub.s32 %s9, 2
      // Predicated region
      $region41: #{tpu_custom_call.1} parent=39 // pred_check
        %p7778 = pneg %p130
      $region42: #{tpu_custom_call.1} parent=39 // pred_check_branch
        %7780 = sbr.rel (%p7778) target = $region44
      $region43: #{tpu_custom_call.1} parent=39 // pred_region
        %p7781 = scmp.lt.s32.totalorder %s20, 1
        %s7782 = scalar_select %p7781, %s20, 1
        %p7783 = scmp.lt.s32.totalorder %s21, 0
        %s7784 = scalar_select %p7783, %s21, 0
        %s7785 = smul.addr %s7782, 51
        %s7786 = sadd.s32 %s7784, %s7785
        %s7787 = smul.addr %s7786, 4
        %s7788 = scalar_lea.vmem %s3, %s7787
      $region44: #{tpu_custom_call.1} parent=39 // pred_fallthru
        _
    $region40: #{tpu_custom_call.1} parent=5 // pred_fallthru
      _
  $region6: #{tpu_custom_call.1} parent=0 // loop_footer
    %s13 = sadd.s32 1, %s9
  $region7: #{tpu_custom_call.1} parent=0 // loop_footer_branch
    %8 = sbr.rel target = $region3
  $region8: #{tpu_custom_call.1} parent=0 // loop_exit
    _

</llo_original>
